<compile_context>
chip_gen: v5e
topology: v5e:2x2
jax: 0.10.0
libtpu: 0.0.40
codegen_flags: <defaults>
</compile_context>

<pallas_src>
import functools

import jax
import jax.numpy as jnp
from jax.experimental import pallas as pl
from jax.experimental.pallas import tpu as pltpu


DP = 128   # lane-dense padded feature / hidden width
VP = 128   # padded flattened embedding-vocab width


def _mask(m, dtype=jnp.bfloat16):
    """bool mask -> {0,1} matrix (exact in bf16)."""
    return jnp.where(m, 1.0, 0.0).astype(dtype)


# ----------------------------- Pallas kernel ------------------------------ #
def gnn_kernel(x_ref, ea_ref, src_ref, dst_ref,
               node_tab_ref, edge_tab_ref, w_cat_ref, bias_ref,
               w1_ref, b1_ref, w2_ref, b2_ref, out_ref,
               *, v_node, v_edge):
    f32, bf16 = jnp.float32, jnp.bfloat16

    gbn, n_node_feats = x_ref.shape        # nodes in block, node-feature count
    gbe, n_edge_feats = ea_ref.shape       # edges in block, edge-feature count
    vpad_n = node_tab_ref.shape[0]
    vpad_e = edge_tab_ref.shape[0]
    n_layers = w_cat_ref.shape[0]
    gb = out_ref.shape[0]                  # graphs in this block
    n_per_graph = gbn // gb

    # ---- fused embedding lookups: one-hot (iota compare) @ flattened table ----
    xv = x_ref[...]
    lane_n = jax.lax.broadcasted_iota(jnp.int32, (gbn, vpad_n), 1)
    oh_n = jnp.zeros((gbn, vpad_n), f32)
    for f in range(n_node_feats):
        oh_n += _mask(lane_n == (xv[:, f:f + 1] + f * v_node), f32)
    h = jnp.dot(oh_n.astype(bf16), node_tab_ref[...],
                preferred_element_type=f32)                        # [gbn, DP]

    eav = ea_ref[...]
    lane_e = jax.lax.broadcasted_iota(jnp.int32, (gbe, vpad_e), 1)
    oh_e = jnp.zeros((gbe, vpad_e), f32)
    for f in range(n_edge_feats):
        oh_e += _mask(lane_e == (eav[:, f:f + 1] + f * v_edge), f32)
    e = jnp.dot(oh_e.astype(bf16), edge_tab_ref[...],
                preferred_element_type=f32)                        # [gbe, DP]

    # ---- block-diagonal graph structure from edge_index (VPU iota compares) ----
    node_lane = jax.lax.broadcasted_iota(jnp.int32, (gbe, gbn), 1)
    src_oh = _mask(node_lane == src_ref[...])                      # [gbe, gbn]
    node_sub = jax.lax.broadcasted_iota(jnp.int32, (gbn, gbe), 0)
    inc = _mask(node_sub == dst_ref[0])                            # [gbn, gbe]

    # ---- message-passing layers: h <- relu([h|msg] @ [[Wself];[Wmsg]] + b) ----
    for layer in range(n_layers):
        gathered = jnp.dot(src_oh, h.astype(bf16),
                           preferred_element_type=f32)             # h[src[e]]
        msg = jnp.dot(inc, (gathered + e).astype(bf16),
                      preferred_element_type=f32)                  # == adj@h + inc@e
        hm = jnp.concatenate([h.astype(bf16), msg.astype(bf16)], axis=1)
        h = jnp.maximum(
            jnp.dot(hm, w_cat_ref[layer], preferred_element_type=f32)
            + bias_ref[layer],
            0.0)

    # ---- per-graph mean readout via exact {0,1} pooling matmul ----
    nid = jax.lax.broadcasted_iota(jnp.int32, (gb, gbn), 1)
    gid = jax.lax.broadcasted_iota(jnp.int32, (gb, gbn), 0)
    pool = _mask((nid >= gid * n_per_graph) & (nid < (gid + 1) * n_per_graph))
    g = jnp.dot(pool, h.astype(bf16),
                preferred_element_type=f32) * (1.0 / n_per_graph)  # [gb, DP]

    # ---- decoder MLP: real [gb, DP] matmuls, lane-dense output slab ----
    z = jnp.maximum(
        jnp.dot(g.astype(bf16), w1_ref[...], preferred_element_type=f32)
        + b1_ref[...],
        0.0)
    out_ref[...] = (jnp.dot(z.astype(bf16), w2_ref[...],
                            preferred_element_type=f32) + b2_ref[...])


# ------------------------------- wrapper ---------------------------------- #
def graph_dnn_forward(x, edge_attr, edge_index, params, *, graphs_per_block=8):
    """x: [B, N, Fn] int32, edge_attr: [B, E, Fe] int32, edge_index: [B, 2, E] int32."""
    B, N, Fn = x.shape
    E, Fe = edge_attr.shape[1], edge_attr.shape[2]
    GB = graphs_per_block
    assert B % GB == 0, "batch must be a multiple of graphs_per_block"
    num_blocks = B // GB
    GBN, GBE = GB * N, GB * E

    Fn_t, Vn, D = params["node_tables"].shape
    Fe_t, Ve, _ = params["edge_tables"].shape
    H = params["w1"].shape[1]
    L = params["w_self"].shape[0]
    f32, bf16 = jnp.float32, jnp.bfloat16

    # ---- parameter prep: flatten/pad to lane-dense 128, cast matmul operands to bf16 ----
    def pad2(a, rows, cols):
        return jnp.pad(a, ((0, rows - a.shape[0]), (0, cols - a.shape[1])))

    node_tab = pad2(params["node_tables"].reshape(Fn_t * Vn, D), VP, DP).astype(bf16)
    edge_tab = pad2(params["edge_tables"].reshape(Fe_t * Ve, D), VP, DP).astype(bf16)

    w_self = jnp.pad(params["w_self"], ((0, 0), (0, DP - D), (0, DP - D)))
    w_msg = jnp.pad(params["w_msg"], ((0, 0), (0, DP - D), (0, DP - D)))
    w_cat = jnp.concatenate([w_self, w_msg], axis=1).astype(bf16)   # [L, 2*DP, DP]
    bias = jnp.pad(params["bias"], ((0, 0), (0, 0), (0, DP - D))).astype(f32)

    w1 = pad2(params["w1"], DP, DP).astype(bf16)
    b1 = jnp.pad(params["b1"], ((0, 0), (0, DP - H))).astype(f32)
    w2 = pad2(params["w2"], DP, DP).astype(bf16)      # real weights live in column 0
    b2 = jnp.pad(params["b2"], ((0, 0), (0, DP - 1))).astype(f32)

    # ---- graph-index prep: tiny int32 glue only (no dense f32 materialization) ----
    x_flat = x.reshape(B * N, Fn).astype(jnp.int32)
    ea_flat = edge_attr.reshape(B * E, Fe).astype(jnp.int32)
    b_local = (jnp.arange(B, dtype=jnp.int32) % GB)[:, None]        # block-local graph id
    src_g = edge_index[:, 0, :].astype(jnp.int32) + b_local * N     # [B, E] block-global ids
    dst_g = edge_index[:, 1, :].astype(jnp.int32) + b_local * N
    src_col = src_g.reshape(B * E, 1)                               # sublane layout
    dst_row = dst_g.reshape(num_blocks, 1, GBE)                     # lane layout

    kernel = functools.partial(gnn_kernel, v_node=Vn, v_edge=Ve)

    out = pl.pallas_call(
        kernel,
        out_shape=jax.ShapeDtypeStruct((B, DP), f32),
        grid=(num_blocks,),
        in_specs=[
            pl.BlockSpec((GBN, Fn), lambda i: (i, 0)),              # node features (int32)
            pl.BlockSpec((GBE, Fe), lambda i: (i, 0)),              # edge features (int32)
            pl.BlockSpec((GBE, 1), lambda i: (i, 0)),               # src node id per edge
            pl.BlockSpec((1, 1, GBE), lambda i: (i, 0, 0)),         # dst node id per edge
            pl.BlockSpec((VP, DP), lambda i: (0, 0)),               # node embedding table
            pl.BlockSpec((VP, DP), lambda i: (0, 0)),               # edge embedding table
            pl.BlockSpec((L, 2 * DP, DP), lambda i: (0, 0, 0)),     # fused [Wself; Wmsg]
            pl.BlockSpec((L, 1, DP), lambda i: (0, 0, 0)),          # layer bias
            pl.BlockSpec((DP, DP), lambda i: (0, 0)),               # decoder w1
            pl.BlockSpec((1, DP), lambda i: (0, 0)),                # decoder b1
            pl.BlockSpec((DP, DP), lambda i: (0, 0)),               # decoder w2 (col 0)
            pl.BlockSpec((1, DP), lambda i: (0, 0)),                # decoder b2 (col 0)
        ],
        out_specs=pl.BlockSpec((GB, DP), lambda i: (i, 0)),
        compiler_params=pltpu.CompilerParams(
            dimension_semantics=("parallel",)),
    )(x_flat, ea_flat, src_col, dst_row, node_tab, edge_tab,
      w_cat, bias, w1, b1, w2, b2)

    return out[:, :1]     # column 0 of the lane-dense slab is the prediction


# ------------------------- pure-JAX f32 reference -------------------------- #
def graph_dnn_reference(x, edge_attr, edge_index, params):
    B = x.shape[0]
    outs = []
    for b in range(B):
        xb, eb, ei = x[b], edge_attr[b], edge_index[b]
        h = sum(params["node_tables"][i][xb[:, i]] for i in range(xb.shape[1]))
        e = sum(params["edge_tables"][i][eb[:, i]] for i in range(eb.shape[1]))
        n_nodes, n_edges = xb.shape[0], eb.shape[0]
        src, dst = ei[0], ei[1]
        adj = jnp.zeros((n_nodes, n_nodes)).at[dst, src].add(1.0)
        inc = jnp.zeros((n_nodes, n_edges)).at[dst, jnp.arange(n_edges)].add(1.0)
        for l in range(params["w_self"].shape[0]):
            msg = adj @ h + inc @ e
            h = jax.nn.relu(h @ params["w_self"][l] + msg @ params["w_msg"][l]
                            + params["bias"][l])
        g = jnp.mean(h, axis=0, keepdims=True)
        z = jax.nn.relu(g @ params["w1"] + params["b1"])
        outs.append(z @ params["w2"] + params["b2"])
    return jnp.concatenate(outs, axis=0)


# --------------------------------- main ------------------------------------ #
if __name__ == "__main__":
    key = jax.random.PRNGKey(0)

    # small, module-consistent sizes; B graphs processed in blocks of 8
    B = 16
    N_NODES, N_EDGES = 16, 32
    N_NODE_FEATS, N_EDGE_FEATS = 3, 2
    V_NODE, V_EDGE = 16, 8
    D, H, L = 32, 32, 2

    ks = jax.random.split(key, 14)
    params = {
        "node_tables": 0.1 * jax.random.normal(ks[0], (N_NODE_FEATS, V_NODE, D), jnp.float32),
        "edge_tables": 0.1 * jax.random.normal(ks[1], (N_EDGE_FEATS, V_EDGE, D), jnp.float32),
        "w_self": 0.1 * jax.random.normal(ks[2], (L, D, D), jnp.float32),
        "w_msg": 0.1 * jax.random.normal(ks[3], (L, D, D), jnp.float32),
        "bias": 0.1 * jax.random.normal(ks[4], (L, 1, D), jnp.float32),
        "w1": 0.1 * jax.random.normal(ks[5], (D, H), jnp.float32),
        "b1": 0.1 * jax.random.normal(ks[6], (1, H), jnp.float32),
        "w2": 0.1 * jax.random.normal(ks[7], (H, 1), jnp.float32),
        "b2": 0.1 * jax.random.normal(ks[8], (1, 1), jnp.float32),
    }

    # synthetic batched graph data (data.x, data.edge_attr, data.edge_index)
    x = jax.random.randint(ks[9], (B, N_NODES, N_NODE_FEATS), 0, V_NODE, jnp.int32)
    edge_attr = jax.random.randint(ks[10], (B, N_EDGES, N_EDGE_FEATS), 0, V_EDGE, jnp.int32)
    src = jax.random.randint(ks[11], (B, N_EDGES), 0, N_NODES, jnp.int32)
    dst = jax.random.randint(ks[12], (B, N_EDGES), 0, N_NODES, jnp.int32)
    edge_index = jnp.stack([src, dst], axis=1)                      # [B, 2, E]

    fwd = jax.jit(functools.partial(graph_dnn_forward, graphs_per_block=8))
    out = jax.block_until_ready(fwd(x, edge_attr, edge_index, params))

    ref = graph_dnn_reference(x, edge_attr, edge_index, params)
    assert out.shape == (B, 1), out.shape
    # bf16 matmul operands (f32 accumulation) -> small rounding vs. the f32 reference
    assert jnp.allclose(out, ref, atol=2e-2, rtol=2e-2), (out, ref)

    # TODO(synk): embedding_aggregation == 'concatenate' raises NotImplementedError
    # in the original module and is not implemented here either.
    print("KERNEL_OK")
</pallas_src>

<mosaic_0001>
module attributes {stable_mosaic.version = 11 : i64} {
  func.func @gnn_kernel(%arg0: i32, %arg1: memref<128x3xi32, #tpu.memory_space<vmem>>, %arg2: memref<256x2xi32, #tpu.memory_space<vmem>>, %arg3: memref<256x1xi32, #tpu.memory_space<vmem>>, %arg4: memref<1x1x256xi32, #tpu.memory_space<vmem>>, %arg5: memref<128x128xbf16, #tpu.memory_space<vmem>>, %arg6: memref<128x128xbf16, #tpu.memory_space<vmem>>, %arg7: memref<2x256x128xbf16, #tpu.memory_space<vmem>>, %arg8: memref<2x1x128xf32, #tpu.memory_space<vmem>>, %arg9: memref<128x128xbf16, #tpu.memory_space<vmem>>, %arg10: memref<1x128xf32, #tpu.memory_space<vmem>>, %arg11: memref<128x128xbf16, #tpu.memory_space<vmem>>, %arg12: memref<1x128xf32, #tpu.memory_space<vmem>>, %arg13: memref<8x128xf32, #tpu.memory_space<vmem>>) attributes {dimension_semantics = [#tpu.dimension_semantics<parallel>], iteration_bounds = array<i64: 2>, scalar_prefetch = 0 : i64, scratch_operands = 0 : i64, tpu.core_type = #tpu.core_type<tc>, window_params = [{transform_indices = @transform_0, window_bounds = array<i64: 128, 3>}, {transform_indices = @transform_1, window_bounds = array<i64: 256, 2>}, {transform_indices = @transform_2, window_bounds = array<i64: 256, 1>}, {transform_indices = @transform_3, window_bounds = array<i64: 1, 1, 256>}, {pipeline_mode = #tpu.pipeline_mode<synchronous>, transform_indices = @transform_4, window_bounds = array<i64: 128, 128>}, {pipeline_mode = #tpu.pipeline_mode<synchronous>, transform_indices = @transform_5, window_bounds = array<i64: 128, 128>}, {pipeline_mode = #tpu.pipeline_mode<synchronous>, transform_indices = @transform_6, window_bounds = array<i64: 2, 256, 128>}, {pipeline_mode = #tpu.pipeline_mode<synchronous>, transform_indices = @transform_7, window_bounds = array<i64: 2, 1, 128>}, {pipeline_mode = #tpu.pipeline_mode<synchronous>, transform_indices = @transform_8, window_bounds = array<i64: 128, 128>}, {pipeline_mode = #tpu.pipeline_mode<synchronous>, transform_indices = @transform_9, window_bounds = array<i64: 1, 128>}, {pipeline_mode = #tpu.pipeline_mode<synchronous>, transform_indices = @transform_10, window_bounds = array<i64: 128, 128>}, {pipeline_mode = #tpu.pipeline_mode<synchronous>, transform_indices = @transform_11, window_bounds = array<i64: 1, 128>}, {transform_indices = @transform_12, window_bounds = array<i64: 8, 128>}]} {
    %c0 = arith.constant 0 : index
    %c0_0 = arith.constant 0 : index
    %0 = vector.load %arg1[%c0, %c0_0] : memref<128x3xi32, #tpu.memory_space<vmem>>, vector<128x3xi32>
    %1 = tpu.iota {dimensions = array<i32: 1>} : vector<128x128xi32>
    %cst = arith.constant 0.000000e+00 : f32
    %2 = vector.broadcast %cst : f32 to vector<128x128xf32>
    %3 = vector.extract_strided_slice %0 {offsets = [0, 0], sizes = [128, 1], strides = [1, 1]} : vector<128x3xi32> to vector<128x1xi32>
    %c0_i32 = arith.constant 0 : i32
    %4 = vector.broadcast %c0_i32 : i32 to vector<128x1xi32>
    %5 = arith.addi %3, %4 : vector<128x1xi32>
    %6 = vector.broadcast %5 : vector<128x1xi32> to vector<128x128xi32>
    %7 = arith.cmpi eq, %1, %6 : vector<128x128xi32>
    %cst_1 = arith.constant 1.000000e+00 : f32
    %cst_2 = arith.constant 0.000000e+00 : f32
    %8 = vector.broadcast %cst_1 : f32 to vector<128x128xf32>
    %9 = vector.broadcast %cst_2 : f32 to vector<128x128xf32>
    %10 = arith.select %7, %8, %9 : vector<128x128xi1>, vector<128x128xf32>
    %11 = arith.addf %2, %10 : vector<128x128xf32>
    %12 = vector.extract_strided_slice %0 {offsets = [0, 1], sizes = [128, 1], strides = [1, 1]} : vector<128x3xi32> to vector<128x1xi32>
    %c16_i32 = arith.constant 16 : i32
    %13 = vector.broadcast %c16_i32 : i32 to vector<128x1xi32>
    %14 = arith.addi %12, %13 : vector<128x1xi32>
    %15 = vector.broadcast %14 : vector<128x1xi32> to vector<128x128xi32>
    %16 = arith.cmpi eq, %1, %15 : vector<128x128xi32>
    %cst_3 = arith.constant 1.000000e+00 : f32
    %cst_4 = arith.constant 0.000000e+00 : f32
    %17 = vector.broadcast %cst_3 : f32 to vector<128x128xf32>
    %18 = vector.broadcast %cst_4 : f32 to vector<128x128xf32>
    %19 = arith.select %16, %17, %18 : vector<128x128xi1>, vector<128x128xf32>
    %20 = arith.addf %11, %19 : vector<128x128xf32>
    %21 = vector.extract_strided_slice %0 {offsets = [0, 2], sizes = [128, 1], strides = [1, 1]} : vector<128x3xi32> to vector<128x1xi32>
    %c32_i32 = arith.constant 32 : i32
    %22 = vector.broadcast %c32_i32 : i32 to vector<128x1xi32>
    %23 = arith.addi %21, %22 : vector<128x1xi32>
    %24 = vector.broadcast %23 : vector<128x1xi32> to vector<128x128xi32>
    %25 = arith.cmpi eq, %1, %24 : vector<128x128xi32>
    %cst_5 = arith.constant 1.000000e+00 : f32
    %cst_6 = arith.constant 0.000000e+00 : f32
    %26 = vector.broadcast %cst_5 : f32 to vector<128x128xf32>
    %27 = vector.broadcast %cst_6 : f32 to vector<128x128xf32>
    %28 = arith.select %25, %26, %27 : vector<128x128xi1>, vector<128x128xf32>
    %29 = arith.addf %20, %28 : vector<128x128xf32>
    %30 = arith.truncf %29 : vector<128x128xf32> to vector<128x128xbf16>
    %c0_7 = arith.constant 0 : index
    %c0_8 = arith.constant 0 : index
    %31 = vector.load %arg5[%c0_7, %c0_8] : memref<128x128xbf16, #tpu.memory_space<vmem>>, vector<128x128xbf16>
    %cst_9 = arith.constant dense<0.000000e+00> : vector<128x128xf32>
    %32 = tpu.matmul %30, %31, %cst_9 {dimension_numbers = #tpu.dot_dimension_numbers<[1], [0], [0], [1], [0, 0, 1, 1], [], []>} : vector<128x128xbf16>, vector<128x128xbf16>, vector<128x128xf32> -> vector<128x128xf32>
    %c0_10 = arith.constant 0 : index
    %c0_11 = arith.constant 0 : index
    %33 = vector.load %arg2[%c0_10, %c0_11] : memref<256x2xi32, #tpu.memory_space<vmem>>, vector<256x2xi32>
    %34 = tpu.iota {dimensions = array<i32: 1>} : vector<256x128xi32>
    %cst_12 = arith.constant 0.000000e+00 : f32
    %35 = vector.broadcast %cst_12 : f32 to vector<256x128xf32>
    %36 = vector.extract_strided_slice %33 {offsets = [0, 0], sizes = [256, 1], strides = [1, 1]} : vector<256x2xi32> to vector<256x1xi32>
    %c0_i32_13 = arith.constant 0 : i32
    %37 = vector.broadcast %c0_i32_13 : i32 to vector<256x1xi32>
    %38 = arith.addi %36, %37 : vector<256x1xi32>
    %39 = vector.broadcast %38 : vector<256x1xi32> to vector<256x128xi32>
    %40 = arith.cmpi eq, %34, %39 : vector<256x128xi32>
    %cst_14 = arith.constant 1.000000e+00 : f32
    %cst_15 = arith.constant 0.000000e+00 : f32
    %41 = vector.broadcast %cst_14 : f32 to vector<256x128xf32>
    %42 = vector.broadcast %cst_15 : f32 to vector<256x128xf32>
    %43 = arith.select %40, %41, %42 : vector<256x128xi1>, vector<256x128xf32>
    %44 = arith.addf %35, %43 : vector<256x128xf32>
    %45 = vector.extract_strided_slice %33 {offsets = [0, 1], sizes = [256, 1], strides = [1, 1]} : vector<256x2xi32> to vector<256x1xi32>
    %c8_i32 = arith.constant 8 : i32
    %46 = vector.broadcast %c8_i32 : i32 to vector<256x1xi32>
    %47 = arith.addi %45, %46 : vector<256x1xi32>
    %48 = vector.broadcast %47 : vector<256x1xi32> to vector<256x128xi32>
    %49 = arith.cmpi eq, %34, %48 : vector<256x128xi32>
    %cst_16 = arith.constant 1.000000e+00 : f32
    %cst_17 = arith.constant 0.000000e+00 : f32
    %50 = vector.broadcast %cst_16 : f32 to vector<256x128xf32>
    %51 = vector.broadcast %cst_17 : f32 to vector<256x128xf32>
    %52 = arith.select %49, %50, %51 : vector<256x128xi1>, vector<256x128xf32>
    %53 = arith.addf %44, %52 : vector<256x128xf32>
    %54 = arith.truncf %53 : vector<256x128xf32> to vector<256x128xbf16>
    %c0_18 = arith.constant 0 : index
    %c0_19 = arith.constant 0 : index
    %55 = vector.load %arg6[%c0_18, %c0_19] : memref<128x128xbf16, #tpu.memory_space<vmem>>, vector<128x128xbf16>
    %cst_20 = arith.constant dense<0.000000e+00> : vector<256x128xf32>
    %56 = tpu.matmul %54, %55, %cst_20 {dimension_numbers = #tpu.dot_dimension_numbers<[1], [0], [0], [1], [0, 0, 1, 1], [], []>} : vector<256x128xbf16>, vector<128x128xbf16>, vector<256x128xf32> -> vector<256x128xf32>
    %57 = tpu.iota {dimensions = array<i32: 1>} : vector<256x128xi32>
    %c0_21 = arith.constant 0 : index
    %c0_22 = arith.constant 0 : index
    %58 = vector.load %arg3[%c0_21, %c0_22] : memref<256x1xi32, #tpu.memory_space<vmem>>, vector<256x1xi32>
    %59 = vector.broadcast %58 : vector<256x1xi32> to vector<256x128xi32>
    %60 = arith.cmpi eq, %57, %59 : vector<256x128xi32>
    %cst_23 = arith.constant 1.000000e+00 : f32
    %cst_24 = arith.constant 0.000000e+00 : f32
    %61 = vector.broadcast %cst_23 : f32 to vector<256x128xf32>
    %62 = vector.broadcast %cst_24 : f32 to vector<256x128xf32>
    %63 = arith.select %60, %61, %62 : vector<256x128xi1>, vector<256x128xf32>
    %64 = arith.truncf %63 : vector<256x128xf32> to vector<256x128xbf16>
    %65 = tpu.iota {dimensions = array<i32: 0>} : vector<128x256xi32>
    %c0_25 = arith.constant 0 : index
    %c0_26 = arith.constant 0 : index
    %c0_27 = arith.constant 0 : index
    %66 = vector.load %arg4[%c0_25, %c0_26, %c0_27] : memref<1x1x256xi32, #tpu.memory_space<vmem>>, vector<1x1x256xi32>
    %67 = vector.shape_cast %66 : vector<1x1x256xi32> to vector<1x256xi32>
    %68 = vector.broadcast %67 : vector<1x256xi32> to vector<128x256xi32>
    %69 = arith.cmpi eq, %65, %68 : vector<128x256xi32>
    %cst_28 = arith.constant 1.000000e+00 : f32
    %cst_29 = arith.constant 0.000000e+00 : f32
    %70 = vector.broadcast %cst_28 : f32 to vector<128x256xf32>
    %71 = vector.broadcast %cst_29 : f32 to vector<128x256xf32>
    %72 = arith.select %69, %70, %71 : vector<128x256xi1>, vector<128x256xf32>
    %73 = arith.truncf %72 : vector<128x256xf32> to vector<128x256xbf16>
    %74 = arith.truncf %32 : vector<128x128xf32> to vector<128x128xbf16>
    %cst_30 = arith.constant dense<0.000000e+00> : vector<256x128xf32>
    %75 = tpu.matmul %64, %74, %cst_30 {dimension_numbers = #tpu.dot_dimension_numbers<[1], [0], [0], [1], [0, 0, 1, 1], [], []>} : vector<256x128xbf16>, vector<128x128xbf16>, vector<256x128xf32> -> vector<256x128xf32>
    %76 = arith.addf %75, %56 : vector<256x128xf32>
    %77 = arith.truncf %76 : vector<256x128xf32> to vector<256x128xbf16>
    %cst_31 = arith.constant dense<0.000000e+00> : vector<128x128xf32>
    %78 = tpu.matmul %73, %77, %cst_31 {dimension_numbers = #tpu.dot_dimension_numbers<[1], [0], [0], [1], [0, 0, 1, 1], [], []>} : vector<128x256xbf16>, vector<256x128xbf16>, vector<128x128xf32> -> vector<128x128xf32>
    %79 = arith.truncf %32 : vector<128x128xf32> to vector<128x128xbf16>
    %80 = arith.truncf %78 : vector<128x128xf32> to vector<128x128xbf16>
    %81 = tpu.concatenate %79, %80 in 1 : vector<128x128xbf16>, vector<128x128xbf16> -> vector<128x256xbf16>
    %c0_32 = arith.constant 0 : index
    %c0_33 = arith.constant 0 : index
    %c0_34 = arith.constant 0 : index
    %82 = vector.load %arg7[%c0_32, %c0_33, %c0_34] : memref<2x256x128xbf16, #tpu.memory_space<vmem>>, vector<1x256x128xbf16>
    %83 = vector.shape_cast %82 : vector<1x256x128xbf16> to vector<256x128xbf16>
    %cst_35 = arith.constant dense<0.000000e+00> : vector<128x128xf32>
    %84 = tpu.matmul %81, %83, %cst_35 {dimension_numbers = #tpu.dot_dimension_numbers<[1], [0], [0], [1], [0, 0, 1, 1], [], []>} : vector<128x256xbf16>, vector<256x128xbf16>, vector<128x128xf32> -> vector<128x128xf32>
    %c0_36 = arith.constant 0 : index
    %c0_37 = arith.constant 0 : index
    %c0_38 = arith.constant 0 : index
    %85 = vector.load %arg8[%c0_36, %c0_37, %c0_38] : memref<2x1x128xf32, #tpu.memory_space<vmem>>, vector<1x1x128xf32>
    %86 = vector.shape_cast %85 : vector<1x1x128xf32> to vector<1x128xf32>
    %87 = vector.broadcast %86 : vector<1x128xf32> to vector<128x128xf32>
    %88 = arith.addf %84, %87 : vector<128x128xf32>
    %cst_39 = arith.constant 0.000000e+00 : f32
    %89 = vector.broadcast %cst_39 : f32 to vector<128x128xf32>
    %90 = arith.maximumf %88, %89 : vector<128x128xf32>
    %91 = arith.truncf %90 : vector<128x128xf32> to vector<128x128xbf16>
    %cst_40 = arith.constant dense<0.000000e+00> : vector<256x128xf32>
    %92 = tpu.matmul %64, %91, %cst_40 {dimension_numbers = #tpu.dot_dimension_numbers<[1], [0], [0], [1], [0, 0, 1, 1], [], []>} : vector<256x128xbf16>, vector<128x128xbf16>, vector<256x128xf32> -> vector<256x128xf32>
    %93 = arith.addf %92, %56 : vector<256x128xf32>
    %94 = arith.truncf %93 : vector<256x128xf32> to vector<256x128xbf16>
    %cst_41 = arith.constant dense<0.000000e+00> : vector<128x128xf32>
    %95 = tpu.matmul %73, %94, %cst_41 {dimension_numbers = #tpu.dot_dimension_numbers<[1], [0], [0], [1], [0, 0, 1, 1], [], []>} : vector<128x256xbf16>, vector<256x128xbf16>, vector<128x128xf32> -> vector<128x128xf32>
    %96 = arith.truncf %90 : vector<128x128xf32> to vector<128x128xbf16>
    %97 = arith.truncf %95 : vector<128x128xf32> to vector<128x128xbf16>
    %98 = tpu.concatenate %96, %97 in 1 : vector<128x128xbf16>, vector<128x128xbf16> -> vector<128x256xbf16>
    %c1 = arith.constant 1 : index
    %c0_42 = arith.constant 0 : index
    %c0_43 = arith.constant 0 : index
    %99 = vector.load %arg7[%c1, %c0_42, %c0_43] : memref<2x256x128xbf16, #tpu.memory_space<vmem>>, vector<1x256x128xbf16>
    %100 = vector.shape_cast %99 : vector<1x256x128xbf16> to vector<256x128xbf16>
    %cst_44 = arith.constant dense<0.000000e+00> : vector<128x128xf32>
    %101 = tpu.matmul %98, %100, %cst_44 {dimension_numbers = #tpu.dot_dimension_numbers<[1], [0], [0], [1], [0, 0, 1, 1], [], []>} : vector<128x256xbf16>, vector<256x128xbf16>, vector<128x128xf32> -> vector<128x128xf32>
    %c1_45 = arith.constant 1 : index
    %c0_46 = arith.constant 0 : index
    %c0_47 = arith.constant 0 : index
    %102 = vector.load %arg8[%c1_45, %c0_46, %c0_47] : memref<2x1x128xf32, #tpu.memory_space<vmem>>, vector<1x1x128xf32>
    %103 = vector.shape_cast %102 : vector<1x1x128xf32> to vector<1x128xf32>
    %104 = vector.broadcast %103 : vector<1x128xf32> to vector<128x128xf32>
    %105 = arith.addf %101, %104 : vector<128x128xf32>
    %cst_48 = arith.constant 0.000000e+00 : f32
    %106 = vector.broadcast %cst_48 : f32 to vector<128x128xf32>
    %107 = arith.maximumf %105, %106 : vector<128x128xf32>
    %108 = tpu.iota {dimensions = array<i32: 1>} : vector<8x128xi32>
    %109 = tpu.iota {dimensions = array<i32: 0>} : vector<8x128xi32>
    %c16_i32_49 = arith.constant 16 : i32
    %110 = vector.broadcast %c16_i32_49 : i32 to vector<8x128xi32>
    %111 = arith.muli %109, %110 : vector<8x128xi32>
    %112 = arith.cmpi sge, %108, %111 : vector<8x128xi32>
    %c1_i32 = arith.constant 1 : i32
    %113 = vector.broadcast %c1_i32 : i32 to vector<8x128xi32>
    %114 = arith.addi %109, %113 : vector<8x128xi32>
    %c16_i32_50 = arith.constant 16 : i32
    %115 = vector.broadcast %c16_i32_50 : i32 to vector<8x128xi32>
    %116 = arith.muli %114, %115 : vector<8x128xi32>
    %117 = arith.cmpi slt, %108, %116 : vector<8x128xi32>
    %118 = arith.andi %112, %117 : vector<8x128xi1>
    %cst_51 = arith.constant 1.000000e+00 : f32
    %cst_52 = arith.constant 0.000000e+00 : f32
    %119 = vector.broadcast %cst_51 : f32 to vector<8x128xf32>
    %120 = vector.broadcast %cst_52 : f32 to vector<8x128xf32>
    %121 = arith.select %118, %119, %120 : vector<8x128xi1>, vector<8x128xf32>
    %122 = arith.truncf %121 : vector<8x128xf32> to vector<8x128xbf16>
    %123 = arith.truncf %107 : vector<128x128xf32> to vector<128x128xbf16>
    %cst_53 = arith.constant dense<0.000000e+00> : vector<8x128xf32>
    %124 = tpu.matmul %122, %123, %cst_53 {dimension_numbers = #tpu.dot_dimension_numbers<[1], [0], [0], [1], [0, 0, 1, 1], [], []>} : vector<8x128xbf16>, vector<128x128xbf16>, vector<8x128xf32> -> vector<8x128xf32>
    %cst_54 = arith.constant 6.250000e-02 : f32
    %125 = vector.broadcast %cst_54 : f32 to vector<8x128xf32>
    %126 = arith.mulf %124, %125 : vector<8x128xf32>
    %127 = arith.truncf %126 : vector<8x128xf32> to vector<8x128xbf16>
    %c0_55 = arith.constant 0 : index
    %c0_56 = arith.constant 0 : index
    %128 = vector.load %arg9[%c0_55, %c0_56] : memref<128x128xbf16, #tpu.memory_space<vmem>>, vector<128x128xbf16>
    %cst_57 = arith.constant dense<0.000000e+00> : vector<8x128xf32>
    %129 = tpu.matmul %127, %128, %cst_57 {dimension_numbers = #tpu.dot_dimension_numbers<[1], [0], [0], [1], [0, 0, 1, 1], [], []>} : vector<8x128xbf16>, vector<128x128xbf16>, vector<8x128xf32> -> vector<8x128xf32>
    %c0_58 = arith.constant 0 : index
    %c0_59 = arith.constant 0 : index
    %130 = vector.load %arg10[%c0_58, %c0_59] : memref<1x128xf32, #tpu.memory_space<vmem>>, vector<1x128xf32>
    %131 = vector.broadcast %130 : vector<1x128xf32> to vector<8x128xf32>
    %132 = arith.addf %129, %131 : vector<8x128xf32>
    %cst_60 = arith.constant 0.000000e+00 : f32
    %133 = vector.broadcast %cst_60 : f32 to vector<8x128xf32>
    %134 = arith.maximumf %132, %133 : vector<8x128xf32>
    %135 = arith.truncf %134 : vector<8x128xf32> to vector<8x128xbf16>
    %c0_61 = arith.constant 0 : index
    %c0_62 = arith.constant 0 : index
    %136 = vector.load %arg11[%c0_61, %c0_62] : memref<128x128xbf16, #tpu.memory_space<vmem>>, vector<128x128xbf16>
    %cst_63 = arith.constant dense<0.000000e+00> : vector<8x128xf32>
    %137 = tpu.matmul %135, %136, %cst_63 {dimension_numbers = #tpu.dot_dimension_numbers<[1], [0], [0], [1], [0, 0, 1, 1], [], []>} : vector<8x128xbf16>, vector<128x128xbf16>, vector<8x128xf32> -> vector<8x128xf32>
    %c0_64 = arith.constant 0 : index
    %c0_65 = arith.constant 0 : index
    %138 = vector.load %arg12[%c0_64, %c0_65] : memref<1x128xf32, #tpu.memory_space<vmem>>, vector<1x128xf32>
    %139 = vector.broadcast %138 : vector<1x128xf32> to vector<8x128xf32>
    %140 = arith.addf %137, %139 : vector<8x128xf32>
    %c0_66 = arith.constant 0 : index
    %c0_67 = arith.constant 0 : index
    %141 = vector.load %arg13[%c0_66, %c0_67] : memref<8x128xf32, #tpu.memory_space<vmem>>, vector<8x128xf32>
    tpu.vector_store %arg13[%c0_66, %c0_67], %140 {strides = array<i32>} : memref<8x128xf32, #tpu.memory_space<vmem>>, vector<8x128xf32>,
    return
  }
  func.func @transform_0(%arg0: i32) -> (i32, i32) {
    %c0_i32 = arith.constant 0 : i32
    %c0_i32_0 = arith.constant 0 : i32
    return %arg0, %c0_i32 : i32, i32
  }
  func.func @transform_1(%arg0: i32) -> (i32, i32) {
    %c0_i32 = arith.constant 0 : i32
    %c0_i32_0 = arith.constant 0 : i32
    return %arg0, %c0_i32 : i32, i32
  }
  func.func @transform_2(%arg0: i32) -> (i32, i32) {
    %c0_i32 = arith.constant 0 : i32
    %c0_i32_0 = arith.constant 0 : i32
    return %arg0, %c0_i32 : i32, i32
  }
  func.func @transform_3(%arg0: i32) -> (i32, i32, i32) {
    %c0_i32 = arith.constant 0 : i32
    %c0_i32_0 = arith.constant 0 : i32
    %c0_i32_1 = arith.constant 0 : i32
    return %arg0, %c0_i32, %c0_i32_0 : i32, i32, i32
  }
  func.func @transform_4(%arg0: i32) -> (i32, i32) {
    %c0_i32 = arith.constant 0 : i32
    %c0_i32_0 = arith.constant 0 : i32
    %c0_i32_1 = arith.constant 0 : i32
    return %c0_i32, %c0_i32_0 : i32, i32
  }
  func.func @transform_5(%arg0: i32) -> (i32, i32) {
    %c0_i32 = arith.constant 0 : i32
    %c0_i32_0 = arith.constant 0 : i32
    %c0_i32_1 = arith.constant 0 : i32
    return %c0_i32, %c0_i32_0 : i32, i32
  }
  func.func @transform_6(%arg0: i32) -> (i32, i32, i32) {
    %c0_i32 = arith.constant 0 : i32
    %c0_i32_0 = arith.constant 0 : i32
    %c0_i32_1 = arith.constant 0 : i32
    %c0_i32_2 = arith.constant 0 : i32
    return %c0_i32, %c0_i32_0, %c0_i32_1 : i32, i32, i32
  }
  func.func @transform_7(%arg0: i32) -> (i32, i32, i32) {
    %c0_i32 = arith.constant 0 : i32
    %c0_i32_0 = arith.constant 0 : i32
    %c0_i32_1 = arith.constant 0 : i32
    %c0_i32_2 = arith.constant 0 : i32
    return %c0_i32, %c0_i32_0, %c0_i32_1 : i32, i32, i32
  }
  func.func @transform_8(%arg0: i32) -> (i32, i32) {
    %c0_i32 = arith.constant 0 : i32
    %c0_i32_0 = arith.constant 0 : i32
    %c0_i32_1 = arith.constant 0 : i32
    return %c0_i32, %c0_i32_0 : i32, i32
  }
  func.func @transform_9(%arg0: i32) -> (i32, i32) {
    %c0_i32 = arith.constant 0 : i32
    %c0_i32_0 = arith.constant 0 : i32
    %c0_i32_1 = arith.constant 0 : i32
    return %c0_i32, %c0_i32_0 : i32, i32
  }
  func.func @transform_10(%arg0: i32) -> (i32, i32) {
    %c0_i32 = arith.constant 0 : i32
    %c0_i32_0 = arith.constant 0 : i32
    %c0_i32_1 = arith.constant 0 : i32
    return %c0_i32, %c0_i32_0 : i32, i32
  }
  func.func @transform_11(%arg0: i32) -> (i32, i32) {
    %c0_i32 = arith.constant 0 : i32
    %c0_i32_0 = arith.constant 0 : i32
    %c0_i32_1 = arith.constant 0 : i32
    return %c0_i32, %c0_i32_0 : i32, i32
  }
  func.func @transform_12(%arg0: i32) -> (i32, i32) {
    %c0_i32 = arith.constant 0 : i32
    %c0_i32_0 = arith.constant 0 : i32
    return %arg0, %c0_i32 : i32, i32
  }
}

</mosaic_0001>

<llo_original>
// kernel: graph_dnn_forward.1
$region0: #{graph_dnn_forward.1}
  #allocation0 [shape = 'u32[]', space=smem, size = 0x4, offset = 0x4, fixed_abs, tag = 'smem constant byte address 0x4 - core index']
  #allocation1 [shape = 'u32[72,128]{1,0:T(1,128)}', space=vmem, size = 0x9000, scoped, tag = 'internal scratch']
  %s0 = inlined_call_operand.vmem [shape: s32[256,3], index: 0, kind: input, shape index: {}]
  %s1 = inlined_call_operand.vmem [shape: s32[512,2], index: 1, kind: input, shape index: {}]
  %s2 = inlined_call_operand.vmem [shape: s32[512,1], index: 2, kind: input, shape index: {}]
  %s3 = inlined_call_operand.vmem [shape: s32[2,1,256], index: 3, kind: input, shape index: {}]
  %s4 = inlined_call_operand.vmem [shape: bf16[128,128], index: 4, kind: input, shape index: {}]
  %s5 = inlined_call_operand.vmem [shape: bf16[128,128], index: 5, kind: input, shape index: {}]
  %s6 = inlined_call_operand.vmem [shape: bf16[2,256,128], index: 6, kind: input, shape index: {}]
  %s7 = inlined_call_operand.vmem [shape: f32[2,1,128], index: 7, kind: input, shape index: {}]
  %s8 = inlined_call_operand.vmem [shape: bf16[128,128], index: 8, kind: input, shape index: {}]
  %s9 = inlined_call_operand.vmem [shape: f32[1,128], index: 9, kind: input, shape index: {}]
  %s10 = inlined_call_operand.vmem [shape: bf16[128,128], index: 10, kind: input, shape index: {}]
  %s11 = inlined_call_operand.vmem [shape: f32[1,128], index: 11, kind: input, shape index: {}]
  %s12 = inlined_call_operand.vmem [shape: f32[16,128], index: 12, kind: output, shape index: {}]
  %s13 = sld [smem:[#allocation0]]
  $region81: #{graph_dnn_forward.1} parent=0
    _
  %s15 = ssub.s32 1, %s13
  %s16 = scalar_select 0, %s15, %s13
  loop: start=0, step=1, limit=4
  $region2: #{graph_dnn_forward.1} parent=0 // loop_pre_header
    _
  $region3: #{graph_dnn_forward.1} parent=0 // loop_header
    %s18 = sphi 0, %s22
    %p19 = scmp.ge.s32.totalorder %s18, 4
    %s28 = sphi 0, %s30
    %s31 = sphi 0, %s28
    %s32 = sphi 0, %s31
    %s48 = sphi 0, %s32
    %s54 = sphi 0, %s56
    %s57 = sphi 0, %s54
    %s58 = sphi 0, %s57
    %s74 = sphi 0, %s58
    %s80 = sphi 0, %s82
    %s83 = sphi 0, %s80
    %s84 = sphi 0, %s83
    %s100 = sphi 0, %s84
    %s106 = sphi 0, %s108
    %s109 = sphi 0, %s106
    %s110 = sphi 0, %s109
    %s126 = sphi 0, %s110
    %s130 = sphi 0, %s130
    %s132 = sphi 0, %s130
    %s133 = sphi 0, %s132
    %s147 = sphi 0, %s133
    %s151 = sphi 0, %s151
    %s153 = sphi 0, %s151
    %s154 = sphi 0, %s153
    %s168 = sphi 0, %s154
    %s172 = sphi 0, %s172
    %s174 = sphi 0, %s172
    %s175 = sphi 0, %s174
    %s189 = sphi 0, %s175
    %s193 = sphi 0, %s193
    %s195 = sphi 0, %s193
    %s196 = sphi 0, %s195
    %s210 = sphi 0, %s196
    %s214 = sphi 0, %s214
    %s216 = sphi 0, %s214
    %s217 = sphi 0, %s216
    %s231 = sphi 0, %s217
    %s235 = sphi 0, %s235
    %s237 = sphi 0, %s235
    %s238 = sphi 0, %s237
    %s252 = sphi 0, %s238
    %s256 = sphi 0, %s256
    %s258 = sphi 0, %s256
    %s259 = sphi 0, %s258
    %s273 = sphi 0, %s259
    %s277 = sphi 0, %s277
    %s279 = sphi 0, %s277
    %s280 = sphi 0, %s279
    %s294 = sphi 0, %s280
    %s300 = sphi 0, %s302
    %s303 = sphi 0, %s300
    %s304 = sphi 0, %s303
    %s320 = sphi 0, %s304
  $region4: #{graph_dnn_forward.1} parent=0 // loop_header_branch
    %21 = sbr.rel (%p19) target = $region8
  $region5: #{graph_dnn_forward.1} parent=0 // loop_body
    %s23 = ssub.s32 %s18, 1
    %s24 = ssub.s32 %s18, 2
    %s25 = sadd.s32 %s18, 1
    %s26 = ssub.s32 %s18, %s25
    %p27 = scmp.eq.s32.totalorder %s26, 0
    %s29 = sadd.s32 %s28, 1
    %s30 = scalar_select %p27, %s28, %s29
    %p33 = pneg %p27
    %p34 = scmp.eq.s32.totalorder %s18, 1
    %p35 = por %p33, %p34
    %p36 = scmp.ne.s32.totalorder %s28, %s31
    %p37 = scmp.eq.s32.totalorder %s18, 0
    %p38 = por %p36, %p37
    %p39 = scmp.ne.s32.totalorder %s28, %s31
    %p40 = scmp.eq.s32.totalorder %s23, 1
    %p41 = por %p39, %p40
    %p42 = scmp.ne.s32.totalorder %s31, %s32
    %p43 = scmp.eq.s32.totalorder %s23, 0
    %p44 = por %p42, %p43
    %p45 = scmp.ne.s32.totalorder %s31, %s32
    %p46 = scmp.eq.s32.totalorder %s24, 1
    %p47 = por %p45, %p46
    %p49 = scmp.ne.s32.totalorder %s32, %s48
    %p50 = scmp.eq.s32.totalorder %s24, 0
    %p51 = por %p49, %p50
    %s52 = ssub.s32 %s18, %s25
    %p53 = scmp.eq.s32.totalorder %s52, 0
    %s55 = sadd.s32 %s54, 1
    %s56 = scalar_select %p53, %s54, %s55
    %p59 = pneg %p53
    %p60 = scmp.eq.s32.totalorder %s18, 1
    %p61 = por %p59, %p60
    %p62 = scmp.ne.s32.totalorder %s54, %s57
    %p63 = scmp.eq.s32.totalorder %s18, 0
    %p64 = por %p62, %p63
    %p65 = scmp.ne.s32.totalorder %s54, %s57
    %p66 = scmp.eq.s32.totalorder %s23, 1
    %p67 = por %p65, %p66
    %p68 = scmp.ne.s32.totalorder %s57, %s58
    %p69 = scmp.eq.s32.totalorder %s23, 0
    %p70 = por %p68, %p69
    %p71 = scmp.ne.s32.totalorder %s57, %s58
    %p72 = scmp.eq.s32.totalorder %s24, 1
    %p73 = por %p71, %p72
    %p75 = scmp.ne.s32.totalorder %s58, %s74
    %p76 = scmp.eq.s32.totalorder %s24, 0
    %p77 = por %p75, %p76
    %s78 = ssub.s32 %s18, %s25
    %p79 = scmp.eq.s32.totalorder %s78, 0
    %s81 = sadd.s32 %s80, 1
    %s82 = scalar_select %p79, %s80, %s81
    %p85 = pneg %p79
    %p86 = scmp.eq.s32.totalorder %s18, 1
    %p87 = por %p85, %p86
    %p88 = scmp.ne.s32.totalorder %s80, %s83
    %p89 = scmp.eq.s32.totalorder %s18, 0
    %p90 = por %p88, %p89
    %p91 = scmp.ne.s32.totalorder %s80, %s83
    %p92 = scmp.eq.s32.totalorder %s23, 1
    %p93 = por %p91, %p92
    %p94 = scmp.ne.s32.totalorder %s83, %s84
    %p95 = scmp.eq.s32.totalorder %s23, 0
    %p96 = por %p94, %p95
    %p97 = scmp.ne.s32.totalorder %s83, %s84
    %p98 = scmp.eq.s32.totalorder %s24, 1
    %p99 = por %p97, %p98
    %p101 = scmp.ne.s32.totalorder %s84, %s100
    %p102 = scmp.eq.s32.totalorder %s24, 0
    %p103 = por %p101, %p102
    %s104 = ssub.s32 %s18, %s25
    %p105 = scmp.eq.s32.totalorder %s104, 0
    %s107 = sadd.s32 %s106, 1
    %s108 = scalar_select %p105, %s106, %s107
    %p111 = pneg %p105
    %p112 = scmp.eq.s32.totalorder %s18, 1
    %p113 = por %p111, %p112
    %p114 = scmp.ne.s32.totalorder %s106, %s109
    %p115 = scmp.eq.s32.totalorder %s18, 0
    %p116 = por %p114, %p115
    %p117 = scmp.ne.s32.totalorder %s106, %s109
    %p118 = scmp.eq.s32.totalorder %s23, 1
    %p119 = por %p117, %p118
    %p120 = scmp.ne.s32.totalorder %s109, %s110
    %p121 = scmp.eq.s32.totalorder %s23, 0
    %p122 = por %p120, %p121
    %p123 = scmp.ne.s32.totalorder %s109, %s110
    %p124 = scmp.eq.s32.totalorder %s24, 1
    %p125 = por %p123, %p124
    %p127 = scmp.ne.s32.totalorder %s110, %s126
    %p128 = scmp.eq.s32.totalorder %s24, 0
    %p129 = por %p127, %p128
    %s131 = sadd.s32 %s130, 1
    %p134 = scmp.eq.s32.totalorder %s18, 1
    %p135 = scmp.ne.s32.totalorder %s130, %s132
    %p136 = scmp.eq.s32.totalorder %s18, 0
    %p137 = por %p135, %p136
    %p138 = scmp.ne.s32.totalorder %s130, %s132
    %p139 = scmp.eq.s32.totalorder %s23, 1
    %p140 = por %p138, %p139
    %p141 = scmp.ne.s32.totalorder %s132, %s133
    %p142 = scmp.eq.s32.totalorder %s23, 0
    %p143 = por %p141, %p142
    %p144 = scmp.ne.s32.totalorder %s132, %s133
    %p145 = scmp.eq.s32.totalorder %s24, 1
    %p146 = por %p144, %p145
    %p148 = scmp.ne.s32.totalorder %s133, %s147
    %p149 = scmp.eq.s32.totalorder %s24, 0
    %p150 = por %p148, %p149
    %s152 = sadd.s32 %s151, 1
    %p155 = scmp.eq.s32.totalorder %s18, 1
    %p156 = scmp.ne.s32.totalorder %s151, %s153
    %p157 = scmp.eq.s32.totalorder %s18, 0
    %p158 = por %p156, %p157
    %p159 = scmp.ne.s32.totalorder %s151, %s153
    %p160 = scmp.eq.s32.totalorder %s23, 1
    %p161 = por %p159, %p160
    %p162 = scmp.ne.s32.totalorder %s153, %s154
    %p163 = scmp.eq.s32.totalorder %s23, 0
    %p164 = por %p162, %p163
    %p165 = scmp.ne.s32.totalorder %s153, %s154
    %p166 = scmp.eq.s32.totalorder %s24, 1
    %p167 = por %p165, %p166
    %p169 = scmp.ne.s32.totalorder %s154, %s168
    %p170 = scmp.eq.s32.totalorder %s24, 0
    %p171 = por %p169, %p170
    %s173 = sadd.s32 %s172, 1
    %p176 = scmp.eq.s32.totalorder %s18, 1
    %p177 = scmp.ne.s32.totalorder %s172, %s174
    %p178 = scmp.eq.s32.totalorder %s18, 0
    %p179 = por %p177, %p178
    %p180 = scmp.ne.s32.totalorder %s172, %s174
    %p181 = scmp.eq.s32.totalorder %s23, 1
    %p182 = por %p180, %p181
    %p183 = scmp.ne.s32.totalorder %s174, %s175
    %p184 = scmp.eq.s32.totalorder %s23, 0
    %p185 = por %p183, %p184
    %p186 = scmp.ne.s32.totalorder %s174, %s175
    %p187 = scmp.eq.s32.totalorder %s24, 1
    %p188 = por %p186, %p187
    %p190 = scmp.ne.s32.totalorder %s175, %s189
    %p191 = scmp.eq.s32.totalorder %s24, 0
    %p192 = por %p190, %p191
    %s194 = sadd.s32 %s193, 1
    %p197 = scmp.eq.s32.totalorder %s18, 1
    %p198 = scmp.ne.s32.totalorder %s193, %s195
    %p199 = scmp.eq.s32.totalorder %s18, 0
    %p200 = por %p198, %p199
    %p201 = scmp.ne.s32.totalorder %s193, %s195
    %p202 = scmp.eq.s32.totalorder %s23, 1
    %p203 = por %p201, %p202
    %p204 = scmp.ne.s32.totalorder %s195, %s196
    %p205 = scmp.eq.s32.totalorder %s23, 0
    %p206 = por %p204, %p205
    %p207 = scmp.ne.s32.totalorder %s195, %s196
    %p208 = scmp.eq.s32.totalorder %s24, 1
    %p209 = por %p207, %p208
    %p211 = scmp.ne.s32.totalorder %s196, %s210
    %p212 = scmp.eq.s32.totalorder %s24, 0
    %p213 = por %p211, %p212
    %s215 = sadd.s32 %s214, 1
    %p218 = scmp.eq.s32.totalorder %s18, 1
    %p219 = scmp.ne.s32.totalorder %s214, %s216
    %p220 = scmp.eq.s32.totalorder %s18, 0
    %p221 = por %p219, %p220
    %p222 = scmp.ne.s32.totalorder %s214, %s216
    %p223 = scmp.eq.s32.totalorder %s23, 1
    %p224 = por %p222, %p223
    %p225 = scmp.ne.s32.totalorder %s216, %s217
    %p226 = scmp.eq.s32.totalorder %s23, 0
    %p227 = por %p225, %p226
    %p228 = scmp.ne.s32.totalorder %s216, %s217
    %p229 = scmp.eq.s32.totalorder %s24, 1
    %p230 = por %p228, %p229
    %p232 = scmp.ne.s32.totalorder %s217, %s231
    %p233 = scmp.eq.s32.totalorder %s24, 0
    %p234 = por %p232, %p233
    %s236 = sadd.s32 %s235, 1
    %p239 = scmp.eq.s32.totalorder %s18, 1
    %p240 = scmp.ne.s32.totalorder %s235, %s237
    %p241 = scmp.eq.s32.totalorder %s18, 0
    %p242 = por %p240, %p241
    %p243 = scmp.ne.s32.totalorder %s235, %s237
    %p244 = scmp.eq.s32.totalorder %s23, 1
    %p245 = por %p243, %p244
    %p246 = scmp.ne.s32.totalorder %s237, %s238
    %p247 = scmp.eq.s32.totalorder %s23, 0
    %p248 = por %p246, %p247
    %p249 = scmp.ne.s32.totalorder %s237, %s238
    %p250 = scmp.eq.s32.totalorder %s24, 1
    %p251 = por %p249, %p250
    %p253 = scmp.ne.s32.totalorder %s238, %s252
    %p254 = scmp.eq.s32.totalorder %s24, 0
    %p255 = por %p253, %p254
    %s257 = sadd.s32 %s256, 1
    %p260 = scmp.eq.s32.totalorder %s18, 1
    %p261 = scmp.ne.s32.totalorder %s256, %s258
    %p262 = scmp.eq.s32.totalorder %s18, 0
    %p263 = por %p261, %p262
    %p264 = scmp.ne.s32.totalorder %s256, %s258
    %p265 = scmp.eq.s32.totalorder %s23, 1
    %p266 = por %p264, %p265
    %p267 = scmp.ne.s32.totalorder %s258, %s259
    %p268 = scmp.eq.s32.totalorder %s23, 0
    %p269 = por %p267, %p268
    %p270 = scmp.ne.s32.totalorder %s258, %s259
    %p271 = scmp.eq.s32.totalorder %s24, 1
    %p272 = por %p270, %p271
    %p274 = scmp.ne.s32.totalorder %s259, %s273
    %p275 = scmp.eq.s32.totalorder %s24, 0
    %p276 = por %p274, %p275
    %s278 = sadd.s32 %s277, 1
    %p281 = scmp.eq.s32.totalorder %s18, 1
    %p282 = scmp.ne.s32.totalorder %s277, %s279
    %p283 = scmp.eq.s32.totalorder %s18, 0
    %p284 = por %p282, %p283
    %p285 = scmp.ne.s32.totalorder %s277, %s279
    %p286 = scmp.eq.s32.totalorder %s23, 1
    %p287 = por %p285, %p286
    %p288 = scmp.ne.s32.totalorder %s279, %s280
    %p289 = scmp.eq.s32.totalorder %s23, 0
    %p290 = por %p288, %p289
    %p291 = scmp.ne.s32.totalorder %s279, %s280
    %p292 = scmp.eq.s32.totalorder %s24, 1
    %p293 = por %p291, %p292
    %p295 = scmp.ne.s32.totalorder %s280, %s294
    %p296 = scmp.eq.s32.totalorder %s24, 0
    %p297 = por %p295, %p296
    %s298 = ssub.s32 %s18, %s25
    %p299 = scmp.eq.s32.totalorder %s298, 0
    %s301 = sadd.s32 %s300, 1
    %s302 = scalar_select %p299, %s300, %s301
    %p305 = pneg %p299
    %p306 = scmp.eq.s32.totalorder %s18, 1
    %p307 = por %p305, %p306
    %p308 = scmp.ne.s32.totalorder %s300, %s303
    %p309 = scmp.eq.s32.totalorder %s18, 0
    %p310 = por %p308, %p309
    %p311 = scmp.ne.s32.totalorder %s300, %s303
    %p312 = scmp.eq.s32.totalorder %s23, 1
    %p313 = por %p311, %p312
    %p314 = scmp.ne.s32.totalorder %s303, %s304
    %p315 = scmp.eq.s32.totalorder %s23, 0
    %p316 = por %p314, %p315
    %p317 = scmp.ne.s32.totalorder %s303, %s304
    %p318 = scmp.eq.s32.totalorder %s24, 1
    %p319 = por %p317, %p318
    %p321 = scmp.ne.s32.totalorder %s304, %s320
    %p322 = scmp.eq.s32.totalorder %s24, 0
    %p323 = por %p321, %p322
    %p324 = scmp.le.s32.totalorder 1, %s18
    %p325 = scmp.lt.s32.totalorder %s18, 3
    %p326 = pnand %p324, %p325
    %p327 = pneg %p326
    // Predicated region
    $region9: #{graph_dnn_forward.1} parent=5 // pred_check
      _
    $region10: #{graph_dnn_forward.1} parent=5 // pred_check_branch
      %329 = sbr.rel (%p326) target = $region12
    $region11: #{graph_dnn_forward.1} parent=5 // pred_region
      %s330 = ssub.s32 %s18, 1
      // Predicated region
      $region13: #{graph_dnn_forward.1} parent=11 // pred_check
        %p331 = pneg %p143
      $region14: #{graph_dnn_forward.1} parent=11 // pred_check_branch
        %333 = sbr.rel (%p331) target = $region16
      $region15: #{graph_dnn_forward.1} parent=11 // pred_region
        _
      $region16: #{graph_dnn_forward.1} parent=11 // pred_fallthru
        _
      // Predicated region
      $region17: #{graph_dnn_forward.1} parent=11 // pred_check
        %p334 = pneg %p164
      $region18: #{graph_dnn_forward.1} parent=11 // pred_check_branch
        %336 = sbr.rel (%p334) target = $region20
      $region19: #{graph_dnn_forward.1} parent=11 // pred_region
        _
      $region20: #{graph_dnn_forward.1} parent=11 // pred_fallthru
        _
      // Predicated region
      $region21: #{graph_dnn_forward.1} parent=11 // pred_check
        %p337 = pneg %p185
      $region22: #{graph_dnn_forward.1} parent=11 // pred_check_branch
        %339 = sbr.rel (%p337) target = $region24
      $region23: #{graph_dnn_forward.1} parent=11 // pred_region
        _
      $region24: #{graph_dnn_forward.1} parent=11 // pred_fallthru
        _
      // Predicated region
      $region25: #{graph_dnn_forward.1} parent=11 // pred_check
        %p340 = pneg %p206
      $region26: #{graph_dnn_forward.1} parent=11 // pred_check_branch
        %342 = sbr.rel (%p340) target = $region28
      $region27: #{graph_dnn_forward.1} parent=11 // pred_region
        _
      $region28: #{graph_dnn_forward.1} parent=11 // pred_fallthru
        _
      // Predicated region
      $region29: #{graph_dnn_forward.1} parent=11 // pred_check
        %p343 = pneg %p227
      $region30: #{graph_dnn_forward.1} parent=11 // pred_check_branch
        %345 = sbr.rel (%p343) target = $region32
      $region31: #{graph_dnn_forward.1} parent=11 // pred_region
        _
      $region32: #{graph_dnn_forward.1} parent=11 // pred_fallthru
        _
      // Predicated region
      $region33: #{graph_dnn_forward.1} parent=11 // pred_check
        %p346 = pneg %p248
      $region34: #{graph_dnn_forward.1} parent=11 // pred_check_branch
        %348 = sbr.rel (%p346) target = $region36
      $region35: #{graph_dnn_forward.1} parent=11 // pred_region
        _
      $region36: #{graph_dnn_forward.1} parent=11 // pred_fallthru
        _
      // Predicated region
      $region37: #{graph_dnn_forward.1} parent=11 // pred_check
        %p349 = pneg %p269
      $region38: #{graph_dnn_forward.1} parent=11 // pred_check_branch
        %351 = sbr.rel (%p349) target = $region40
      $region39: #{graph_dnn_forward.1} parent=11 // pred_region
        _
      $region40: #{graph_dnn_forward.1} parent=11 // pred_fallthru
        _
      // Predicated region
      $region41: #{graph_dnn_forward.1} parent=11 // pred_check
        %p352 = pneg %p290
      $region42: #{graph_dnn_forward.1} parent=11 // pred_check_branch
        %354 = sbr.rel (%p352) target = $region44
      $region43: #{graph_dnn_forward.1} parent=11 // pred_region
        _
      $region44: #{graph_dnn_forward.1} parent=11 // pred_fallthru
        _
    $region12: #{graph_dnn_forward.1} parent=5 // pred_fallthru
      _
    %p355 = scmp.lt.s32.totalorder %s18, 2
    // Predicated region
    $region45: #{graph_dnn_forward.1} parent=5 // pred_check
      %p356 = pneg %p355
    $region46: #{graph_dnn_forward.1} parent=5 // pred_check_branch
      %358 = sbr.rel (%p356) target = $region48
    $region47: #{graph_dnn_forward.1} parent=5 // pred_region
      // Predicated region
      $region49: #{graph_dnn_forward.1} parent=47 // pred_check
        %p359 = pneg %p38
      $region50: #{graph_dnn_forward.1} parent=47 // pred_check_branch
        %361 = sbr.rel (%p359) target = $region52
      $region51: #{graph_dnn_forward.1} parent=47 // pred_region
        %s362 = smul.u32 16, %s18
        %p363 = scmp.lt.s32.totalorder %s362, 31
        %s364 = scalar_select %p363, %s362, 31
        %s365 = smul.addr %s364, 8
        %s366 = scalar_lea.vmem %s0, %s365
        %s367 = smul.u32 16, %s18
      $region52: #{graph_dnn_forward.1} parent=47 // pred_fallthru
        _
      // Predicated region
      $region53: #{graph_dnn_forward.1} parent=47 // pred_check
        %p368 = pneg %p64
      $region54: #{graph_dnn_forward.1} parent=47 // pred_check_branch
        %370 = sbr.rel (%p368) target = $region56
      $region55: #{graph_dnn_forward.1} parent=47 // pred_region
        %s371 = smul.u32 32, %s18
        %p372 = scmp.lt.s32.totalorder %s371, 63
        %s373 = scalar_select %p372, %s371, 63
        %s374 = smul.addr %s373, 8
        %s375 = scalar_lea.vmem %s1, %s374
        %s376 = smul.u32 32, %s18
      $region56: #{graph_dnn_forward.1} parent=47 // pred_fallthru
        _
      // Predicated region
      $region57: #{graph_dnn_forward.1} parent=47 // pred_check
        %p377 = pneg %p90
      $region58: #{graph_dnn_forward.1} parent=47 // pred_check_branch
        %379 = sbr.rel (%p377) target = $region60
      $region59: #{graph_dnn_forward.1} parent=47 // pred_region
        %s380 = smul.u32 32, %s18
        %p381 = scmp.lt.s32.totalorder %s380, 63
        %s382 = scalar_select %p381, %s380, 63
        %s383 = smul.addr %s382, 8
        %s384 = scalar_lea.vmem %s2, %s383
        %s385 = smul.u32 32, %s18
      $region60: #{graph_dnn_forward.1} parent=47 // pred_fallthru
        _
      // Predicated region
      $region61: #{graph_dnn_forward.1} parent=47 // pred_check
        %p386 = pneg %p116
      $region62: #{graph_dnn_forward.1} parent=47 // pred_check_branch
        %388 = sbr.rel (%p386) target = $region64
      $region63: #{graph_dnn_forward.1} parent=47 // pred_region
        %p389 = scmp.lt.s32.totalorder %s18, 1
        %s390 = scalar_select %p389, %s18, 1
        %s391 = smul.addr %s390, 2
        %s392 = scalar_lea.vmem %s3, %s391
      $region64: #{graph_dnn_forward.1} parent=47 // pred_fallthru
        _
    $region48: #{graph_dnn_forward.1} parent=5 // pred_fallthru
      _
    %p393 = scmp.le.s32.totalorder 1, %s18
    %p394 = scmp.lt.s32.totalorder %s18, 3
    %p395 = pnand %p393, %p394
    %p396 = pneg %p395
    // Predicated region
    $region65: #{graph_dnn_forward.1} parent=5 // pred_check
      _
    $region66: #{graph_dnn_forward.1} parent=5 // pred_check_branch
      %398 = sbr.rel (%p395) target = $region68
    $region67: #{graph_dnn_forward.1} parent=5 // pred_region
      %s399 = ssub.s32 %s18, 1
      %s400 = smul.u32 16, %s23
      %p401 = scmp.lt.s32.totalorder %s400, 31
      %s402 = scalar_select %p401, %s400, 31
      %s403 = smul.addr %s402, 8
      %s404 = scalar_lea.vmem %s0, %s403
      %p405 = pneg %p44
      %p406 = pneg %p41
      %s407 = smul.u32 32, %s23
      %p408 = scmp.lt.s32.totalorder %s407, 63
      %s409 = scalar_select %p408, %s407, 63
      %s410 = smul.addr %s409, 8
      %s411 = scalar_lea.vmem %s1, %s410
      %p412 = pneg %p70
      %p413 = pneg %p67
      %s414 = smul.u32 32, %s23
      %p415 = scmp.lt.s32.totalorder %s414, 63
      %s416 = scalar_select %p415, %s414, 63
      %s417 = smul.addr %s416, 8
      %s418 = scalar_lea.vmem %s2, %s417
      %p419 = pneg %p96
      %p420 = pneg %p93
      %p421 = scmp.lt.s32.totalorder %s23, 1
      %s422 = scalar_select %p421, %s23, 1
      %s423 = smul.addr %s422, 2
      %s424 = scalar_lea.vmem %s3, %s423
      %p425 = pneg %p122
      %p426 = pneg %p119
      %p427 = pneg %p143
      %p428 = pneg %p140
      %p429 = pneg %p164
      %p430 = pneg %p161
      %p431 = pneg %p185
      %p432 = pneg %p182
      %p433 = pneg %p206
      %p434 = pneg %p203
      %p435 = pneg %p227
      %p436 = pneg %p224
      %p437 = pneg %p248
      %p438 = pneg %p245
      %p439 = pneg %p269
      %p440 = pneg %p266
      %p441 = pneg %p290
      %p442 = pneg %p287
      %p443 = pneg %p316
      %p444 = pneg %p313
      %p445 = scmp.lt.s32.totalorder %s23, 1
      %s446 = scalar_select %p445, %s23, 1
      %s447 = smul.addr %s446, 8
      %s448 = scalar_lea.vmem %s12, %s447
      %s449 = smul.u32 16, %s23
      %p450 = scmp.lt.s32.totalorder %s449, 31
      %s451 = scalar_select %p450, %s449, 31
      %s452 = smul.addr %s451, 8
      %s453 = scalar_lea.vmem %s0, %s452
      %s454 = smul.u32 16, %s23
      %s455 = smul.u32 32, %s23
      %p456 = scmp.lt.s32.totalorder %s455, 63
      %s457 = scalar_select %p456, %s455, 63
      %s458 = smul.addr %s457, 8
      %s459 = scalar_lea.vmem %s1, %s458
      %s460 = smul.u32 32, %s23
      %s461 = smul.u32 32, %s23
      %p462 = scmp.lt.s32.totalorder %s461, 63
      %s463 = scalar_select %p462, %s461, 63
      %s464 = smul.addr %s463, 8
      %s465 = scalar_lea.vmem %s2, %s464
      %s466 = smul.u32 32, %s23
      %p467 = scmp.lt.s32.totalorder %s23, 1
      %s468 = scalar_select %p467, %s23, 1
      %s469 = smul.addr %s468, 2
      %s470 = scalar_lea.vmem %s3, %s469
      %p471 = scmp.lt.s32.totalorder %s23, 1
      %s472 = scalar_select %p471, %s23, 1
      %s473 = smul.addr %s472, 8
      %s474 = scalar_lea.vmem %s12, %s473
      %v475 = vld [vmem:[%s453] sm:$0xff]
      %v476 = vld [vmem:[%s453 + $0x8] sm:$0xff]
      %v477 = vld [vmem:[%s453 + $0x10] sm:$0xff]
      %v478 = vld [vmem:[%s453 + $0x18] sm:$0xff]
      %v479 = vld [vmem:[%s453 + $0x20] sm:$0xff]
      %v480 = vld [vmem:[%s453 + $0x28] sm:$0xff]
      %v481 = vld [vmem:[%s453 + $0x30] sm:$0xff]
      %v482 = vld [vmem:[%s453 + $0x38] sm:$0xff]
      %v483 = vld [vmem:[%s453 + $0x40] sm:$0xff]
      %v484 = vld [vmem:[%s453 + $0x48] sm:$0xff]
      %v485 = vld [vmem:[%s453 + $0x50] sm:$0xff]
      %v486 = vld [vmem:[%s453 + $0x58] sm:$0xff]
      %v487 = vld [vmem:[%s453 + $0x60] sm:$0xff]
      %v488 = vld [vmem:[%s453 + $0x68] sm:$0xff]
      %v489 = vld [vmem:[%s453 + $0x70] sm:$0xff]
      %v490 = vld [vmem:[%s453 + $0x78] sm:$0xff]
      %v491 = vlaneseq
      %v492 = vand.u32 %v491, 127
      %493 = vset.pattern.permute.xlu0 0
      %494 = vperm.xlu0 %493, %v475
      %v495 = vpop.permute.xlu0 %494
      %496 = vset.pattern.permute.xlu0 0
      %497 = vperm.xlu0 %496, %v476
      %v498 = vpop.permute.xlu0 %497
      %499 = vset.pattern.permute.xlu0 0
      %500 = vperm.xlu0 %499, %v477
      %v501 = vpop.permute.xlu0 %500
      %502 = vset.pattern.permute.xlu0 0
      %503 = vperm.xlu0 %502, %v478
      %v504 = vpop.permute.xlu0 %503
      %505 = vset.pattern.permute.xlu0 0
      %506 = vperm.xlu0 %505, %v479
      %v507 = vpop.permute.xlu0 %506
      %508 = vset.pattern.permute.xlu0 0
      %509 = vperm.xlu0 %508, %v480
      %v510 = vpop.permute.xlu0 %509
      %511 = vset.pattern.permute.xlu0 0
      %512 = vperm.xlu0 %511, %v481
      %v513 = vpop.permute.xlu0 %512
      %514 = vset.pattern.permute.xlu0 0
      %515 = vperm.xlu0 %514, %v482
      %v516 = vpop.permute.xlu0 %515
      %517 = vset.pattern.permute.xlu0 0
      %518 = vperm.xlu0 %517, %v483
      %v519 = vpop.permute.xlu0 %518
      %520 = vset.pattern.permute.xlu0 0
      %521 = vperm.xlu0 %520, %v484
      %v522 = vpop.permute.xlu0 %521
      %523 = vset.pattern.permute.xlu0 0
      %524 = vperm.xlu0 %523, %v485
      %v525 = vpop.permute.xlu0 %524
      %526 = vset.pattern.permute.xlu0 0
      %527 = vperm.xlu0 %526, %v486
      %v528 = vpop.permute.xlu0 %527
      %529 = vset.pattern.permute.xlu0 0
      %530 = vperm.xlu0 %529, %v487
      %v531 = vpop.permute.xlu0 %530
      %532 = vset.pattern.permute.xlu0 0
      %533 = vperm.xlu0 %532, %v488
      %v534 = vpop.permute.xlu0 %533
      %535 = vset.pattern.permute.xlu0 0
      %536 = vperm.xlu0 %535, %v489
      %v537 = vpop.permute.xlu0 %536
      %538 = vset.pattern.permute.xlu0 0
      %539 = vperm.xlu0 %538, %v490
      %v540 = vpop.permute.xlu0 %539
      %vm541 = vcmp.eq.s32.totalorder %v492, %v495
      %vm542 = vcmp.eq.s32.totalorder %v492, %v498
      %vm543 = vcmp.eq.s32.totalorder %v492, %v501
      %vm544 = vcmp.eq.s32.totalorder %v492, %v504
      %vm545 = vcmp.eq.s32.totalorder %v492, %v507
      %vm546 = vcmp.eq.s32.totalorder %v492, %v510
      %vm547 = vcmp.eq.s32.totalorder %v492, %v513
      %vm548 = vcmp.eq.s32.totalorder %v492, %v516
      %vm549 = vcmp.eq.s32.totalorder %v492, %v519
      %vm550 = vcmp.eq.s32.totalorder %v492, %v522
      %vm551 = vcmp.eq.s32.totalorder %v492, %v525
      %vm552 = vcmp.eq.s32.totalorder %v492, %v528
      %vm553 = vcmp.eq.s32.totalorder %v492, %v531
      %vm554 = vcmp.eq.s32.totalorder %v492, %v534
      %vm555 = vcmp.eq.s32.totalorder %v492, %v537
      %vm556 = vcmp.eq.s32.totalorder %v492, %v540
      %v557 = vsel %vm541, 1.0, 0.0
      %v558 = vsel %vm542, 1.0, 0.0
      %v559 = vsel %vm543, 1.0, 0.0
      %v560 = vsel %vm544, 1.0, 0.0
      %v561 = vsel %vm545, 1.0, 0.0
      %v562 = vsel %vm546, 1.0, 0.0
      %v563 = vsel %vm547, 1.0, 0.0
      %v564 = vsel %vm548, 1.0, 0.0
      %v565 = vsel %vm549, 1.0, 0.0
      %v566 = vsel %vm550, 1.0, 0.0
      %v567 = vsel %vm551, 1.0, 0.0
      %v568 = vsel %vm552, 1.0, 0.0
      %v569 = vsel %vm553, 1.0, 0.0
      %v570 = vsel %vm554, 1.0, 0.0
      %v571 = vsel %vm555, 1.0, 0.0
      %v572 = vsel %vm556, 1.0, 0.0
      %v573 = vadd.f32 %v557, 0.0
      %v574 = vadd.f32 %v558, 0.0
      %v575 = vadd.f32 %v559, 0.0
      %v576 = vadd.f32 %v560, 0.0
      %v577 = vadd.f32 %v561, 0.0
      %v578 = vadd.f32 %v562, 0.0
      %v579 = vadd.f32 %v563, 0.0
      %v580 = vadd.f32 %v564, 0.0
      %v581 = vadd.f32 %v565, 0.0
      %v582 = vadd.f32 %v566, 0.0
      %v583 = vadd.f32 %v567, 0.0
      %v584 = vadd.f32 %v568, 0.0
      %v585 = vadd.f32 %v569, 0.0
      %v586 = vadd.f32 %v570, 0.0
      %v587 = vadd.f32 %v571, 0.0
      %v588 = vadd.f32 %v572, 0.0
      %v589 = vadd.s32 %v475, 16
      %v590 = vadd.s32 %v476, 16
      %v591 = vadd.s32 %v477, 16
      %v592 = vadd.s32 %v478, 16
      %v593 = vadd.s32 %v479, 16
      %v594 = vadd.s32 %v480, 16
      %v595 = vadd.s32 %v481, 16
      %v596 = vadd.s32 %v482, 16
      %v597 = vadd.s32 %v483, 16
      %v598 = vadd.s32 %v484, 16
      %v599 = vadd.s32 %v485, 16
      %v600 = vadd.s32 %v486, 16
      %v601 = vadd.s32 %v487, 16
      %v602 = vadd.s32 %v488, 16
      %v603 = vadd.s32 %v489, 16
      %v604 = vadd.s32 %v490, 16
      %605 = vset.pattern.permute.xlu0 1
      %606 = vperm.xlu0 %605, %v589
      %v607 = vpop.permute.xlu0 %606
      %608 = vset.pattern.permute.xlu0 1
      %609 = vperm.xlu0 %608, %v590
      %v610 = vpop.permute.xlu0 %609
      %611 = vset.pattern.permute.xlu0 1
      %612 = vperm.xlu0 %611, %v591
      %v613 = vpop.permute.xlu0 %612
      %614 = vset.pattern.permute.xlu0 1
      %615 = vperm.xlu0 %614, %v592
      %v616 = vpop.permute.xlu0 %615
      %617 = vset.pattern.permute.xlu0 1
      %618 = vperm.xlu0 %617, %v593
      %v619 = vpop.permute.xlu0 %618
      %620 = vset.pattern.permute.xlu0 1
      %621 = vperm.xlu0 %620, %v594
      %v622 = vpop.permute.xlu0 %621
      %623 = vset.pattern.permute.xlu0 1
      %624 = vperm.xlu0 %623, %v595
      %v625 = vpop.permute.xlu0 %624
      %626 = vset.pattern.permute.xlu0 1
      %627 = vperm.xlu0 %626, %v596
      %v628 = vpop.permute.xlu0 %627
      %629 = vset.pattern.permute.xlu0 1
      %630 = vperm.xlu0 %629, %v597
      %v631 = vpop.permute.xlu0 %630
      %632 = vset.pattern.permute.xlu0 1
      %633 = vperm.xlu0 %632, %v598
      %v634 = vpop.permute.xlu0 %633
      %635 = vset.pattern.permute.xlu0 1
      %636 = vperm.xlu0 %635, %v599
      %v637 = vpop.permute.xlu0 %636
      %638 = vset.pattern.permute.xlu0 1
      %639 = vperm.xlu0 %638, %v600
      %v640 = vpop.permute.xlu0 %639
      %641 = vset.pattern.permute.xlu0 1
      %642 = vperm.xlu0 %641, %v601
      %v643 = vpop.permute.xlu0 %642
      %644 = vset.pattern.permute.xlu0 1
      %645 = vperm.xlu0 %644, %v602
      %v646 = vpop.permute.xlu0 %645
      %647 = vset.pattern.permute.xlu0 1
      %648 = vperm.xlu0 %647, %v603
      %v649 = vpop.permute.xlu0 %648
      %650 = vset.pattern.permute.xlu0 1
      %651 = vperm.xlu0 %650, %v604
      %v652 = vpop.permute.xlu0 %651
      %vm653 = vcmp.eq.s32.totalorder %v492, %v607
      %vm654 = vcmp.eq.s32.totalorder %v492, %v610
      %vm655 = vcmp.eq.s32.totalorder %v492, %v613
      %vm656 = vcmp.eq.s32.totalorder %v492, %v616
      %vm657 = vcmp.eq.s32.totalorder %v492, %v619
      %vm658 = vcmp.eq.s32.totalorder %v492, %v622
      %vm659 = vcmp.eq.s32.totalorder %v492, %v625
      %vm660 = vcmp.eq.s32.totalorder %v492, %v628
      %vm661 = vcmp.eq.s32.totalorder %v492, %v631
      %vm662 = vcmp.eq.s32.totalorder %v492, %v634
      %vm663 = vcmp.eq.s32.totalorder %v492, %v637
      %vm664 = vcmp.eq.s32.totalorder %v492, %v640
      %vm665 = vcmp.eq.s32.totalorder %v492, %v643
      %vm666 = vcmp.eq.s32.totalorder %v492, %v646
      %vm667 = vcmp.eq.s32.totalorder %v492, %v649
      %vm668 = vcmp.eq.s32.totalorder %v492, %v652
      %v669 = vsel %vm653, 1.0, 0.0
      %v670 = vsel %vm654, 1.0, 0.0
      %v671 = vsel %vm655, 1.0, 0.0
      %v672 = vsel %vm656, 1.0, 0.0
      %v673 = vsel %vm657, 1.0, 0.0
      %v674 = vsel %vm658, 1.0, 0.0
      %v675 = vsel %vm659, 1.0, 0.0
      %v676 = vsel %vm660, 1.0, 0.0
      %v677 = vsel %vm661, 1.0, 0.0
      %v678 = vsel %vm662, 1.0, 0.0
      %v679 = vsel %vm663, 1.0, 0.0
      %v680 = vsel %vm664, 1.0, 0.0
      %v681 = vsel %vm665, 1.0, 0.0
      %v682 = vsel %vm666, 1.0, 0.0
      %v683 = vsel %vm667, 1.0, 0.0
      %v684 = vsel %vm668, 1.0, 0.0
      %v685 = vadd.f32 %v573, %v669
      %v686 = vadd.f32 %v574, %v670
      %v687 = vadd.f32 %v575, %v671
      %v688 = vadd.f32 %v576, %v672
      %v689 = vadd.f32 %v577, %v673
      %v690 = vadd.f32 %v578, %v674
      %v691 = vadd.f32 %v579, %v675
      %v692 = vadd.f32 %v580, %v676
      %v693 = vadd.f32 %v581, %v677
      %v694 = vadd.f32 %v582, %v678
      %v695 = vadd.f32 %v583, %v679
      %v696 = vadd.f32 %v584, %v680
      %v697 = vadd.f32 %v585, %v681
      %v698 = vadd.f32 %v586, %v682
      %v699 = vadd.f32 %v587, %v683
      %v700 = vadd.f32 %v588, %v684
      %v701 = vadd.s32 %v475, 32
      %v702 = vadd.s32 %v476, 32
      %v703 = vadd.s32 %v477, 32
      %v704 = vadd.s32 %v478, 32
      %v705 = vadd.s32 %v479, 32
      %v706 = vadd.s32 %v480, 32
      %v707 = vadd.s32 %v481, 32
      %v708 = vadd.s32 %v482, 32
      %v709 = vadd.s32 %v483, 32
      %v710 = vadd.s32 %v484, 32
      %v711 = vadd.s32 %v485, 32
      %v712 = vadd.s32 %v486, 32
      %v713 = vadd.s32 %v487, 32
      %v714 = vadd.s32 %v488, 32
      %v715 = vadd.s32 %v489, 32
      %v716 = vadd.s32 %v490, 32
      %717 = vset.pattern.permute.xlu0 2
      %718 = vperm.xlu0 %717, %v701
      %v719 = vpop.permute.xlu0 %718
      %720 = vset.pattern.permute.xlu0 2
      %721 = vperm.xlu0 %720, %v702
      %v722 = vpop.permute.xlu0 %721
      %723 = vset.pattern.permute.xlu0 2
      %724 = vperm.xlu0 %723, %v703
      %v725 = vpop.permute.xlu0 %724
      %726 = vset.pattern.permute.xlu0 2
      %727 = vperm.xlu0 %726, %v704
      %v728 = vpop.permute.xlu0 %727
      %729 = vset.pattern.permute.xlu0 2
      %730 = vperm.xlu0 %729, %v705
      %v731 = vpop.permute.xlu0 %730
      %732 = vset.pattern.permute.xlu0 2
      %733 = vperm.xlu0 %732, %v706
      %v734 = vpop.permute.xlu0 %733
      %735 = vset.pattern.permute.xlu0 2
      %736 = vperm.xlu0 %735, %v707
      %v737 = vpop.permute.xlu0 %736
      %738 = vset.pattern.permute.xlu0 2
      %739 = vperm.xlu0 %738, %v708
      %v740 = vpop.permute.xlu0 %739
      %741 = vset.pattern.permute.xlu0 2
      %742 = vperm.xlu0 %741, %v709
      %v743 = vpop.permute.xlu0 %742
      %744 = vset.pattern.permute.xlu0 2
      %745 = vperm.xlu0 %744, %v710
      %v746 = vpop.permute.xlu0 %745
      %747 = vset.pattern.permute.xlu0 2
      %748 = vperm.xlu0 %747, %v711
      %v749 = vpop.permute.xlu0 %748
      %750 = vset.pattern.permute.xlu0 2
      %751 = vperm.xlu0 %750, %v712
      %v752 = vpop.permute.xlu0 %751
      %753 = vset.pattern.permute.xlu0 2
      %754 = vperm.xlu0 %753, %v713
      %v755 = vpop.permute.xlu0 %754
      %756 = vset.pattern.permute.xlu0 2
      %757 = vperm.xlu0 %756, %v714
      %v758 = vpop.permute.xlu0 %757
      %759 = vset.pattern.permute.xlu0 2
      %760 = vperm.xlu0 %759, %v715
      %v761 = vpop.permute.xlu0 %760
      %762 = vset.pattern.permute.xlu0 2
      %763 = vperm.xlu0 %762, %v716
      %v764 = vpop.permute.xlu0 %763
      %vm765 = vcmp.eq.s32.totalorder %v492, %v719
      %vm766 = vcmp.eq.s32.totalorder %v492, %v722
      %vm767 = vcmp.eq.s32.totalorder %v492, %v725
      %vm768 = vcmp.eq.s32.totalorder %v492, %v728
      %vm769 = vcmp.eq.s32.totalorder %v492, %v731
      %vm770 = vcmp.eq.s32.totalorder %v492, %v734
      %vm771 = vcmp.eq.s32.totalorder %v492, %v737
      %vm772 = vcmp.eq.s32.totalorder %v492, %v740
      %vm773 = vcmp.eq.s32.totalorder %v492, %v743
      %vm774 = vcmp.eq.s32.totalorder %v492, %v746
      %vm775 = vcmp.eq.s32.totalorder %v492, %v749
      %vm776 = vcmp.eq.s32.totalorder %v492, %v752
      %vm777 = vcmp.eq.s32.totalorder %v492, %v755
      %vm778 = vcmp.eq.s32.totalorder %v492, %v758
      %vm779 = vcmp.eq.s32.totalorder %v492, %v761
      %vm780 = vcmp.eq.s32.totalorder %v492, %v764
      %v781 = vsel %vm765, 1.0, 0.0
      %v782 = vsel %vm766, 1.0, 0.0
      %v783 = vsel %vm767, 1.0, 0.0
      %v784 = vsel %vm768, 1.0, 0.0
      %v785 = vsel %vm769, 1.0, 0.0
      %v786 = vsel %vm770, 1.0, 0.0
      %v787 = vsel %vm771, 1.0, 0.0
      %v788 = vsel %vm772, 1.0, 0.0
      %v789 = vsel %vm773, 1.0, 0.0
      %v790 = vsel %vm774, 1.0, 0.0
      %v791 = vsel %vm775, 1.0, 0.0
      %v792 = vsel %vm776, 1.0, 0.0
      %v793 = vsel %vm777, 1.0, 0.0
      %v794 = vsel %vm778, 1.0, 0.0
      %v795 = vsel %vm779, 1.0, 0.0
      %v796 = vsel %vm780, 1.0, 0.0
      %v797 = vadd.f32 %v685, %v781
      %v798 = vadd.f32 %v686, %v782
      %v799 = vadd.f32 %v687, %v783
      %v800 = vadd.f32 %v688, %v784
      %v801 = vadd.f32 %v689, %v785
      %v802 = vadd.f32 %v690, %v786
      %v803 = vadd.f32 %v691, %v787
      %v804 = vadd.f32 %v692, %v788
      %v805 = vadd.f32 %v693, %v789
      %v806 = vadd.f32 %v694, %v790
      %v807 = vadd.f32 %v695, %v791
      %v808 = vadd.f32 %v696, %v792
      %v809 = vadd.f32 %v697, %v793
      %v810 = vadd.f32 %v698, %v794
      %v811 = vadd.f32 %v699, %v795
      %v812 = vadd.f32 %v700, %v796
      %v813 = vpack.c.bf16 %v798, %v797
      %v814 = vpack.c.bf16 %v800, %v799
      %v815 = vpack.c.bf16 %v802, %v801
      %v816 = vpack.c.bf16 %v804, %v803
      %v817 = vpack.c.bf16 %v806, %v805
      %v818 = vpack.c.bf16 %v808, %v807
      %v819 = vpack.c.bf16 %v810, %v809
      %v820 = vpack.c.bf16 %v812, %v811
      %v821 = vld [vmem:[%s4] sm:$0xf]
      %v822 = vld [vmem:[%s4 + $0x4] sm:$0xf]
      %v823 = vld [vmem:[%s4 + $0x8] sm:$0xf]
      %v824 = vld [vmem:[%s4 + $0xc] sm:$0xf]
      %v825 = vld [vmem:[%s4 + $0x10] sm:$0xf]
      %v826 = vld [vmem:[%s4 + $0x14] sm:$0xf]
      %v827 = vld [vmem:[%s4 + $0x18] sm:$0xf]
      %v828 = vld [vmem:[%s4 + $0x1c] sm:$0xf]
      %v829 = vld [vmem:[%s4 + $0x20] sm:$0xf]
      %v830 = vld [vmem:[%s4 + $0x24] sm:$0xf]
      %v831 = vld [vmem:[%s4 + $0x28] sm:$0xf]
      %v832 = vld [vmem:[%s4 + $0x2c] sm:$0xf]
      %v833 = vld [vmem:[%s4 + $0x30] sm:$0xf]
      %v834 = vld [vmem:[%s4 + $0x34] sm:$0xf]
      %v835 = vld [vmem:[%s4 + $0x38] sm:$0xf]
      %v836 = vld [vmem:[%s4 + $0x3c] sm:$0xf]
      %v853 = vunpack.c.l.b16 %v821
      %v854 = vunpack.c.l.b16 %v822
      %v855 = vunpack.c.l.b16 %v823
      %v856 = vunpack.c.l.b16 %v824
      %v857 = vunpack.c.l.b16 %v825
      %v858 = vunpack.c.l.b16 %v826
      %v859 = vunpack.c.l.b16 %v827
      %v860 = vunpack.c.l.b16 %v828
      %v861 = vunpack.c.l.b16 %v829
      %v862 = vunpack.c.l.b16 %v830
      %v863 = vunpack.c.l.b16 %v831
      %v864 = vunpack.c.l.b16 %v832
      %v865 = vunpack.c.l.b16 %v833
      %v866 = vunpack.c.l.b16 %v834
      %v867 = vunpack.c.l.b16 %v835
      %v868 = vunpack.c.l.b16 %v836
      %v869 = vpack.c.b16 %v854, %v853
      %v870 = vpack.c.b16 %v856, %v855
      %v871 = vpack.c.b16 %v858, %v857
      %v872 = vpack.c.b16 %v860, %v859
      %v873 = vpack.c.b16 %v862, %v861
      %v874 = vpack.c.b16 %v864, %v863
      %v875 = vpack.c.b16 %v866, %v865
      %v876 = vpack.c.b16 %v868, %v867
      %885 = vmatpush.bf16.msra.mxu0 %v876
      %886 = vmatpush.bf16.msra.mxu0 %v875
      %887 = vmatpush.bf16.msra.mxu0 %v874
      %888 = vmatpush.bf16.msra.mxu0 %v873
      %889 = vmatpush.bf16.msra.mxu0 %v872
      %890 = vmatpush.bf16.msra.mxu0 %v871
      %891 = vmatpush.bf16.msra.mxu0 %v870
      %892 = vmatpush.bf16.msra.mxu0 %v869
      %893 = vmatmul.bf16.gmra.mxu0 %v813
      %v894 = vpop.f32.mrf.mxu0
      %v895 = vadd.f32 0.0, %v894
      %v896 = vpop.f32.mrf.mxu0
      %v897 = vadd.f32 0.0, %v896
      %898 = vmatmul.bf16.gmra.mxu0 %v814
      %v899 = vpop.f32.mrf.mxu0
      %v900 = vadd.f32 0.0, %v899
      %v901 = vpop.f32.mrf.mxu0
      %v902 = vadd.f32 0.0, %v901
      %903 = vmatmul.bf16.gmra.mxu0 %v815
      %v904 = vpop.f32.mrf.mxu0
      %v905 = vadd.f32 0.0, %v904
      %v906 = vpop.f32.mrf.mxu0
      %v907 = vadd.f32 0.0, %v906
      %908 = vmatmul.bf16.gmra.mxu0 %v816
      %v909 = vpop.f32.mrf.mxu0
      %v910 = vadd.f32 0.0, %v909
      %v911 = vpop.f32.mrf.mxu0
      %v912 = vadd.f32 0.0, %v911
      %913 = vmatmul.bf16.gmra.mxu0 %v817
      %v914 = vpop.f32.mrf.mxu0
      %v915 = vadd.f32 0.0, %v914
      %v916 = vpop.f32.mrf.mxu0
      %v917 = vadd.f32 0.0, %v916
      %918 = vmatmul.bf16.gmra.mxu0 %v818
      %v919 = vpop.f32.mrf.mxu0
      %v920 = vadd.f32 0.0, %v919
      %v921 = vpop.f32.mrf.mxu0
      %v922 = vadd.f32 0.0, %v921
      %923 = vmatmul.bf16.gmra.mxu0 %v819
      %v924 = vpop.f32.mrf.mxu0
      %v925 = vadd.f32 0.0, %v924
      %v926 = vpop.f32.mrf.mxu0
      %v927 = vadd.f32 0.0, %v926
      %928 = vmatmul.bf16.gmra.mxu0 %v820
      %v929 = vpop.f32.mrf.mxu0
      %v930 = vadd.f32 0.0, %v929
      %v931 = vpop.f32.mrf.mxu0
      %v932 = vadd.f32 0.0, %v931
      %933 = vdwg.mxu0
      %v934 = vld [vmem:[%s459] sm:$0xff]
      %v935 = vld [vmem:[%s459 + $0x8] sm:$0xff]
      %v936 = vld [vmem:[%s459 + $0x10] sm:$0xff]
      %v937 = vld [vmem:[%s459 + $0x18] sm:$0xff]
      %v938 = vld [vmem:[%s459 + $0x20] sm:$0xff]
      %v939 = vld [vmem:[%s459 + $0x28] sm:$0xff]
      %v940 = vld [vmem:[%s459 + $0x30] sm:$0xff]
      %v941 = vld [vmem:[%s459 + $0x38] sm:$0xff]
      %v942 = vld [vmem:[%s459 + $0x40] sm:$0xff]
      %v943 = vld [vmem:[%s459 + $0x48] sm:$0xff]
      %v944 = vld [vmem:[%s459 + $0x50] sm:$0xff]
      %v945 = vld [vmem:[%s459 + $0x58] sm:$0xff]
      %v946 = vld [vmem:[%s459 + $0x60] sm:$0xff]
      %v947 = vld [vmem:[%s459 + $0x68] sm:$0xff]
      %v948 = vld [vmem:[%s459 + $0x70] sm:$0xff]
      %v949 = vld [vmem:[%s459 + $0x78] sm:$0xff]
      %v950 = vld [vmem:[%s459 + $0x80] sm:$0xff]
      %v951 = vld [vmem:[%s459 + $0x88] sm:$0xff]
      %v952 = vld [vmem:[%s459 + $0x90] sm:$0xff]
      %v953 = vld [vmem:[%s459 + $0x98] sm:$0xff]
      %v954 = vld [vmem:[%s459 + $0xa0] sm:$0xff]
      %v955 = vld [vmem:[%s459 + $0xa8] sm:$0xff]
      %v956 = vld [vmem:[%s459 + $0xb0] sm:$0xff]
      %v957 = vld [vmem:[%s459 + $0xb8] sm:$0xff]
      %v958 = vld [vmem:[%s459 + $0xc0] sm:$0xff]
      %v959 = vld [vmem:[%s459 + $0xc8] sm:$0xff]
      %v960 = vld [vmem:[%s459 + $0xd0] sm:$0xff]
      %v961 = vld [vmem:[%s459 + $0xd8] sm:$0xff]
      %v962 = vld [vmem:[%s459 + $0xe0] sm:$0xff]
      %v963 = vld [vmem:[%s459 + $0xe8] sm:$0xff]
      %v964 = vld [vmem:[%s459 + $0xf0] sm:$0xff]
      %v965 = vld [vmem:[%s459 + $0xf8] sm:$0xff]
      %966 = vset.pattern.permute.xlu0 0
      %967 = vperm.xlu0 %966, %v934
      %v968 = vpop.permute.xlu0 %967
      %969 = vset.pattern.permute.xlu0 0
      %970 = vperm.xlu0 %969, %v935
      %v971 = vpop.permute.xlu0 %970
      %972 = vset.pattern.permute.xlu0 0
      %973 = vperm.xlu0 %972, %v936
      %v974 = vpop.permute.xlu0 %973
      %975 = vset.pattern.permute.xlu0 0
      %976 = vperm.xlu0 %975, %v937
      %v977 = vpop.permute.xlu0 %976
      %978 = vset.pattern.permute.xlu0 0
      %979 = vperm.xlu0 %978, %v938
      %v980 = vpop.permute.xlu0 %979
      %981 = vset.pattern.permute.xlu0 0
      %982 = vperm.xlu0 %981, %v939
      %v983 = vpop.permute.xlu0 %982
      %984 = vset.pattern.permute.xlu0 0
      %985 = vperm.xlu0 %984, %v940
      %v986 = vpop.permute.xlu0 %985
      %987 = vset.pattern.permute.xlu0 0
      %988 = vperm.xlu0 %987, %v941
      %v989 = vpop.permute.xlu0 %988
      %990 = vset.pattern.permute.xlu0 0
      %991 = vperm.xlu0 %990, %v942
      %v992 = vpop.permute.xlu0 %991
      %993 = vset.pattern.permute.xlu0 0
      %994 = vperm.xlu0 %993, %v943
      %v995 = vpop.permute.xlu0 %994
      %996 = vset.pattern.permute.xlu0 0
      %997 = vperm.xlu0 %996, %v944
      %v998 = vpop.permute.xlu0 %997
      %999 = vset.pattern.permute.xlu0 0
      %1000 = vperm.xlu0 %999, %v945
      %v1001 = vpop.permute.xlu0 %1000
      %1002 = vset.pattern.permute.xlu0 0
      %1003 = vperm.xlu0 %1002, %v946
      %v1004 = vpop.permute.xlu0 %1003
      %1005 = vset.pattern.permute.xlu0 0
      %1006 = vperm.xlu0 %1005, %v947
      %v1007 = vpop.permute.xlu0 %1006
      %1008 = vset.pattern.permute.xlu0 0
      %1009 = vperm.xlu0 %1008, %v948
      %v1010 = vpop.permute.xlu0 %1009
      %1011 = vset.pattern.permute.xlu0 0
      %1012 = vperm.xlu0 %1011, %v949
      %v1013 = vpop.permute.xlu0 %1012
      %1014 = vset.pattern.permute.xlu0 0
      %1015 = vperm.xlu0 %1014, %v950
      %v1016 = vpop.permute.xlu0 %1015
      %1017 = vset.pattern.permute.xlu0 0
      %1018 = vperm.xlu0 %1017, %v951
      %v1019 = vpop.permute.xlu0 %1018
      %1020 = vset.pattern.permute.xlu0 0
      %1021 = vperm.xlu0 %1020, %v952
      %v1022 = vpop.permute.xlu0 %1021
      %1023 = vset.pattern.permute.xlu0 0
      %1024 = vperm.xlu0 %1023, %v953
      %v1025 = vpop.permute.xlu0 %1024
      %1026 = vset.pattern.permute.xlu0 0
      %1027 = vperm.xlu0 %1026, %v954
      %v1028 = vpop.permute.xlu0 %1027
      %1029 = vset.pattern.permute.xlu0 0
      %1030 = vperm.xlu0 %1029, %v955
      %v1031 = vpop.permute.xlu0 %1030
      %1032 = vset.pattern.permute.xlu0 0
      %1033 = vperm.xlu0 %1032, %v956
      %v1034 = vpop.permute.xlu0 %1033
      %1035 = vset.pattern.permute.xlu0 0
      %1036 = vperm.xlu0 %1035, %v957
      %v1037 = vpop.permute.xlu0 %1036
      %1038 = vset.pattern.permute.xlu0 0
      %1039 = vperm.xlu0 %1038, %v958
      %v1040 = vpop.permute.xlu0 %1039
      %1041 = vset.pattern.permute.xlu0 0
      %1042 = vperm.xlu0 %1041, %v959
      %v1043 = vpop.permute.xlu0 %1042
      %1044 = vset.pattern.permute.xlu0 0
      %1045 = vperm.xlu0 %1044, %v960
      %v1046 = vpop.permute.xlu0 %1045
      %1047 = vset.pattern.permute.xlu0 0
      %1048 = vperm.xlu0 %1047, %v961
      %v1049 = vpop.permute.xlu0 %1048
      %1050 = vset.pattern.permute.xlu0 0
      %1051 = vperm.xlu0 %1050, %v962
      %v1052 = vpop.permute.xlu0 %1051
      %1053 = vset.pattern.permute.xlu0 0
      %1054 = vperm.xlu0 %1053, %v963
      %v1055 = vpop.permute.xlu0 %1054
      %1056 = vset.pattern.permute.xlu0 0
      %1057 = vperm.xlu0 %1056, %v964
      %v1058 = vpop.permute.xlu0 %1057
      %1059 = vset.pattern.permute.xlu0 0
      %1060 = vperm.xlu0 %1059, %v965
      %v1061 = vpop.permute.xlu0 %1060
      %vm1062 = vcmp.eq.s32.totalorder %v492, %v968
      %vm1063 = vcmp.eq.s32.totalorder %v492, %v971
      %vm1064 = vcmp.eq.s32.totalorder %v492, %v974
      %vm1065 = vcmp.eq.s32.totalorder %v492, %v977
      %vm1066 = vcmp.eq.s32.totalorder %v492, %v980
      %vm1067 = vcmp.eq.s32.totalorder %v492, %v983
      %vm1068 = vcmp.eq.s32.totalorder %v492, %v986
      %vm1069 = vcmp.eq.s32.totalorder %v492, %v989
      %vm1070 = vcmp.eq.s32.totalorder %v492, %v992
      %vm1071 = vcmp.eq.s32.totalorder %v492, %v995
      %vm1072 = vcmp.eq.s32.totalorder %v492, %v998
      %vm1073 = vcmp.eq.s32.totalorder %v492, %v1001
      %vm1074 = vcmp.eq.s32.totalorder %v492, %v1004
      %vm1075 = vcmp.eq.s32.totalorder %v492, %v1007
      %vm1076 = vcmp.eq.s32.totalorder %v492, %v1010
      %vm1077 = vcmp.eq.s32.totalorder %v492, %v1013
      %vm1078 = vcmp.eq.s32.totalorder %v492, %v1016
      %vm1079 = vcmp.eq.s32.totalorder %v492, %v1019
      %vm1080 = vcmp.eq.s32.totalorder %v492, %v1022
      %vm1081 = vcmp.eq.s32.totalorder %v492, %v1025
      %vm1082 = vcmp.eq.s32.totalorder %v492, %v1028
      %vm1083 = vcmp.eq.s32.totalorder %v492, %v1031
      %vm1084 = vcmp.eq.s32.totalorder %v492, %v1034
      %vm1085 = vcmp.eq.s32.totalorder %v492, %v1037
      %vm1086 = vcmp.eq.s32.totalorder %v492, %v1040
      %vm1087 = vcmp.eq.s32.totalorder %v492, %v1043
      %vm1088 = vcmp.eq.s32.totalorder %v492, %v1046
      %vm1089 = vcmp.eq.s32.totalorder %v492, %v1049
      %vm1090 = vcmp.eq.s32.totalorder %v492, %v1052
      %vm1091 = vcmp.eq.s32.totalorder %v492, %v1055
      %vm1092 = vcmp.eq.s32.totalorder %v492, %v1058
      %vm1093 = vcmp.eq.s32.totalorder %v492, %v1061
      %v1094 = vsel %vm1062, 1.0, 0.0
      %v1095 = vsel %vm1063, 1.0, 0.0
      %v1096 = vsel %vm1064, 1.0, 0.0
      %v1097 = vsel %vm1065, 1.0, 0.0
      %v1098 = vsel %vm1066, 1.0, 0.0
      %v1099 = vsel %vm1067, 1.0, 0.0
      %v1100 = vsel %vm1068, 1.0, 0.0
      %v1101 = vsel %vm1069, 1.0, 0.0
      %v1102 = vsel %vm1070, 1.0, 0.0
      %v1103 = vsel %vm1071, 1.0, 0.0
      %v1104 = vsel %vm1072, 1.0, 0.0
      %v1105 = vsel %vm1073, 1.0, 0.0
      %v1106 = vsel %vm1074, 1.0, 0.0
      %v1107 = vsel %vm1075, 1.0, 0.0
      %v1108 = vsel %vm1076, 1.0, 0.0
      %v1109 = vsel %vm1077, 1.0, 0.0
      %v1110 = vsel %vm1078, 1.0, 0.0
      %v1111 = vsel %vm1079, 1.0, 0.0
      %v1112 = vsel %vm1080, 1.0, 0.0
      %v1113 = vsel %vm1081, 1.0, 0.0
      %v1114 = vsel %vm1082, 1.0, 0.0
      %v1115 = vsel %vm1083, 1.0, 0.0
      %v1116 = vsel %vm1084, 1.0, 0.0
      %v1117 = vsel %vm1085, 1.0, 0.0
      %v1118 = vsel %vm1086, 1.0, 0.0
      %v1119 = vsel %vm1087, 1.0, 0.0
      %v1120 = vsel %vm1088, 1.0, 0.0
      %v1121 = vsel %vm1089, 1.0, 0.0
      %v1122 = vsel %vm1090, 1.0, 0.0
      %v1123 = vsel %vm1091, 1.0, 0.0
      %v1124 = vsel %vm1092, 1.0, 0.0
      %v1125 = vsel %vm1093, 1.0, 0.0
      %v1126 = vadd.f32 %v1094, 0.0
      %v1127 = vadd.f32 %v1095, 0.0
      %v1128 = vadd.f32 %v1096, 0.0
      %v1129 = vadd.f32 %v1097, 0.0
      %v1130 = vadd.f32 %v1098, 0.0
      %v1131 = vadd.f32 %v1099, 0.0
      %v1132 = vadd.f32 %v1100, 0.0
      %v1133 = vadd.f32 %v1101, 0.0
      %v1134 = vadd.f32 %v1102, 0.0
      %v1135 = vadd.f32 %v1103, 0.0
      %v1136 = vadd.f32 %v1104, 0.0
      %v1137 = vadd.f32 %v1105, 0.0
      %v1138 = vadd.f32 %v1106, 0.0
      %v1139 = vadd.f32 %v1107, 0.0
      %v1140 = vadd.f32 %v1108, 0.0
      %v1141 = vadd.f32 %v1109, 0.0
      %v1142 = vadd.f32 %v1110, 0.0
      %v1143 = vadd.f32 %v1111, 0.0
      %v1144 = vadd.f32 %v1112, 0.0
      %v1145 = vadd.f32 %v1113, 0.0
      %v1146 = vadd.f32 %v1114, 0.0
      %v1147 = vadd.f32 %v1115, 0.0
      %v1148 = vadd.f32 %v1116, 0.0
      %v1149 = vadd.f32 %v1117, 0.0
      %v1150 = vadd.f32 %v1118, 0.0
      %v1151 = vadd.f32 %v1119, 0.0
      %v1152 = vadd.f32 %v1120, 0.0
      %v1153 = vadd.f32 %v1121, 0.0
      %v1154 = vadd.f32 %v1122, 0.0
      %v1155 = vadd.f32 %v1123, 0.0
      %v1156 = vadd.f32 %v1124, 0.0
      %v1157 = vadd.f32 %v1125, 0.0
      %v1158 = vadd.s32 %v934, 8
      %v1159 = vadd.s32 %v935, 8
      %v1160 = vadd.s32 %v936, 8
      %v1161 = vadd.s32 %v937, 8
      %v1162 = vadd.s32 %v938, 8
      %v1163 = vadd.s32 %v939, 8
      %v1164 = vadd.s32 %v940, 8
      %v1165 = vadd.s32 %v941, 8
      %v1166 = vadd.s32 %v942, 8
      %v1167 = vadd.s32 %v943, 8
      %v1168 = vadd.s32 %v944, 8
      %v1169 = vadd.s32 %v945, 8
      %v1170 = vadd.s32 %v946, 8
      %v1171 = vadd.s32 %v947, 8
      %v1172 = vadd.s32 %v948, 8
      %v1173 = vadd.s32 %v949, 8
      %v1174 = vadd.s32 %v950, 8
      %v1175 = vadd.s32 %v951, 8
      %v1176 = vadd.s32 %v952, 8
      %v1177 = vadd.s32 %v953, 8
      %v1178 = vadd.s32 %v954, 8
      %v1179 = vadd.s32 %v955, 8
      %v1180 = vadd.s32 %v956, 8
      %v1181 = vadd.s32 %v957, 8
      %v1182 = vadd.s32 %v958, 8
      %v1183 = vadd.s32 %v959, 8
      %v1184 = vadd.s32 %v960, 8
      %v1185 = vadd.s32 %v961, 8
      %v1186 = vadd.s32 %v962, 8
      %v1187 = vadd.s32 %v963, 8
      %v1188 = vadd.s32 %v964, 8
      %v1189 = vadd.s32 %v965, 8
      %1190 = vset.pattern.permute.xlu0 1
      %1191 = vperm.xlu0 %1190, %v1158
      %v1192 = vpop.permute.xlu0 %1191
      %1193 = vset.pattern.permute.xlu0 1
      %1194 = vperm.xlu0 %1193, %v1159
      %v1195 = vpop.permute.xlu0 %1194
      %1196 = vset.pattern.permute.xlu0 1
      %1197 = vperm.xlu0 %1196, %v1160
      %v1198 = vpop.permute.xlu0 %1197
      %1199 = vset.pattern.permute.xlu0 1
      %1200 = vperm.xlu0 %1199, %v1161
      %v1201 = vpop.permute.xlu0 %1200
      %1202 = vset.pattern.permute.xlu0 1
      %1203 = vperm.xlu0 %1202, %v1162
      %v1204 = vpop.permute.xlu0 %1203
      %1205 = vset.pattern.permute.xlu0 1
      %1206 = vperm.xlu0 %1205, %v1163
      %v1207 = vpop.permute.xlu0 %1206
      %1208 = vset.pattern.permute.xlu0 1
      %1209 = vperm.xlu0 %1208, %v1164
      %v1210 = vpop.permute.xlu0 %1209
      %1211 = vset.pattern.permute.xlu0 1
      %1212 = vperm.xlu0 %1211, %v1165
      %v1213 = vpop.permute.xlu0 %1212
      %1214 = vset.pattern.permute.xlu0 1
      %1215 = vperm.xlu0 %1214, %v1166
      %v1216 = vpop.permute.xlu0 %1215
      %1217 = vset.pattern.permute.xlu0 1
      %1218 = vperm.xlu0 %1217, %v1167
      %v1219 = vpop.permute.xlu0 %1218
      %1220 = vset.pattern.permute.xlu0 1
      %1221 = vperm.xlu0 %1220, %v1168
      %v1222 = vpop.permute.xlu0 %1221
      %1223 = vset.pattern.permute.xlu0 1
      %1224 = vperm.xlu0 %1223, %v1169
      %v1225 = vpop.permute.xlu0 %1224
      %1226 = vset.pattern.permute.xlu0 1
      %1227 = vperm.xlu0 %1226, %v1170
      %v1228 = vpop.permute.xlu0 %1227
      %1229 = vset.pattern.permute.xlu0 1
      %1230 = vperm.xlu0 %1229, %v1171
      %v1231 = vpop.permute.xlu0 %1230
      %1232 = vset.pattern.permute.xlu0 1
      %1233 = vperm.xlu0 %1232, %v1172
      %v1234 = vpop.permute.xlu0 %1233
      %1235 = vset.pattern.permute.xlu0 1
      %1236 = vperm.xlu0 %1235, %v1173
      %v1237 = vpop.permute.xlu0 %1236
      %1238 = vset.pattern.permute.xlu0 1
      %1239 = vperm.xlu0 %1238, %v1174
      %v1240 = vpop.permute.xlu0 %1239
      %1241 = vset.pattern.permute.xlu0 1
      %1242 = vperm.xlu0 %1241, %v1175
      %v1243 = vpop.permute.xlu0 %1242
      %1244 = vset.pattern.permute.xlu0 1
      %1245 = vperm.xlu0 %1244, %v1176
      %v1246 = vpop.permute.xlu0 %1245
      %1247 = vset.pattern.permute.xlu0 1
      %1248 = vperm.xlu0 %1247, %v1177
      %v1249 = vpop.permute.xlu0 %1248
      %1250 = vset.pattern.permute.xlu0 1
      %1251 = vperm.xlu0 %1250, %v1178
      %v1252 = vpop.permute.xlu0 %1251
      %1253 = vset.pattern.permute.xlu0 1
      %1254 = vperm.xlu0 %1253, %v1179
      %v1255 = vpop.permute.xlu0 %1254
      %1256 = vset.pattern.permute.xlu0 1
      %1257 = vperm.xlu0 %1256, %v1180
      %v1258 = vpop.permute.xlu0 %1257
      %1259 = vset.pattern.permute.xlu0 1
      %1260 = vperm.xlu0 %1259, %v1181
      %v1261 = vpop.permute.xlu0 %1260
      %1262 = vset.pattern.permute.xlu0 1
      %1263 = vperm.xlu0 %1262, %v1182
      %v1264 = vpop.permute.xlu0 %1263
      %1265 = vset.pattern.permute.xlu0 1
      %1266 = vperm.xlu0 %1265, %v1183
      %v1267 = vpop.permute.xlu0 %1266
      %1268 = vset.pattern.permute.xlu0 1
      %1269 = vperm.xlu0 %1268, %v1184
      %v1270 = vpop.permute.xlu0 %1269
      %1271 = vset.pattern.permute.xlu0 1
      %1272 = vperm.xlu0 %1271, %v1185
      %v1273 = vpop.permute.xlu0 %1272
      %1274 = vset.pattern.permute.xlu0 1
      %1275 = vperm.xlu0 %1274, %v1186
      %v1276 = vpop.permute.xlu0 %1275
      %1277 = vset.pattern.permute.xlu0 1
      %1278 = vperm.xlu0 %1277, %v1187
      %v1279 = vpop.permute.xlu0 %1278
      %1280 = vset.pattern.permute.xlu0 1
      %1281 = vperm.xlu0 %1280, %v1188
      %v1282 = vpop.permute.xlu0 %1281
      %1283 = vset.pattern.permute.xlu0 1
      %1284 = vperm.xlu0 %1283, %v1189
      %v1285 = vpop.permute.xlu0 %1284
      %vm1286 = vcmp.eq.s32.totalorder %v492, %v1192
      %vm1287 = vcmp.eq.s32.totalorder %v492, %v1195
      %vm1288 = vcmp.eq.s32.totalorder %v492, %v1198
      %vm1289 = vcmp.eq.s32.totalorder %v492, %v1201
      %vm1290 = vcmp.eq.s32.totalorder %v492, %v1204
      %vm1291 = vcmp.eq.s32.totalorder %v492, %v1207
      %vm1292 = vcmp.eq.s32.totalorder %v492, %v1210
      %vm1293 = vcmp.eq.s32.totalorder %v492, %v1213
      %vm1294 = vcmp.eq.s32.totalorder %v492, %v1216
      %vm1295 = vcmp.eq.s32.totalorder %v492, %v1219
      %vm1296 = vcmp.eq.s32.totalorder %v492, %v1222
      %vm1297 = vcmp.eq.s32.totalorder %v492, %v1225
      %vm1298 = vcmp.eq.s32.totalorder %v492, %v1228
      %vm1299 = vcmp.eq.s32.totalorder %v492, %v1231
      %vm1300 = vcmp.eq.s32.totalorder %v492, %v1234
      %vm1301 = vcmp.eq.s32.totalorder %v492, %v1237
      %vm1302 = vcmp.eq.s32.totalorder %v492, %v1240
      %vm1303 = vcmp.eq.s32.totalorder %v492, %v1243
      %vm1304 = vcmp.eq.s32.totalorder %v492, %v1246
      %vm1305 = vcmp.eq.s32.totalorder %v492, %v1249
      %vm1306 = vcmp.eq.s32.totalorder %v492, %v1252
      %vm1307 = vcmp.eq.s32.totalorder %v492, %v1255
      %vm1308 = vcmp.eq.s32.totalorder %v492, %v1258
      %vm1309 = vcmp.eq.s32.totalorder %v492, %v1261
      %vm1310 = vcmp.eq.s32.totalorder %v492, %v1264
      %vm1311 = vcmp.eq.s32.totalorder %v492, %v1267
      %vm1312 = vcmp.eq.s32.totalorder %v492, %v1270
      %vm1313 = vcmp.eq.s32.totalorder %v492, %v1273
      %vm1314 = vcmp.eq.s32.totalorder %v492, %v1276
      %vm1315 = vcmp.eq.s32.totalorder %v492, %v1279
      %vm1316 = vcmp.eq.s32.totalorder %v492, %v1282
      %vm1317 = vcmp.eq.s32.totalorder %v492, %v1285
      %v1318 = vsel %vm1286, 1.0, 0.0
      %v1319 = vsel %vm1287, 1.0, 0.0
      %v1320 = vsel %vm1288, 1.0, 0.0
      %v1321 = vsel %vm1289, 1.0, 0.0
      %v1322 = vsel %vm1290, 1.0, 0.0
      %v1323 = vsel %vm1291, 1.0, 0.0
      %v1324 = vsel %vm1292, 1.0, 0.0
      %v1325 = vsel %vm1293, 1.0, 0.0
      %v1326 = vsel %vm1294, 1.0, 0.0
      %v1327 = vsel %vm1295, 1.0, 0.0
      %v1328 = vsel %vm1296, 1.0, 0.0
      %v1329 = vsel %vm1297, 1.0, 0.0
      %v1330 = vsel %vm1298, 1.0, 0.0
      %v1331 = vsel %vm1299, 1.0, 0.0
      %v1332 = vsel %vm1300, 1.0, 0.0
      %v1333 = vsel %vm1301, 1.0, 0.0
      %v1334 = vsel %vm1302, 1.0, 0.0
      %v1335 = vsel %vm1303, 1.0, 0.0
      %v1336 = vsel %vm1304, 1.0, 0.0
      %v1337 = vsel %vm1305, 1.0, 0.0
      %v1338 = vsel %vm1306, 1.0, 0.0
      %v1339 = vsel %vm1307, 1.0, 0.0
      %v1340 = vsel %vm1308, 1.0, 0.0
      %v1341 = vsel %vm1309, 1.0, 0.0
      %v1342 = vsel %vm1310, 1.0, 0.0
      %v1343 = vsel %vm1311, 1.0, 0.0
      %v1344 = vsel %vm1312, 1.0, 0.0
      %v1345 = vsel %vm1313, 1.0, 0.0
      %v1346 = vsel %vm1314, 1.0, 0.0
      %v1347 = vsel %vm1315, 1.0, 0.0
      %v1348 = vsel %vm1316, 1.0, 0.0
      %v1349 = vsel %vm1317, 1.0, 0.0
      %v1350 = vadd.f32 %v1126, %v1318
      %v1351 = vadd.f32 %v1127, %v1319
      %v1352 = vadd.f32 %v1128, %v1320
      %v1353 = vadd.f32 %v1129, %v1321
      %v1354 = vadd.f32 %v1130, %v1322
      %v1355 = vadd.f32 %v1131, %v1323
      %v1356 = vadd.f32 %v1132, %v1324
      %v1357 = vadd.f32 %v1133, %v1325
      %v1358 = vadd.f32 %v1134, %v1326
      %v1359 = vadd.f32 %v1135, %v1327
      %v1360 = vadd.f32 %v1136, %v1328
      %v1361 = vadd.f32 %v1137, %v1329
      %v1362 = vadd.f32 %v1138, %v1330
      %v1363 = vadd.f32 %v1139, %v1331
      %v1364 = vadd.f32 %v1140, %v1332
      %v1365 = vadd.f32 %v1141, %v1333
      %v1366 = vadd.f32 %v1142, %v1334
      %v1367 = vadd.f32 %v1143, %v1335
      %v1368 = vadd.f32 %v1144, %v1336
      %v1369 = vadd.f32 %v1145, %v1337
      %v1370 = vadd.f32 %v1146, %v1338
      %v1371 = vadd.f32 %v1147, %v1339
      %v1372 = vadd.f32 %v1148, %v1340
      %v1373 = vadd.f32 %v1149, %v1341
      %v1374 = vadd.f32 %v1150, %v1342
      %v1375 = vadd.f32 %v1151, %v1343
      %v1376 = vadd.f32 %v1152, %v1344
      %v1377 = vadd.f32 %v1153, %v1345
      %v1378 = vadd.f32 %v1154, %v1346
      %v1379 = vadd.f32 %v1155, %v1347
      %v1380 = vadd.f32 %v1156, %v1348
      %v1381 = vadd.f32 %v1157, %v1349
      %v1382 = vpack.c.bf16 %v1351, %v1350
      %v1383 = vpack.c.bf16 %v1353, %v1352
      %v1384 = vpack.c.bf16 %v1355, %v1354
      %v1385 = vpack.c.bf16 %v1357, %v1356
      %v1386 = vpack.c.bf16 %v1359, %v1358
      %v1387 = vpack.c.bf16 %v1361, %v1360
      %v1388 = vpack.c.bf16 %v1363, %v1362
      %v1389 = vpack.c.bf16 %v1365, %v1364
      %v1390 = vpack.c.bf16 %v1367, %v1366
      %v1391 = vpack.c.bf16 %v1369, %v1368
      %v1392 = vpack.c.bf16 %v1371, %v1370
      %v1393 = vpack.c.bf16 %v1373, %v1372
      %v1394 = vpack.c.bf16 %v1375, %v1374
      %v1395 = vpack.c.bf16 %v1377, %v1376
      %v1396 = vpack.c.bf16 %v1379, %v1378
      %v1397 = vpack.c.bf16 %v1381, %v1380
      %v1398 = vld [vmem:[%s5] sm:$0xf]
      %v1399 = vld [vmem:[%s5 + $0x4] sm:$0xf]
      %v1400 = vld [vmem:[%s5 + $0x8] sm:$0xf]
      %v1401 = vld [vmem:[%s5 + $0xc] sm:$0xf]
      %v1402 = vld [vmem:[%s5 + $0x10] sm:$0xf]
      %v1403 = vld [vmem:[%s5 + $0x14] sm:$0xf]
      %v1404 = vld [vmem:[%s5 + $0x18] sm:$0xf]
      %v1405 = vld [vmem:[%s5 + $0x1c] sm:$0xf]
      %v1406 = vld [vmem:[%s5 + $0x20] sm:$0xf]
      %v1407 = vld [vmem:[%s5 + $0x24] sm:$0xf]
      %v1408 = vld [vmem:[%s5 + $0x28] sm:$0xf]
      %v1409 = vld [vmem:[%s5 + $0x2c] sm:$0xf]
      %v1410 = vld [vmem:[%s5 + $0x30] sm:$0xf]
      %v1411 = vld [vmem:[%s5 + $0x34] sm:$0xf]
      %v1412 = vld [vmem:[%s5 + $0x38] sm:$0xf]
      %v1413 = vld [vmem:[%s5 + $0x3c] sm:$0xf]
      %v1430 = vunpack.c.l.b16 %v1398
      %v1431 = vunpack.c.l.b16 %v1399
      %v1432 = vunpack.c.l.b16 %v1400
      %v1433 = vunpack.c.l.b16 %v1401
      %v1434 = vunpack.c.l.b16 %v1402
      %v1435 = vunpack.c.l.b16 %v1403
      %v1436 = vunpack.c.l.b16 %v1404
      %v1437 = vunpack.c.l.b16 %v1405
      %v1438 = vunpack.c.l.b16 %v1406
      %v1439 = vunpack.c.l.b16 %v1407
      %v1440 = vunpack.c.l.b16 %v1408
      %v1441 = vunpack.c.l.b16 %v1409
      %v1442 = vunpack.c.l.b16 %v1410
      %v1443 = vunpack.c.l.b16 %v1411
      %v1444 = vunpack.c.l.b16 %v1412
      %v1445 = vunpack.c.l.b16 %v1413
      %v1446 = vpack.c.b16 %v1431, %v1430
      %v1447 = vpack.c.b16 %v1433, %v1432
      %v1448 = vpack.c.b16 %v1435, %v1434
      %v1449 = vpack.c.b16 %v1437, %v1436
      %v1450 = vpack.c.b16 %v1439, %v1438
      %v1451 = vpack.c.b16 %v1441, %v1440
      %v1452 = vpack.c.b16 %v1443, %v1442
      %v1453 = vpack.c.b16 %v1445, %v1444
      %1462 = vmatpush.bf16.msra.mxu0 %v1453
      %1463 = vmatpush.bf16.msra.mxu0 %v1452
      %1464 = vmatpush.bf16.msra.mxu0 %v1451
      %1465 = vmatpush.bf16.msra.mxu0 %v1450
      %1466 = vmatpush.bf16.msra.mxu0 %v1449
      %1467 = vmatpush.bf16.msra.mxu0 %v1448
      %1468 = vmatpush.bf16.msra.mxu0 %v1447
      %1469 = vmatpush.bf16.msra.mxu0 %v1446
      %1470 = vmatmul.bf16.gmra.mxu0 %v1382
      %v1471 = vpop.f32.mrf.mxu0
      %v1472 = vadd.f32 0.0, %v1471
      %v1473 = vpop.f32.mrf.mxu0
      %v1474 = vadd.f32 0.0, %v1473
      %1475 = vmatmul.bf16.gmra.mxu0 %v1383
      %v1476 = vpop.f32.mrf.mxu0
      %v1477 = vadd.f32 0.0, %v1476
      %v1478 = vpop.f32.mrf.mxu0
      %v1479 = vadd.f32 0.0, %v1478
      %1480 = vmatmul.bf16.gmra.mxu0 %v1384
      %v1481 = vpop.f32.mrf.mxu0
      %v1482 = vadd.f32 0.0, %v1481
      %v1483 = vpop.f32.mrf.mxu0
      %v1484 = vadd.f32 0.0, %v1483
      %1485 = vmatmul.bf16.gmra.mxu0 %v1385
      %v1486 = vpop.f32.mrf.mxu0
      %v1487 = vadd.f32 0.0, %v1486
      %v1488 = vpop.f32.mrf.mxu0
      %v1489 = vadd.f32 0.0, %v1488
      %1490 = vmatmul.bf16.gmra.mxu0 %v1386
      %v1491 = vpop.f32.mrf.mxu0
      %v1492 = vadd.f32 0.0, %v1491
      %v1493 = vpop.f32.mrf.mxu0
      %v1494 = vadd.f32 0.0, %v1493
      %1495 = vmatmul.bf16.gmra.mxu0 %v1387
      %v1496 = vpop.f32.mrf.mxu0
      %v1497 = vadd.f32 0.0, %v1496
      %v1498 = vpop.f32.mrf.mxu0
      %v1499 = vadd.f32 0.0, %v1498
      %1500 = vmatmul.bf16.gmra.mxu0 %v1388
      %v1501 = vpop.f32.mrf.mxu0
      %v1502 = vadd.f32 0.0, %v1501
      %v1503 = vpop.f32.mrf.mxu0
      %v1504 = vadd.f32 0.0, %v1503
      %1505 = vmatmul.bf16.gmra.mxu0 %v1389
      %v1506 = vpop.f32.mrf.mxu0
      %v1507 = vadd.f32 0.0, %v1506
      %v1508 = vpop.f32.mrf.mxu0
      %v1509 = vadd.f32 0.0, %v1508
      %1510 = vmatmul.bf16.gmra.mxu0 %v1390
      %v1511 = vpop.f32.mrf.mxu0
      %v1512 = vadd.f32 0.0, %v1511
      %v1513 = vpop.f32.mrf.mxu0
      %v1514 = vadd.f32 0.0, %v1513
      %1515 = vmatmul.bf16.gmra.mxu0 %v1391
      %v1516 = vpop.f32.mrf.mxu0
      %v1517 = vadd.f32 0.0, %v1516
      %v1518 = vpop.f32.mrf.mxu0
      %v1519 = vadd.f32 0.0, %v1518
      %1520 = vmatmul.bf16.gmra.mxu0 %v1392
      %v1521 = vpop.f32.mrf.mxu0
      %v1522 = vadd.f32 0.0, %v1521
      %v1523 = vpop.f32.mrf.mxu0
      %v1524 = vadd.f32 0.0, %v1523
      %1525 = vmatmul.bf16.gmra.mxu0 %v1393
      %v1526 = vpop.f32.mrf.mxu0
      %v1527 = vadd.f32 0.0, %v1526
      %v1528 = vpop.f32.mrf.mxu0
      %v1529 = vadd.f32 0.0, %v1528
      %1530 = vmatmul.bf16.gmra.mxu0 %v1394
      %v1531 = vpop.f32.mrf.mxu0
      %v1532 = vadd.f32 0.0, %v1531
      %v1533 = vpop.f32.mrf.mxu0
      %v1534 = vadd.f32 0.0, %v1533
      %1535 = vmatmul.bf16.gmra.mxu0 %v1395
      %v1536 = vpop.f32.mrf.mxu0
      %v1537 = vadd.f32 0.0, %v1536
      %v1538 = vpop.f32.mrf.mxu0
      %v1539 = vadd.f32 0.0, %v1538
      %1540 = vmatmul.bf16.gmra.mxu0 %v1396
      %v1541 = vpop.f32.mrf.mxu0
      %v1542 = vadd.f32 0.0, %v1541
      %v1543 = vpop.f32.mrf.mxu0
      %v1544 = vadd.f32 0.0, %v1543
      %1545 = vmatmul.bf16.gmra.mxu0 %v1397
      %v1546 = vpop.f32.mrf.mxu0
      %v1547 = vadd.f32 0.0, %v1546
      %v1548 = vpop.f32.mrf.mxu0
      %v1549 = vadd.f32 0.0, %v1548
      %1550 = vdwg.mxu0
      %v1551 = vld [vmem:[%s465] sm:$0xff]
      %v1552 = vld [vmem:[%s465 + $0x8] sm:$0xff]
      %v1553 = vld [vmem:[%s465 + $0x10] sm:$0xff]
      %v1554 = vld [vmem:[%s465 + $0x18] sm:$0xff]
      %v1555 = vld [vmem:[%s465 + $0x20] sm:$0xff]
      %v1556 = vld [vmem:[%s465 + $0x28] sm:$0xff]
      %v1557 = vld [vmem:[%s465 + $0x30] sm:$0xff]
      %v1558 = vld [vmem:[%s465 + $0x38] sm:$0xff]
      %v1559 = vld [vmem:[%s465 + $0x40] sm:$0xff]
      %v1560 = vld [vmem:[%s465 + $0x48] sm:$0xff]
      %v1561 = vld [vmem:[%s465 + $0x50] sm:$0xff]
      %v1562 = vld [vmem:[%s465 + $0x58] sm:$0xff]
      %v1563 = vld [vmem:[%s465 + $0x60] sm:$0xff]
      %v1564 = vld [vmem:[%s465 + $0x68] sm:$0xff]
      %v1565 = vld [vmem:[%s465 + $0x70] sm:$0xff]
      %v1566 = vld [vmem:[%s465 + $0x78] sm:$0xff]
      %v1567 = vld [vmem:[%s465 + $0x80] sm:$0xff]
      %v1568 = vld [vmem:[%s465 + $0x88] sm:$0xff]
      %v1569 = vld [vmem:[%s465 + $0x90] sm:$0xff]
      %v1570 = vld [vmem:[%s465 + $0x98] sm:$0xff]
      %v1571 = vld [vmem:[%s465 + $0xa0] sm:$0xff]
      %v1572 = vld [vmem:[%s465 + $0xa8] sm:$0xff]
      %v1573 = vld [vmem:[%s465 + $0xb0] sm:$0xff]
      %v1574 = vld [vmem:[%s465 + $0xb8] sm:$0xff]
      %v1575 = vld [vmem:[%s465 + $0xc0] sm:$0xff]
      %v1576 = vld [vmem:[%s465 + $0xc8] sm:$0xff]
      %v1577 = vld [vmem:[%s465 + $0xd0] sm:$0xff]
      %v1578 = vld [vmem:[%s465 + $0xd8] sm:$0xff]
      %v1579 = vld [vmem:[%s465 + $0xe0] sm:$0xff]
      %v1580 = vld [vmem:[%s465 + $0xe8] sm:$0xff]
      %v1581 = vld [vmem:[%s465 + $0xf0] sm:$0xff]
      %v1582 = vld [vmem:[%s465 + $0xf8] sm:$0xff]
      %1583 = vset.pattern.permute.xlu0 0
      %1584 = vperm.xlu0 %1583, %v1551
      %v1585 = vpop.permute.xlu0 %1584
      %1586 = vset.pattern.permute.xlu0 0
      %1587 = vperm.xlu0 %1586, %v1552
      %v1588 = vpop.permute.xlu0 %1587
      %1589 = vset.pattern.permute.xlu0 0
      %1590 = vperm.xlu0 %1589, %v1553
      %v1591 = vpop.permute.xlu0 %1590
      %1592 = vset.pattern.permute.xlu0 0
      %1593 = vperm.xlu0 %1592, %v1554
      %v1594 = vpop.permute.xlu0 %1593
      %1595 = vset.pattern.permute.xlu0 0
      %1596 = vperm.xlu0 %1595, %v1555
      %v1597 = vpop.permute.xlu0 %1596
      %1598 = vset.pattern.permute.xlu0 0
      %1599 = vperm.xlu0 %1598, %v1556
      %v1600 = vpop.permute.xlu0 %1599
      %1601 = vset.pattern.permute.xlu0 0
      %1602 = vperm.xlu0 %1601, %v1557
      %v1603 = vpop.permute.xlu0 %1602
      %1604 = vset.pattern.permute.xlu0 0
      %1605 = vperm.xlu0 %1604, %v1558
      %v1606 = vpop.permute.xlu0 %1605
      %1607 = vset.pattern.permute.xlu0 0
      %1608 = vperm.xlu0 %1607, %v1559
      %v1609 = vpop.permute.xlu0 %1608
      %1610 = vset.pattern.permute.xlu0 0
      %1611 = vperm.xlu0 %1610, %v1560
      %v1612 = vpop.permute.xlu0 %1611
      %1613 = vset.pattern.permute.xlu0 0
      %1614 = vperm.xlu0 %1613, %v1561
      %v1615 = vpop.permute.xlu0 %1614
      %1616 = vset.pattern.permute.xlu0 0
      %1617 = vperm.xlu0 %1616, %v1562
      %v1618 = vpop.permute.xlu0 %1617
      %1619 = vset.pattern.permute.xlu0 0
      %1620 = vperm.xlu0 %1619, %v1563
      %v1621 = vpop.permute.xlu0 %1620
      %1622 = vset.pattern.permute.xlu0 0
      %1623 = vperm.xlu0 %1622, %v1564
      %v1624 = vpop.permute.xlu0 %1623
      %1625 = vset.pattern.permute.xlu0 0
      %1626 = vperm.xlu0 %1625, %v1565
      %v1627 = vpop.permute.xlu0 %1626
      %1628 = vset.pattern.permute.xlu0 0
      %1629 = vperm.xlu0 %1628, %v1566
      %v1630 = vpop.permute.xlu0 %1629
      %1631 = vset.pattern.permute.xlu0 0
      %1632 = vperm.xlu0 %1631, %v1567
      %v1633 = vpop.permute.xlu0 %1632
      %1634 = vset.pattern.permute.xlu0 0
      %1635 = vperm.xlu0 %1634, %v1568
      %v1636 = vpop.permute.xlu0 %1635
      %1637 = vset.pattern.permute.xlu0 0
      %1638 = vperm.xlu0 %1637, %v1569
      %v1639 = vpop.permute.xlu0 %1638
      %1640 = vset.pattern.permute.xlu0 0
      %1641 = vperm.xlu0 %1640, %v1570
      %v1642 = vpop.permute.xlu0 %1641
      %1643 = vset.pattern.permute.xlu0 0
      %1644 = vperm.xlu0 %1643, %v1571
      %v1645 = vpop.permute.xlu0 %1644
      %1646 = vset.pattern.permute.xlu0 0
      %1647 = vperm.xlu0 %1646, %v1572
      %v1648 = vpop.permute.xlu0 %1647
      %1649 = vset.pattern.permute.xlu0 0
      %1650 = vperm.xlu0 %1649, %v1573
      %v1651 = vpop.permute.xlu0 %1650
      %1652 = vset.pattern.permute.xlu0 0
      %1653 = vperm.xlu0 %1652, %v1574
      %v1654 = vpop.permute.xlu0 %1653
      %1655 = vset.pattern.permute.xlu0 0
      %1656 = vperm.xlu0 %1655, %v1575
      %v1657 = vpop.permute.xlu0 %1656
      %1658 = vset.pattern.permute.xlu0 0
      %1659 = vperm.xlu0 %1658, %v1576
      %v1660 = vpop.permute.xlu0 %1659
      %1661 = vset.pattern.permute.xlu0 0
      %1662 = vperm.xlu0 %1661, %v1577
      %v1663 = vpop.permute.xlu0 %1662
      %1664 = vset.pattern.permute.xlu0 0
      %1665 = vperm.xlu0 %1664, %v1578
      %v1666 = vpop.permute.xlu0 %1665
      %1667 = vset.pattern.permute.xlu0 0
      %1668 = vperm.xlu0 %1667, %v1579
      %v1669 = vpop.permute.xlu0 %1668
      %1670 = vset.pattern.permute.xlu0 0
      %1671 = vperm.xlu0 %1670, %v1580
      %v1672 = vpop.permute.xlu0 %1671
      %1673 = vset.pattern.permute.xlu0 0
      %1674 = vperm.xlu0 %1673, %v1581
      %v1675 = vpop.permute.xlu0 %1674
      %1676 = vset.pattern.permute.xlu0 0
      %1677 = vperm.xlu0 %1676, %v1582
      %v1678 = vpop.permute.xlu0 %1677
      %vm1679 = vcmp.eq.s32.totalorder %v492, %v1585
      %vm1680 = vcmp.eq.s32.totalorder %v492, %v1588
      %vm1681 = vcmp.eq.s32.totalorder %v492, %v1591
      %vm1682 = vcmp.eq.s32.totalorder %v492, %v1594
      %vm1683 = vcmp.eq.s32.totalorder %v492, %v1597
      %vm1684 = vcmp.eq.s32.totalorder %v492, %v1600
      %vm1685 = vcmp.eq.s32.totalorder %v492, %v1603
      %vm1686 = vcmp.eq.s32.totalorder %v492, %v1606
      %vm1687 = vcmp.eq.s32.totalorder %v492, %v1609
      %vm1688 = vcmp.eq.s32.totalorder %v492, %v1612
      %vm1689 = vcmp.eq.s32.totalorder %v492, %v1615
      %vm1690 = vcmp.eq.s32.totalorder %v492, %v1618
      %vm1691 = vcmp.eq.s32.totalorder %v492, %v1621
      %vm1692 = vcmp.eq.s32.totalorder %v492, %v1624
      %vm1693 = vcmp.eq.s32.totalorder %v492, %v1627
      %vm1694 = vcmp.eq.s32.totalorder %v492, %v1630
      %vm1695 = vcmp.eq.s32.totalorder %v492, %v1633
      %vm1696 = vcmp.eq.s32.totalorder %v492, %v1636
      %vm1697 = vcmp.eq.s32.totalorder %v492, %v1639
      %vm1698 = vcmp.eq.s32.totalorder %v492, %v1642
      %vm1699 = vcmp.eq.s32.totalorder %v492, %v1645
      %vm1700 = vcmp.eq.s32.totalorder %v492, %v1648
      %vm1701 = vcmp.eq.s32.totalorder %v492, %v1651
      %vm1702 = vcmp.eq.s32.totalorder %v492, %v1654
      %vm1703 = vcmp.eq.s32.totalorder %v492, %v1657
      %vm1704 = vcmp.eq.s32.totalorder %v492, %v1660
      %vm1705 = vcmp.eq.s32.totalorder %v492, %v1663
      %vm1706 = vcmp.eq.s32.totalorder %v492, %v1666
      %vm1707 = vcmp.eq.s32.totalorder %v492, %v1669
      %vm1708 = vcmp.eq.s32.totalorder %v492, %v1672
      %vm1709 = vcmp.eq.s32.totalorder %v492, %v1675
      %vm1710 = vcmp.eq.s32.totalorder %v492, %v1678
      %v1711 = vsel %vm1679, 1.0, 0.0
      %v1712 = vsel %vm1680, 1.0, 0.0
      %v1713 = vsel %vm1681, 1.0, 0.0
      %v1714 = vsel %vm1682, 1.0, 0.0
      %v1715 = vsel %vm1683, 1.0, 0.0
      %v1716 = vsel %vm1684, 1.0, 0.0
      %v1717 = vsel %vm1685, 1.0, 0.0
      %v1718 = vsel %vm1686, 1.0, 0.0
      %v1719 = vsel %vm1687, 1.0, 0.0
      %v1720 = vsel %vm1688, 1.0, 0.0
      %v1721 = vsel %vm1689, 1.0, 0.0
      %v1722 = vsel %vm1690, 1.0, 0.0
      %v1723 = vsel %vm1691, 1.0, 0.0
      %v1724 = vsel %vm1692, 1.0, 0.0
      %v1725 = vsel %vm1693, 1.0, 0.0
      %v1726 = vsel %vm1694, 1.0, 0.0
      %v1727 = vsel %vm1695, 1.0, 0.0
      %v1728 = vsel %vm1696, 1.0, 0.0
      %v1729 = vsel %vm1697, 1.0, 0.0
      %v1730 = vsel %vm1698, 1.0, 0.0
      %v1731 = vsel %vm1699, 1.0, 0.0
      %v1732 = vsel %vm1700, 1.0, 0.0
      %v1733 = vsel %vm1701, 1.0, 0.0
      %v1734 = vsel %vm1702, 1.0, 0.0
      %v1735 = vsel %vm1703, 1.0, 0.0
      %v1736 = vsel %vm1704, 1.0, 0.0
      %v1737 = vsel %vm1705, 1.0, 0.0
      %v1738 = vsel %vm1706, 1.0, 0.0
      %v1739 = vsel %vm1707, 1.0, 0.0
      %v1740 = vsel %vm1708, 1.0, 0.0
      %v1741 = vsel %vm1709, 1.0, 0.0
      %v1742 = vsel %vm1710, 1.0, 0.0
      %v1743 = vpack.c.bf16 %v1712, %v1711
      %v1744 = vpack.c.bf16 %v1714, %v1713
      %v1745 = vpack.c.bf16 %v1716, %v1715
      %v1746 = vpack.c.bf16 %v1718, %v1717
      %v1747 = vpack.c.bf16 %v1720, %v1719
      %v1748 = vpack.c.bf16 %v1722, %v1721
      %v1749 = vpack.c.bf16 %v1724, %v1723
      %v1750 = vpack.c.bf16 %v1726, %v1725
      %v1751 = vpack.c.bf16 %v1728, %v1727
      %v1752 = vpack.c.bf16 %v1730, %v1729
      %v1753 = vpack.c.bf16 %v1732, %v1731
      %v1754 = vpack.c.bf16 %v1734, %v1733
      %v1755 = vpack.c.bf16 %v1736, %v1735
      %v1756 = vpack.c.bf16 %v1738, %v1737
      %v1757 = vpack.c.bf16 %v1740, %v1739
      %v1758 = vpack.c.bf16 %v1742, %v1741
      %v1759 = vlaneseq
      %v1760 = vshrl.u32 %v1759, 7
      %v1761 = vadd.s32 %v1760, 8
      %v1762 = vadd.s32 %v1760, 16
      %v1763 = vadd.s32 %v1760, 24
      %v1764 = vadd.s32 %v1760, 32
      %v1765 = vadd.s32 %v1760, 40
      %v1766 = vadd.s32 %v1760, 48
      %v1767 = vadd.s32 %v1760, 56
      %v1768 = vadd.s32 %v1760, 64
      %v1769 = vadd.s32 %v1760, 72
      %v1770 = vadd.s32 %v1760, 80
      %v1771 = vadd.s32 %v1760, 88
      %v1772 = vadd.s32 %v1760, 96
      %v1773 = vadd.s32 %v1760, 104
      %v1774 = vadd.s32 %v1760, 112
      %v1775 = vadd.s32 %v1760, 120
      %v1776 = vld [vmem:[%s470] sm:$0x3]
      %v1777 = vperm.slane %v1776, 0
      %v1778 = vperm.slane %v1776, 1
      %vm1779 = vcmp.eq.s32.totalorder %v1760, %v1777
      %vm1780 = vcmp.eq.s32.totalorder %v1760, %v1778
      %vm1781 = vcmp.eq.s32.totalorder %v1761, %v1777
      %vm1782 = vcmp.eq.s32.totalorder %v1761, %v1778
      %vm1783 = vcmp.eq.s32.totalorder %v1762, %v1777
      %vm1784 = vcmp.eq.s32.totalorder %v1762, %v1778
      %vm1785 = vcmp.eq.s32.totalorder %v1763, %v1777
      %vm1786 = vcmp.eq.s32.totalorder %v1763, %v1778
      %vm1787 = vcmp.eq.s32.totalorder %v1764, %v1777
      %vm1788 = vcmp.eq.s32.totalorder %v1764, %v1778
      %vm1789 = vcmp.eq.s32.totalorder %v1765, %v1777
      %vm1790 = vcmp.eq.s32.totalorder %v1765, %v1778
      %vm1791 = vcmp.eq.s32.totalorder %v1766, %v1777
      %vm1792 = vcmp.eq.s32.totalorder %v1766, %v1778
      %vm1793 = vcmp.eq.s32.totalorder %v1767, %v1777
      %vm1794 = vcmp.eq.s32.totalorder %v1767, %v1778
      %vm1795 = vcmp.eq.s32.totalorder %v1768, %v1777
      %vm1796 = vcmp.eq.s32.totalorder %v1768, %v1778
      %vm1797 = vcmp.eq.s32.totalorder %v1769, %v1777
      %vm1798 = vcmp.eq.s32.totalorder %v1769, %v1778
      %vm1799 = vcmp.eq.s32.totalorder %v1770, %v1777
      %vm1800 = vcmp.eq.s32.totalorder %v1770, %v1778
      %vm1801 = vcmp.eq.s32.totalorder %v1771, %v1777
      %vm1802 = vcmp.eq.s32.totalorder %v1771, %v1778
      %vm1803 = vcmp.eq.s32.totalorder %v1772, %v1777
      %vm1804 = vcmp.eq.s32.totalorder %v1772, %v1778
      %vm1805 = vcmp.eq.s32.totalorder %v1773, %v1777
      %vm1806 = vcmp.eq.s32.totalorder %v1773, %v1778
      %vm1807 = vcmp.eq.s32.totalorder %v1774, %v1777
      %vm1808 = vcmp.eq.s32.totalorder %v1774, %v1778
      %vm1809 = vcmp.eq.s32.totalorder %v1775, %v1777
      %vm1810 = vcmp.eq.s32.totalorder %v1775, %v1778
      %v1811 = vsel %vm1779, 1.0, 0.0
      %v1812 = vsel %vm1780, 1.0, 0.0
      %v1813 = vsel %vm1781, 1.0, 0.0
      %v1814 = vsel %vm1782, 1.0, 0.0
      %v1815 = vsel %vm1783, 1.0, 0.0
      %v1816 = vsel %vm1784, 1.0, 0.0
      %v1817 = vsel %vm1785, 1.0, 0.0
      %v1818 = vsel %vm1786, 1.0, 0.0
      %v1819 = vsel %vm1787, 1.0, 0.0
      %v1820 = vsel %vm1788, 1.0, 0.0
      %v1821 = vsel %vm1789, 1.0, 0.0
      %v1822 = vsel %vm1790, 1.0, 0.0
      %v1823 = vsel %vm1791, 1.0, 0.0
      %v1824 = vsel %vm1792, 1.0, 0.0
      %v1825 = vsel %vm1793, 1.0, 0.0
      %v1826 = vsel %vm1794, 1.0, 0.0
      %v1827 = vsel %vm1795, 1.0, 0.0
      %v1828 = vsel %vm1796, 1.0, 0.0
      %v1829 = vsel %vm1797, 1.0, 0.0
      %v1830 = vsel %vm1798, 1.0, 0.0
      %v1831 = vsel %vm1799, 1.0, 0.0
      %v1832 = vsel %vm1800, 1.0, 0.0
      %v1833 = vsel %vm1801, 1.0, 0.0
      %v1834 = vsel %vm1802, 1.0, 0.0
      %v1835 = vsel %vm1803, 1.0, 0.0
      %v1836 = vsel %vm1804, 1.0, 0.0
      %v1837 = vsel %vm1805, 1.0, 0.0
      %v1838 = vsel %vm1806, 1.0, 0.0
      %v1839 = vsel %vm1807, 1.0, 0.0
      %v1840 = vsel %vm1808, 1.0, 0.0
      %v1841 = vsel %vm1809, 1.0, 0.0
      %v1842 = vsel %vm1810, 1.0, 0.0
      %v1843 = vpack.c.bf16 %v1813, %v1811
      %v1844 = vpack.c.bf16 %v1814, %v1812
      %v1845 = vpack.c.bf16 %v1817, %v1815
      %v1846 = vpack.c.bf16 %v1818, %v1816
      %v1847 = vpack.c.bf16 %v1821, %v1819
      %v1848 = vpack.c.bf16 %v1822, %v1820
      %v1849 = vpack.c.bf16 %v1825, %v1823
      %v1850 = vpack.c.bf16 %v1826, %v1824
      %v1851 = vpack.c.bf16 %v1829, %v1827
      %v1852 = vpack.c.bf16 %v1830, %v1828
      %v1853 = vpack.c.bf16 %v1833, %v1831
      %v1854 = vpack.c.bf16 %v1834, %v1832
      %v1855 = vpack.c.bf16 %v1837, %v1835
      %v1856 = vpack.c.bf16 %v1838, %v1836
      %v1857 = vpack.c.bf16 %v1841, %v1839
      %v1858 = vpack.c.bf16 %v1842, %v1840
      %v1859 = vpack.c.bf16 %v895, %v895
      %v1860 = vpack.c.bf16 %v897, %v897
      %v1861 = vpack.c.bf16 %v900, %v900
      %v1862 = vpack.c.bf16 %v902, %v902
      %v1863 = vpack.c.bf16 %v905, %v905
      %v1864 = vpack.c.bf16 %v907, %v907
      %v1865 = vpack.c.bf16 %v910, %v910
      %v1866 = vpack.c.bf16 %v912, %v912
      %v1867 = vpack.c.bf16 %v915, %v915
      %v1868 = vpack.c.bf16 %v917, %v917
      %v1869 = vpack.c.bf16 %v920, %v920
      %v1870 = vpack.c.bf16 %v922, %v922
      %v1871 = vpack.c.bf16 %v925, %v925
      %v1872 = vpack.c.bf16 %v927, %v927
      %v1873 = vpack.c.bf16 %v930, %v930
      %v1874 = vpack.c.bf16 %v932, %v932
      %v1891 = vunpack.c.l.b16 %v1859
      %v1892 = vunpack.c.l.b16 %v1860
      %v1893 = vunpack.c.l.b16 %v1861
      %v1894 = vunpack.c.l.b16 %v1862
      %v1895 = vunpack.c.l.b16 %v1863
      %v1896 = vunpack.c.l.b16 %v1864
      %v1897 = vunpack.c.l.b16 %v1865
      %v1898 = vunpack.c.l.b16 %v1866
      %v1899 = vunpack.c.l.b16 %v1867
      %v1900 = vunpack.c.l.b16 %v1868
      %v1901 = vunpack.c.l.b16 %v1869
      %v1902 = vunpack.c.l.b16 %v1870
      %v1903 = vunpack.c.l.b16 %v1871
      %v1904 = vunpack.c.l.b16 %v1872
      %v1905 = vunpack.c.l.b16 %v1873
      %v1906 = vunpack.c.l.b16 %v1874
      %v1907 = vpack.c.b16 %v1892, %v1891
      %v1908 = vpack.c.b16 %v1894, %v1893
      %v1909 = vpack.c.b16 %v1896, %v1895
      %v1910 = vpack.c.b16 %v1898, %v1897
      %v1911 = vpack.c.b16 %v1900, %v1899
      %v1912 = vpack.c.b16 %v1902, %v1901
      %v1913 = vpack.c.b16 %v1904, %v1903
      %v1914 = vpack.c.b16 %v1906, %v1905
      %1923 = vmatpush.bf16.msra.mxu0 %v1914
      %1924 = vmatpush.bf16.msra.mxu0 %v1913
      %1925 = vmatpush.bf16.msra.mxu0 %v1912
      %1926 = vmatpush.bf16.msra.mxu0 %v1911
      %1927 = vmatpush.bf16.msra.mxu0 %v1910
      %1928 = vmatpush.bf16.msra.mxu0 %v1909
      %1929 = vmatpush.bf16.msra.mxu0 %v1908
      %1930 = vmatpush.bf16.msra.mxu0 %v1907
      %1931 = vmatmul.bf16.gmra.mxu0 %v1743
      %v1932 = vpop.f32.mrf.mxu0
      %v1933 = vadd.f32 %v1472, %v1932
      %v1934 = vpop.f32.mrf.mxu0
      %v1935 = vadd.f32 %v1474, %v1934
      %1936 = vmatmul.bf16.gmra.mxu0 %v1744
      %v1937 = vpop.f32.mrf.mxu0
      %v1938 = vadd.f32 %v1477, %v1937
      %v1939 = vpop.f32.mrf.mxu0
      %v1940 = vadd.f32 %v1479, %v1939
      %1941 = vmatmul.bf16.gmra.mxu0 %v1745
      %v1942 = vpop.f32.mrf.mxu0
      %v1943 = vadd.f32 %v1482, %v1942
      %v1944 = vpop.f32.mrf.mxu0
      %v1945 = vadd.f32 %v1484, %v1944
      %1946 = vmatmul.bf16.gmra.mxu0 %v1746
      %v1947 = vpop.f32.mrf.mxu0
      %v1948 = vadd.f32 %v1487, %v1947
      %v1949 = vpop.f32.mrf.mxu0
      %v1950 = vadd.f32 %v1489, %v1949
      %1951 = vmatmul.bf16.gmra.mxu0 %v1747
      %v1952 = vpop.f32.mrf.mxu0
      %v1953 = vadd.f32 %v1492, %v1952
      %v1954 = vpop.f32.mrf.mxu0
      %v1955 = vadd.f32 %v1494, %v1954
      %1956 = vmatmul.bf16.gmra.mxu0 %v1748
      %v1957 = vpop.f32.mrf.mxu0
      %v1958 = vadd.f32 %v1497, %v1957
      %v1959 = vpop.f32.mrf.mxu0
      %v1960 = vadd.f32 %v1499, %v1959
      %1961 = vmatmul.bf16.gmra.mxu0 %v1749
      %v1962 = vpop.f32.mrf.mxu0
      %v1963 = vadd.f32 %v1502, %v1962
      %v1964 = vpop.f32.mrf.mxu0
      %v1965 = vadd.f32 %v1504, %v1964
      %1966 = vmatmul.bf16.gmra.mxu0 %v1750
      %v1967 = vpop.f32.mrf.mxu0
      %v1968 = vadd.f32 %v1507, %v1967
      %v1969 = vpop.f32.mrf.mxu0
      %v1970 = vadd.f32 %v1509, %v1969
      %1971 = vmatmul.bf16.gmra.mxu0 %v1751
      %v1972 = vpop.f32.mrf.mxu0
      %v1973 = vadd.f32 %v1512, %v1972
      %v1974 = vpop.f32.mrf.mxu0
      %v1975 = vadd.f32 %v1514, %v1974
      %1976 = vmatmul.bf16.gmra.mxu0 %v1752
      %v1977 = vpop.f32.mrf.mxu0
      %v1978 = vadd.f32 %v1517, %v1977
      %v1979 = vpop.f32.mrf.mxu0
      %v1980 = vadd.f32 %v1519, %v1979
      %1981 = vmatmul.bf16.gmra.mxu0 %v1753
      %v1982 = vpop.f32.mrf.mxu0
      %v1983 = vadd.f32 %v1522, %v1982
      %v1984 = vpop.f32.mrf.mxu0
      %v1985 = vadd.f32 %v1524, %v1984
      %1986 = vmatmul.bf16.gmra.mxu0 %v1754
      %v1987 = vpop.f32.mrf.mxu0
      %v1988 = vadd.f32 %v1527, %v1987
      %v1989 = vpop.f32.mrf.mxu0
      %v1990 = vadd.f32 %v1529, %v1989
      %1991 = vmatmul.bf16.gmra.mxu0 %v1755
      %v1992 = vpop.f32.mrf.mxu0
      %v1993 = vadd.f32 %v1532, %v1992
      %v1994 = vpop.f32.mrf.mxu0
      %v1995 = vadd.f32 %v1534, %v1994
      %1996 = vmatmul.bf16.gmra.mxu0 %v1756
      %v1997 = vpop.f32.mrf.mxu0
      %v1998 = vadd.f32 %v1537, %v1997
      %v1999 = vpop.f32.mrf.mxu0
      %v2000 = vadd.f32 %v1539, %v1999
      %2001 = vmatmul.bf16.gmra.mxu0 %v1757
      %v2002 = vpop.f32.mrf.mxu0
      %v2003 = vadd.f32 %v1542, %v2002
      %v2004 = vpop.f32.mrf.mxu0
      %v2005 = vadd.f32 %v1544, %v2004
      %2006 = vmatmul.bf16.gmra.mxu0 %v1758
      %v2007 = vpop.f32.mrf.mxu0
      %v2008 = vadd.f32 %v1547, %v2007
      %v2009 = vpop.f32.mrf.mxu0
      %v2010 = vadd.f32 %v1549, %v2009
      %2011 = vdwg.mxu0
      %v2012 = vpack.c.bf16 %v1935, %v1933
      %v2013 = vpack.c.bf16 %v1940, %v1938
      %v2014 = vpack.c.bf16 %v1945, %v1943
      %v2015 = vpack.c.bf16 %v1950, %v1948
      %v2016 = vpack.c.bf16 %v1955, %v1953
      %v2017 = vpack.c.bf16 %v1960, %v1958
      %v2018 = vpack.c.bf16 %v1965, %v1963
      %v2019 = vpack.c.bf16 %v1970, %v1968
      %v2020 = vpack.c.bf16 %v1975, %v1973
      %v2021 = vpack.c.bf16 %v1980, %v1978
      %v2022 = vpack.c.bf16 %v1985, %v1983
      %v2023 = vpack.c.bf16 %v1990, %v1988
      %v2024 = vpack.c.bf16 %v1995, %v1993
      %v2025 = vpack.c.bf16 %v2000, %v1998
      %v2026 = vpack.c.bf16 %v2005, %v2003
      %v2027 = vpack.c.bf16 %v2010, %v2008
      %2028 = vmatpush.bf16.msra.mxu0 %v2019
      %2029 = vmatpush.bf16.msra.mxu0 %v2018
      %2030 = vmatpush.bf16.msra.mxu0 %v2017
      %2031 = vmatpush.bf16.msra.mxu0 %v2016
      %2032 = vmatpush.bf16.msra.mxu0 %v2015
      %2033 = vmatpush.bf16.msra.mxu0 %v2014
      %2034 = vmatpush.bf16.msra.mxu0 %v2013
      %2035 = vmatpush.bf16.msra.mxu0 %v2012
      %2036 = vmatmul.bf16.gmra.mxu0 %v1843
      %v2037 = vpop.f32.mrf.mxu0
      %v2038 = vadd.f32 0.0, %v2037
      %v2039 = vpop.f32.mrf.mxu0
      %v2040 = vadd.f32 0.0, %v2039
      %2041 = vmatmul.bf16.gmra.mxu0 %v1845
      %v2042 = vpop.f32.mrf.mxu0
      %v2043 = vadd.f32 0.0, %v2042
      %v2044 = vpop.f32.mrf.mxu0
      %v2045 = vadd.f32 0.0, %v2044
      %2046 = vmatmul.bf16.gmra.mxu0 %v1847
      %v2047 = vpop.f32.mrf.mxu0
      %v2048 = vadd.f32 0.0, %v2047
      %v2049 = vpop.f32.mrf.mxu0
      %v2050 = vadd.f32 0.0, %v2049
      %2051 = vmatmul.bf16.gmra.mxu0 %v1849
      %v2052 = vpop.f32.mrf.mxu0
      %v2053 = vadd.f32 0.0, %v2052
      %v2054 = vpop.f32.mrf.mxu0
      %v2055 = vadd.f32 0.0, %v2054
      %2056 = vmatmul.bf16.gmra.mxu0 %v1851
      %v2057 = vpop.f32.mrf.mxu0
      %v2058 = vadd.f32 0.0, %v2057
      %v2059 = vpop.f32.mrf.mxu0
      %v2060 = vadd.f32 0.0, %v2059
      %2061 = vmatmul.bf16.gmra.mxu0 %v1853
      %v2062 = vpop.f32.mrf.mxu0
      %v2063 = vadd.f32 0.0, %v2062
      %v2064 = vpop.f32.mrf.mxu0
      %v2065 = vadd.f32 0.0, %v2064
      %2066 = vmatmul.bf16.gmra.mxu0 %v1855
      %v2067 = vpop.f32.mrf.mxu0
      %v2068 = vadd.f32 0.0, %v2067
      %v2069 = vpop.f32.mrf.mxu0
      %v2070 = vadd.f32 0.0, %v2069
      %2071 = vmatmul.bf16.gmra.mxu0 %v1857
      %v2072 = vpop.f32.mrf.mxu0
      %v2073 = vadd.f32 0.0, %v2072
      %v2074 = vpop.f32.mrf.mxu0
      %v2075 = vadd.f32 0.0, %v2074
      %2076 = vdwg.mxu0
      %2077 = vmatpush.bf16.msra.mxu0 %v2027
      %2078 = vmatpush.bf16.msra.mxu0 %v2026
      %2079 = vmatpush.bf16.msra.mxu0 %v2025
      %2080 = vmatpush.bf16.msra.mxu0 %v2024
      %2081 = vmatpush.bf16.msra.mxu0 %v2023
      %2082 = vmatpush.bf16.msra.mxu0 %v2022
      %2083 = vmatpush.bf16.msra.mxu0 %v2021
      %2084 = vmatpush.bf16.msra.mxu0 %v2020
      %2085 = vmatmul.bf16.gmra.mxu0 %v1844
      %v2086 = vpop.f32.mrf.mxu0
      %v2087 = vadd.f32 %v2038, %v2086
      %v2088 = vpop.f32.mrf.mxu0
      %v2089 = vadd.f32 %v2040, %v2088
      %2090 = vmatmul.bf16.gmra.mxu0 %v1846
      %v2091 = vpop.f32.mrf.mxu0
      %v2092 = vadd.f32 %v2043, %v2091
      %v2093 = vpop.f32.mrf.mxu0
      %v2094 = vadd.f32 %v2045, %v2093
      %2095 = vmatmul.bf16.gmra.mxu0 %v1848
      %v2096 = vpop.f32.mrf.mxu0
      %v2097 = vadd.f32 %v2048, %v2096
      %v2098 = vpop.f32.mrf.mxu0
      %v2099 = vadd.f32 %v2050, %v2098
      %2100 = vmatmul.bf16.gmra.mxu0 %v1850
      %v2101 = vpop.f32.mrf.mxu0
      %v2102 = vadd.f32 %v2053, %v2101
      %v2103 = vpop.f32.mrf.mxu0
      %v2104 = vadd.f32 %v2055, %v2103
      %2105 = vmatmul.bf16.gmra.mxu0 %v1852
      %v2106 = vpop.f32.mrf.mxu0
      %v2107 = vadd.f32 %v2058, %v2106
      %v2108 = vpop.f32.mrf.mxu0
      %v2109 = vadd.f32 %v2060, %v2108
      %2110 = vmatmul.bf16.gmra.mxu0 %v1854
      %v2111 = vpop.f32.mrf.mxu0
      %v2112 = vadd.f32 %v2063, %v2111
      %v2113 = vpop.f32.mrf.mxu0
      %v2114 = vadd.f32 %v2065, %v2113
      %2115 = vmatmul.bf16.gmra.mxu0 %v1856
      %v2116 = vpop.f32.mrf.mxu0
      %v2117 = vadd.f32 %v2068, %v2116
      %v2118 = vpop.f32.mrf.mxu0
      %v2119 = vadd.f32 %v2070, %v2118
      %2120 = vmatmul.bf16.gmra.mxu0 %v1858
      %v2121 = vpop.f32.mrf.mxu0
      %v2122 = vadd.f32 %v2073, %v2121
      %v2123 = vpop.f32.mrf.mxu0
      %v2124 = vadd.f32 %v2075, %v2123
      %2125 = vdwg.mxu0
      %v2126 = vpack.c.bf16 %v2087, %v2087
      %v2127 = vpack.c.bf16 %v2089, %v2089
      %v2128 = vpack.c.bf16 %v2092, %v2092
      %v2129 = vpack.c.bf16 %v2094, %v2094
      %v2130 = vpack.c.bf16 %v2097, %v2097
      %v2131 = vpack.c.bf16 %v2099, %v2099
      %v2132 = vpack.c.bf16 %v2102, %v2102
      %v2133 = vpack.c.bf16 %v2104, %v2104
      %v2134 = vpack.c.bf16 %v2107, %v2107
      %v2135 = vpack.c.bf16 %v2109, %v2109
      %v2136 = vpack.c.bf16 %v2112, %v2112
      %v2137 = vpack.c.bf16 %v2114, %v2114
      %v2138 = vpack.c.bf16 %v2117, %v2117
      %v2139 = vpack.c.bf16 %v2119, %v2119
      %v2140 = vpack.c.bf16 %v2122, %v2122
      %v2141 = vpack.c.bf16 %v2124, %v2124
      %v2158 = vunpack.c.l.b16 %v2126
      %v2159 = vunpack.c.l.b16 %v2127
      %v2160 = vunpack.c.l.b16 %v2128
      %v2161 = vunpack.c.l.b16 %v2129
      %v2162 = vunpack.c.l.b16 %v2130
      %v2163 = vunpack.c.l.b16 %v2131
      %v2164 = vunpack.c.l.b16 %v2132
      %v2165 = vunpack.c.l.b16 %v2133
      %v2166 = vunpack.c.l.b16 %v2134
      %v2167 = vunpack.c.l.b16 %v2135
      %v2168 = vunpack.c.l.b16 %v2136
      %v2169 = vunpack.c.l.b16 %v2137
      %v2170 = vunpack.c.l.b16 %v2138
      %v2171 = vunpack.c.l.b16 %v2139
      %v2172 = vunpack.c.l.b16 %v2140
      %v2173 = vunpack.c.l.b16 %v2141
      %v2174 = vpack.c.b16 %v2159, %v2158
      %v2175 = vpack.c.b16 %v2161, %v2160
      %v2176 = vpack.c.b16 %v2163, %v2162
      %v2177 = vpack.c.b16 %v2165, %v2164
      %v2178 = vpack.c.b16 %v2167, %v2166
      %v2179 = vpack.c.b16 %v2169, %v2168
      %v2180 = vpack.c.b16 %v2171, %v2170
      %v2181 = vpack.c.b16 %v2173, %v2172
      %v2190 = vld [vmem:[%s6] sm:$0xf]
      %v2191 = vld [vmem:[%s6 + $0x4] sm:$0xf]
      %v2192 = vld [vmem:[%s6 + $0x8] sm:$0xf]
      %v2193 = vld [vmem:[%s6 + $0xc] sm:$0xf]
      %v2194 = vld [vmem:[%s6 + $0x10] sm:$0xf]
      %v2195 = vld [vmem:[%s6 + $0x14] sm:$0xf]
      %v2196 = vld [vmem:[%s6 + $0x18] sm:$0xf]
      %v2197 = vld [vmem:[%s6 + $0x1c] sm:$0xf]
      %v2198 = vld [vmem:[%s6 + $0x20] sm:$0xf]
      %v2199 = vld [vmem:[%s6 + $0x24] sm:$0xf]
      %v2200 = vld [vmem:[%s6 + $0x28] sm:$0xf]
      %v2201 = vld [vmem:[%s6 + $0x2c] sm:$0xf]
      %v2202 = vld [vmem:[%s6 + $0x30] sm:$0xf]
      %v2203 = vld [vmem:[%s6 + $0x34] sm:$0xf]
      %v2204 = vld [vmem:[%s6 + $0x38] sm:$0xf]
      %v2205 = vld [vmem:[%s6 + $0x3c] sm:$0xf]
      %v2206 = vld [vmem:[%s6 + $0x40] sm:$0xf]
      %v2207 = vld [vmem:[%s6 + $0x44] sm:$0xf]
      %v2208 = vld [vmem:[%s6 + $0x48] sm:$0xf]
      %v2209 = vld [vmem:[%s6 + $0x4c] sm:$0xf]
      %v2210 = vld [vmem:[%s6 + $0x50] sm:$0xf]
      %v2211 = vld [vmem:[%s6 + $0x54] sm:$0xf]
      %v2212 = vld [vmem:[%s6 + $0x58] sm:$0xf]
      %v2213 = vld [vmem:[%s6 + $0x5c] sm:$0xf]
      %v2214 = vld [vmem:[%s6 + $0x60] sm:$0xf]
      %v2215 = vld [vmem:[%s6 + $0x64] sm:$0xf]
      %v2216 = vld [vmem:[%s6 + $0x68] sm:$0xf]
      %v2217 = vld [vmem:[%s6 + $0x6c] sm:$0xf]
      %v2218 = vld [vmem:[%s6 + $0x70] sm:$0xf]
      %v2219 = vld [vmem:[%s6 + $0x74] sm:$0xf]
      %v2220 = vld [vmem:[%s6 + $0x78] sm:$0xf]
      %v2221 = vld [vmem:[%s6 + $0x7c] sm:$0xf]
      %v2222 = vld [vmem:[%s7] sm:$0x1]
      %v2224 = vperm.slane %v2222, 0
      %v2258 = vunpack.c.l.b16 %v2190
      %v2259 = vunpack.c.l.b16 %v2191
      %v2260 = vunpack.c.l.b16 %v2192
      %v2261 = vunpack.c.l.b16 %v2193
      %v2262 = vunpack.c.l.b16 %v2194
      %v2263 = vunpack.c.l.b16 %v2195
      %v2264 = vunpack.c.l.b16 %v2196
      %v2265 = vunpack.c.l.b16 %v2197
      %v2266 = vunpack.c.l.b16 %v2198
      %v2267 = vunpack.c.l.b16 %v2199
      %v2268 = vunpack.c.l.b16 %v2200
      %v2269 = vunpack.c.l.b16 %v2201
      %v2270 = vunpack.c.l.b16 %v2202
      %v2271 = vunpack.c.l.b16 %v2203
      %v2272 = vunpack.c.l.b16 %v2204
      %v2273 = vunpack.c.l.b16 %v2205
      %v2274 = vunpack.c.l.b16 %v2206
      %v2275 = vunpack.c.l.b16 %v2207
      %v2276 = vunpack.c.l.b16 %v2208
      %v2277 = vunpack.c.l.b16 %v2209
      %v2278 = vunpack.c.l.b16 %v2210
      %v2279 = vunpack.c.l.b16 %v2211
      %v2280 = vunpack.c.l.b16 %v2212
      %v2281 = vunpack.c.l.b16 %v2213
      %v2282 = vunpack.c.l.b16 %v2214
      %v2283 = vunpack.c.l.b16 %v2215
      %v2284 = vunpack.c.l.b16 %v2216
      %v2285 = vunpack.c.l.b16 %v2217
      %v2286 = vunpack.c.l.b16 %v2218
      %v2287 = vunpack.c.l.b16 %v2219
      %v2288 = vunpack.c.l.b16 %v2220
      %v2289 = vunpack.c.l.b16 %v2221
      %v2290 = vpack.c.b16 %v2259, %v2258
      %v2291 = vpack.c.b16 %v2261, %v2260
      %v2292 = vpack.c.b16 %v2263, %v2262
      %v2293 = vpack.c.b16 %v2265, %v2264
      %v2294 = vpack.c.b16 %v2267, %v2266
      %v2295 = vpack.c.b16 %v2269, %v2268
      %v2296 = vpack.c.b16 %v2271, %v2270
      %v2297 = vpack.c.b16 %v2273, %v2272
      %v2298 = vpack.c.b16 %v2275, %v2274
      %v2299 = vpack.c.b16 %v2277, %v2276
      %v2300 = vpack.c.b16 %v2279, %v2278
      %v2301 = vpack.c.b16 %v2281, %v2280
      %v2302 = vpack.c.b16 %v2283, %v2282
      %v2303 = vpack.c.b16 %v2285, %v2284
      %v2304 = vpack.c.b16 %v2287, %v2286
      %v2305 = vpack.c.b16 %v2289, %v2288
      %2322 = vmatpush.bf16.msra.mxu0 %v2297
      %2323 = vmatpush.bf16.msra.mxu0 %v2296
      %2324 = vmatpush.bf16.msra.mxu0 %v2295
      %2325 = vmatpush.bf16.msra.mxu0 %v2294
      %2326 = vmatpush.bf16.msra.mxu0 %v2293
      %2327 = vmatpush.bf16.msra.mxu0 %v2292
      %2328 = vmatpush.bf16.msra.mxu0 %v2291
      %2329 = vmatpush.bf16.msra.mxu0 %v2290
      %2330 = vmatmul.bf16.gmra.mxu0 %v1907
      %v2331 = vpop.f32.mrf.mxu0
      %v2332 = vadd.f32 %v2224, %v2331
      %v2333 = vpop.f32.mrf.mxu0
      %v2334 = vadd.f32 %v2224, %v2333
      %2335 = vmatmul.bf16.gmra.mxu0 %v1908
      %v2336 = vpop.f32.mrf.mxu0
      %v2337 = vadd.f32 %v2224, %v2336
      %v2338 = vpop.f32.mrf.mxu0
      %v2339 = vadd.f32 %v2224, %v2338
      %2340 = vmatmul.bf16.gmra.mxu0 %v1909
      %v2341 = vpop.f32.mrf.mxu0
      %v2342 = vadd.f32 %v2224, %v2341
      %v2343 = vpop.f32.mrf.mxu0
      %v2344 = vadd.f32 %v2224, %v2343
      %2345 = vmatmul.bf16.gmra.mxu0 %v1910
      %v2346 = vpop.f32.mrf.mxu0
      %v2347 = vadd.f32 %v2224, %v2346
      %v2348 = vpop.f32.mrf.mxu0
      %v2349 = vadd.f32 %v2224, %v2348
      %2350 = vmatmul.bf16.gmra.mxu0 %v1911
      %v2351 = vpop.f32.mrf.mxu0
      %v2352 = vadd.f32 %v2224, %v2351
      %v2353 = vpop.f32.mrf.mxu0
      %v2354 = vadd.f32 %v2224, %v2353
      %2355 = vmatmul.bf16.gmra.mxu0 %v1912
      %v2356 = vpop.f32.mrf.mxu0
      %v2357 = vadd.f32 %v2224, %v2356
      %v2358 = vpop.f32.mrf.mxu0
      %v2359 = vadd.f32 %v2224, %v2358
      %2360 = vmatmul.bf16.gmra.mxu0 %v1913
      %v2361 = vpop.f32.mrf.mxu0
      %v2362 = vadd.f32 %v2224, %v2361
      %v2363 = vpop.f32.mrf.mxu0
      %v2364 = vadd.f32 %v2224, %v2363
      %2365 = vmatmul.bf16.gmra.mxu0 %v1914
      %v2366 = vpop.f32.mrf.mxu0
      %v2367 = vadd.f32 %v2224, %v2366
      %v2368 = vpop.f32.mrf.mxu0
      %v2369 = vadd.f32 %v2224, %v2368
      %2370 = vdwg.mxu0
      %2371 = vmatpush.bf16.msra.mxu0 %v2305
      %2372 = vmatpush.bf16.msra.mxu0 %v2304
      %2373 = vmatpush.bf16.msra.mxu0 %v2303
      %2374 = vmatpush.bf16.msra.mxu0 %v2302
      %2375 = vmatpush.bf16.msra.mxu0 %v2301
      %2376 = vmatpush.bf16.msra.mxu0 %v2300
      %2377 = vmatpush.bf16.msra.mxu0 %v2299
      %2378 = vmatpush.bf16.msra.mxu0 %v2298
      %2379 = vmatmul.bf16.gmra.mxu0 %v2174
      %v2380 = vpop.f32.mrf.mxu0
      %v2381 = vadd.f32 %v2332, %v2380
      %v2382 = vpop.f32.mrf.mxu0
      %v2383 = vadd.f32 %v2334, %v2382
      %2384 = vmatmul.bf16.gmra.mxu0 %v2175
      %v2385 = vpop.f32.mrf.mxu0
      %v2386 = vadd.f32 %v2337, %v2385
      %v2387 = vpop.f32.mrf.mxu0
      %v2388 = vadd.f32 %v2339, %v2387
      %2389 = vmatmul.bf16.gmra.mxu0 %v2176
      %v2390 = vpop.f32.mrf.mxu0
      %v2391 = vadd.f32 %v2342, %v2390
      %v2392 = vpop.f32.mrf.mxu0
      %v2393 = vadd.f32 %v2344, %v2392
      %2394 = vmatmul.bf16.gmra.mxu0 %v2177
      %v2395 = vpop.f32.mrf.mxu0
      %v2396 = vadd.f32 %v2347, %v2395
      %v2397 = vpop.f32.mrf.mxu0
      %v2398 = vadd.f32 %v2349, %v2397
      %2399 = vmatmul.bf16.gmra.mxu0 %v2178
      %v2400 = vpop.f32.mrf.mxu0
      %v2401 = vadd.f32 %v2352, %v2400
      %v2402 = vpop.f32.mrf.mxu0
      %v2403 = vadd.f32 %v2354, %v2402
      %2404 = vmatmul.bf16.gmra.mxu0 %v2179
      %v2405 = vpop.f32.mrf.mxu0
      %v2406 = vadd.f32 %v2357, %v2405
      %v2407 = vpop.f32.mrf.mxu0
      %v2408 = vadd.f32 %v2359, %v2407
      %2409 = vmatmul.bf16.gmra.mxu0 %v2180
      %v2410 = vpop.f32.mrf.mxu0
      %v2411 = vadd.f32 %v2362, %v2410
      %v2412 = vpop.f32.mrf.mxu0
      %v2413 = vadd.f32 %v2364, %v2412
      %2414 = vmatmul.bf16.gmra.mxu0 %v2181
      %v2415 = vpop.f32.mrf.mxu0
      %v2416 = vadd.f32 %v2367, %v2415
      %v2417 = vpop.f32.mrf.mxu0
      %v2418 = vadd.f32 %v2369, %v2417
      %2419 = vdwg.mxu0
      %v2420 = vmax.f32 %v2381, 0.0
      %v2421 = vmax.f32 %v2383, 0.0
      %v2422 = vmax.f32 %v2386, 0.0
      %v2423 = vmax.f32 %v2388, 0.0
      %v2424 = vmax.f32 %v2391, 0.0
      %v2425 = vmax.f32 %v2393, 0.0
      %v2426 = vmax.f32 %v2396, 0.0
      %v2427 = vmax.f32 %v2398, 0.0
      %v2428 = vmax.f32 %v2401, 0.0
      %v2429 = vmax.f32 %v2403, 0.0
      %v2430 = vmax.f32 %v2406, 0.0
      %v2431 = vmax.f32 %v2408, 0.0
      %v2432 = vmax.f32 %v2411, 0.0
      %v2433 = vmax.f32 %v2413, 0.0
      %v2434 = vmax.f32 %v2416, 0.0
      %v2435 = vmax.f32 %v2418, 0.0
      %v2436 = vpack.c.bf16 %v2420, %v2420
      %v2437 = vpack.c.bf16 %v2421, %v2421
      %v2438 = vpack.c.bf16 %v2422, %v2422
      %v2439 = vpack.c.bf16 %v2423, %v2423
      %v2440 = vpack.c.bf16 %v2424, %v2424
      %v2441 = vpack.c.bf16 %v2425, %v2425
      %v2442 = vpack.c.bf16 %v2426, %v2426
      %v2443 = vpack.c.bf16 %v2427, %v2427
      %v2444 = vpack.c.bf16 %v2428, %v2428
      %v2445 = vpack.c.bf16 %v2429, %v2429
      %v2446 = vpack.c.bf16 %v2430, %v2430
      %v2447 = vpack.c.bf16 %v2431, %v2431
      %v2448 = vpack.c.bf16 %v2432, %v2432
      %v2449 = vpack.c.bf16 %v2433, %v2433
      %v2450 = vpack.c.bf16 %v2434, %v2434
      %v2451 = vpack.c.bf16 %v2435, %v2435
      %v2468 = vunpack.c.l.b16 %v2436
      %v2469 = vunpack.c.l.b16 %v2437
      %v2470 = vunpack.c.l.b16 %v2438
      %v2471 = vunpack.c.l.b16 %v2439
      %v2472 = vunpack.c.l.b16 %v2440
      %v2473 = vunpack.c.l.b16 %v2441
      %v2474 = vunpack.c.l.b16 %v2442
      %v2475 = vunpack.c.l.b16 %v2443
      %v2476 = vunpack.c.l.b16 %v2444
      %v2477 = vunpack.c.l.b16 %v2445
      %v2478 = vunpack.c.l.b16 %v2446
      %v2479 = vunpack.c.l.b16 %v2447
      %v2480 = vunpack.c.l.b16 %v2448
      %v2481 = vunpack.c.l.b16 %v2449
      %v2482 = vunpack.c.l.b16 %v2450
      %v2483 = vunpack.c.l.b16 %v2451
      %v2484 = vpack.c.b16 %v2469, %v2468
      %v2485 = vpack.c.b16 %v2471, %v2470
      %v2486 = vpack.c.b16 %v2473, %v2472
      %v2487 = vpack.c.b16 %v2475, %v2474
      %v2488 = vpack.c.b16 %v2477, %v2476
      %v2489 = vpack.c.b16 %v2479, %v2478
      %v2490 = vpack.c.b16 %v2481, %v2480
      %v2491 = vpack.c.b16 %v2483, %v2482
      %2500 = vmatpush.bf16.msra.mxu0 %v2491
      %2501 = vmatpush.bf16.msra.mxu0 %v2490
      %2502 = vmatpush.bf16.msra.mxu0 %v2489
      %2503 = vmatpush.bf16.msra.mxu0 %v2488
      %2504 = vmatpush.bf16.msra.mxu0 %v2487
      %2505 = vmatpush.bf16.msra.mxu0 %v2486
      %2506 = vmatpush.bf16.msra.mxu0 %v2485
      %2507 = vmatpush.bf16.msra.mxu0 %v2484
      %2508 = vmatmul.bf16.gmra.mxu0 %v1743
      %v2509 = vpop.f32.mrf.mxu0
      %v2510 = vadd.f32 %v1472, %v2509
      %v2511 = vpop.f32.mrf.mxu0
      %v2512 = vadd.f32 %v1474, %v2511
      %2513 = vmatmul.bf16.gmra.mxu0 %v1744
      %v2514 = vpop.f32.mrf.mxu0
      %v2515 = vadd.f32 %v1477, %v2514
      %v2516 = vpop.f32.mrf.mxu0
      %v2517 = vadd.f32 %v1479, %v2516
      %2518 = vmatmul.bf16.gmra.mxu0 %v1745
      %v2519 = vpop.f32.mrf.mxu0
      %v2520 = vadd.f32 %v1482, %v2519
      %v2521 = vpop.f32.mrf.mxu0
      %v2522 = vadd.f32 %v1484, %v2521
      %2523 = vmatmul.bf16.gmra.mxu0 %v1746
      %v2524 = vpop.f32.mrf.mxu0
      %v2525 = vadd.f32 %v1487, %v2524
      %v2526 = vpop.f32.mrf.mxu0
      %v2527 = vadd.f32 %v1489, %v2526
      %2528 = vmatmul.bf16.gmra.mxu0 %v1747
      %v2529 = vpop.f32.mrf.mxu0
      %v2530 = vadd.f32 %v1492, %v2529
      %v2531 = vpop.f32.mrf.mxu0
      %v2532 = vadd.f32 %v1494, %v2531
      %2533 = vmatmul.bf16.gmra.mxu0 %v1748
      %v2534 = vpop.f32.mrf.mxu0
      %v2535 = vadd.f32 %v1497, %v2534
      %v2536 = vpop.f32.mrf.mxu0
      %v2537 = vadd.f32 %v1499, %v2536
      %2538 = vmatmul.bf16.gmra.mxu0 %v1749
      %v2539 = vpop.f32.mrf.mxu0
      %v2540 = vadd.f32 %v1502, %v2539
      %v2541 = vpop.f32.mrf.mxu0
      %v2542 = vadd.f32 %v1504, %v2541
      %2543 = vmatmul.bf16.gmra.mxu0 %v1750
      %v2544 = vpop.f32.mrf.mxu0
      %v2545 = vadd.f32 %v1507, %v2544
      %v2546 = vpop.f32.mrf.mxu0
      %v2547 = vadd.f32 %v1509, %v2546
      %2548 = vmatmul.bf16.gmra.mxu0 %v1751
      %v2549 = vpop.f32.mrf.mxu0
      %v2550 = vadd.f32 %v1512, %v2549
      %v2551 = vpop.f32.mrf.mxu0
      %v2552 = vadd.f32 %v1514, %v2551
      %2553 = vmatmul.bf16.gmra.mxu0 %v1752
      %v2554 = vpop.f32.mrf.mxu0
      %v2555 = vadd.f32 %v1517, %v2554
      %v2556 = vpop.f32.mrf.mxu0
      %v2557 = vadd.f32 %v1519, %v2556
      %2558 = vmatmul.bf16.gmra.mxu0 %v1753
      %v2559 = vpop.f32.mrf.mxu0
      %v2560 = vadd.f32 %v1522, %v2559
      %v2561 = vpop.f32.mrf.mxu0
      %v2562 = vadd.f32 %v1524, %v2561
      %2563 = vmatmul.bf16.gmra.mxu0 %v1754
      %v2564 = vpop.f32.mrf.mxu0
      %v2565 = vadd.f32 %v1527, %v2564
      %v2566 = vpop.f32.mrf.mxu0
      %v2567 = vadd.f32 %v1529, %v2566
      %2568 = vmatmul.bf16.gmra.mxu0 %v1755
      %v2569 = vpop.f32.mrf.mxu0
      %v2570 = vadd.f32 %v1532, %v2569
      %v2571 = vpop.f32.mrf.mxu0
      %v2572 = vadd.f32 %v1534, %v2571
      %2573 = vmatmul.bf16.gmra.mxu0 %v1756
      %v2574 = vpop.f32.mrf.mxu0
      %v2575 = vadd.f32 %v1537, %v2574
      %v2576 = vpop.f32.mrf.mxu0
      %v2577 = vadd.f32 %v1539, %v2576
      %2578 = vmatmul.bf16.gmra.mxu0 %v1757
      %v2579 = vpop.f32.mrf.mxu0
      %v2580 = vadd.f32 %v1542, %v2579
      %v2581 = vpop.f32.mrf.mxu0
      %v2582 = vadd.f32 %v1544, %v2581
      %2583 = vmatmul.bf16.gmra.mxu0 %v1758
      %v2584 = vpop.f32.mrf.mxu0
      %v2585 = vadd.f32 %v1547, %v2584
      %v2586 = vpop.f32.mrf.mxu0
      %v2587 = vadd.f32 %v1549, %v2586
      %2588 = vdwg.mxu0
      %v2589 = vpack.c.bf16 %v2512, %v2510
      %v2590 = vpack.c.bf16 %v2517, %v2515
      %v2591 = vpack.c.bf16 %v2522, %v2520
      %v2592 = vpack.c.bf16 %v2527, %v2525
      %v2593 = vpack.c.bf16 %v2532, %v2530
      %v2594 = vpack.c.bf16 %v2537, %v2535
      %v2595 = vpack.c.bf16 %v2542, %v2540
      %v2596 = vpack.c.bf16 %v2547, %v2545
      %v2597 = vpack.c.bf16 %v2552, %v2550
      %v2598 = vpack.c.bf16 %v2557, %v2555
      %v2599 = vpack.c.bf16 %v2562, %v2560
      %v2600 = vpack.c.bf16 %v2567, %v2565
      %v2601 = vpack.c.bf16 %v2572, %v2570
      %v2602 = vpack.c.bf16 %v2577, %v2575
      %v2603 = vpack.c.bf16 %v2582, %v2580
      %v2604 = vpack.c.bf16 %v2587, %v2585
      %2605 = vmatpush.bf16.msra.mxu0 %v2596
      %2606 = vmatpush.bf16.msra.mxu0 %v2595
      %2607 = vmatpush.bf16.msra.mxu0 %v2594
      %2608 = vmatpush.bf16.msra.mxu0 %v2593
      %2609 = vmatpush.bf16.msra.mxu0 %v2592
      %2610 = vmatpush.bf16.msra.mxu0 %v2591
      %2611 = vmatpush.bf16.msra.mxu0 %v2590
      %2612 = vmatpush.bf16.msra.mxu0 %v2589
      %2613 = vmatmul.bf16.gmra.mxu0 %v1843
      %v2614 = vpop.f32.mrf.mxu0
      %v2615 = vadd.f32 0.0, %v2614
      %v2616 = vpop.f32.mrf.mxu0
      %v2617 = vadd.f32 0.0, %v2616
      %2618 = vmatmul.bf16.gmra.mxu0 %v1845
      %v2619 = vpop.f32.mrf.mxu0
      %v2620 = vadd.f32 0.0, %v2619
      %v2621 = vpop.f32.mrf.mxu0
      %v2622 = vadd.f32 0.0, %v2621
      %2623 = vmatmul.bf16.gmra.mxu0 %v1847
      %v2624 = vpop.f32.mrf.mxu0
      %v2625 = vadd.f32 0.0, %v2624
      %v2626 = vpop.f32.mrf.mxu0
      %v2627 = vadd.f32 0.0, %v2626
      %2628 = vmatmul.bf16.gmra.mxu0 %v1849
      %v2629 = vpop.f32.mrf.mxu0
      %v2630 = vadd.f32 0.0, %v2629
      %v2631 = vpop.f32.mrf.mxu0
      %v2632 = vadd.f32 0.0, %v2631
      %2633 = vmatmul.bf16.gmra.mxu0 %v1851
      %v2634 = vpop.f32.mrf.mxu0
      %v2635 = vadd.f32 0.0, %v2634
      %v2636 = vpop.f32.mrf.mxu0
      %v2637 = vadd.f32 0.0, %v2636
      %2638 = vmatmul.bf16.gmra.mxu0 %v1853
      %v2639 = vpop.f32.mrf.mxu0
      %v2640 = vadd.f32 0.0, %v2639
      %v2641 = vpop.f32.mrf.mxu0
      %v2642 = vadd.f32 0.0, %v2641
      %2643 = vmatmul.bf16.gmra.mxu0 %v1855
      %v2644 = vpop.f32.mrf.mxu0
      %v2645 = vadd.f32 0.0, %v2644
      %v2646 = vpop.f32.mrf.mxu0
      %v2647 = vadd.f32 0.0, %v2646
      %2648 = vmatmul.bf16.gmra.mxu0 %v1857
      %v2649 = vpop.f32.mrf.mxu0
      %v2650 = vadd.f32 0.0, %v2649
      %v2651 = vpop.f32.mrf.mxu0
      %v2652 = vadd.f32 0.0, %v2651
      %2653 = vdwg.mxu0
      %2654 = vmatpush.bf16.msra.mxu0 %v2604
      %2655 = vmatpush.bf16.msra.mxu0 %v2603
      %2656 = vmatpush.bf16.msra.mxu0 %v2602
      %2657 = vmatpush.bf16.msra.mxu0 %v2601
      %2658 = vmatpush.bf16.msra.mxu0 %v2600
      %2659 = vmatpush.bf16.msra.mxu0 %v2599
      %2660 = vmatpush.bf16.msra.mxu0 %v2598
      %2661 = vmatpush.bf16.msra.mxu0 %v2597
      %2662 = vmatmul.bf16.gmra.mxu0 %v1844
      %v2663 = vpop.f32.mrf.mxu0
      %v2664 = vadd.f32 %v2615, %v2663
      %v2665 = vpop.f32.mrf.mxu0
      %v2666 = vadd.f32 %v2617, %v2665
      %2667 = vmatmul.bf16.gmra.mxu0 %v1846
      %v2668 = vpop.f32.mrf.mxu0
      %v2669 = vadd.f32 %v2620, %v2668
      %v2670 = vpop.f32.mrf.mxu0
      %v2671 = vadd.f32 %v2622, %v2670
      %2672 = vmatmul.bf16.gmra.mxu0 %v1848
      %v2673 = vpop.f32.mrf.mxu0
      %v2674 = vadd.f32 %v2625, %v2673
      %v2675 = vpop.f32.mrf.mxu0
      %v2676 = vadd.f32 %v2627, %v2675
      %2677 = vmatmul.bf16.gmra.mxu0 %v1850
      %v2678 = vpop.f32.mrf.mxu0
      %v2679 = vadd.f32 %v2630, %v2678
      %v2680 = vpop.f32.mrf.mxu0
      %v2681 = vadd.f32 %v2632, %v2680
      %2682 = vmatmul.bf16.gmra.mxu0 %v1852
      %v2683 = vpop.f32.mrf.mxu0
      %v2684 = vadd.f32 %v2635, %v2683
      %v2685 = vpop.f32.mrf.mxu0
      %v2686 = vadd.f32 %v2637, %v2685
      %2687 = vmatmul.bf16.gmra.mxu0 %v1854
      %v2688 = vpop.f32.mrf.mxu0
      %v2689 = vadd.f32 %v2640, %v2688
      %v2690 = vpop.f32.mrf.mxu0
      %v2691 = vadd.f32 %v2642, %v2690
      %2692 = vmatmul.bf16.gmra.mxu0 %v1856
      %v2693 = vpop.f32.mrf.mxu0
      %v2694 = vadd.f32 %v2645, %v2693
      %v2695 = vpop.f32.mrf.mxu0
      %v2696 = vadd.f32 %v2647, %v2695
      %2697 = vmatmul.bf16.gmra.mxu0 %v1858
      %v2698 = vpop.f32.mrf.mxu0
      %v2699 = vadd.f32 %v2650, %v2698
      %v2700 = vpop.f32.mrf.mxu0
      %v2701 = vadd.f32 %v2652, %v2700
      %2702 = vdwg.mxu0
      %v2703 = vpack.c.bf16 %v2664, %v2664
      %v2704 = vpack.c.bf16 %v2666, %v2666
      %v2705 = vpack.c.bf16 %v2669, %v2669
      %v2706 = vpack.c.bf16 %v2671, %v2671
      %v2707 = vpack.c.bf16 %v2674, %v2674
      %v2708 = vpack.c.bf16 %v2676, %v2676
      %v2709 = vpack.c.bf16 %v2679, %v2679
      %v2710 = vpack.c.bf16 %v2681, %v2681
      %v2711 = vpack.c.bf16 %v2684, %v2684
      %v2712 = vpack.c.bf16 %v2686, %v2686
      %v2713 = vpack.c.bf16 %v2689, %v2689
      %v2714 = vpack.c.bf16 %v2691, %v2691
      %v2715 = vpack.c.bf16 %v2694, %v2694
      %v2716 = vpack.c.bf16 %v2696, %v2696
      %v2717 = vpack.c.bf16 %v2699, %v2699
      %v2718 = vpack.c.bf16 %v2701, %v2701
      %v2735 = vunpack.c.l.b16 %v2703
      %v2736 = vunpack.c.l.b16 %v2704
      %v2737 = vunpack.c.l.b16 %v2705
      %v2738 = vunpack.c.l.b16 %v2706
      %v2739 = vunpack.c.l.b16 %v2707
      %v2740 = vunpack.c.l.b16 %v2708
      %v2741 = vunpack.c.l.b16 %v2709
      %v2742 = vunpack.c.l.b16 %v2710
      %v2743 = vunpack.c.l.b16 %v2711
      %v2744 = vunpack.c.l.b16 %v2712
      %v2745 = vunpack.c.l.b16 %v2713
      %v2746 = vunpack.c.l.b16 %v2714
      %v2747 = vunpack.c.l.b16 %v2715
      %v2748 = vunpack.c.l.b16 %v2716
      %v2749 = vunpack.c.l.b16 %v2717
      %v2750 = vunpack.c.l.b16 %v2718
      %v2751 = vpack.c.b16 %v2736, %v2735
      %v2752 = vpack.c.b16 %v2738, %v2737
      %v2753 = vpack.c.b16 %v2740, %v2739
      %v2754 = vpack.c.b16 %v2742, %v2741
      %v2755 = vpack.c.b16 %v2744, %v2743
      %v2756 = vpack.c.b16 %v2746, %v2745
      %v2757 = vpack.c.b16 %v2748, %v2747
      %v2758 = vpack.c.b16 %v2750, %v2749
      %s2767 = scalar_lea.vmem %s6, 128
      %v2768 = vld [vmem:[%s2767] sm:$0xf]
      %v2769 = vld [vmem:[%s2767 + $0x4] sm:$0xf]
      %v2770 = vld [vmem:[%s2767 + $0x8] sm:$0xf]
      %v2771 = vld [vmem:[%s2767 + $0xc] sm:$0xf]
      %v2772 = vld [vmem:[%s2767 + $0x10] sm:$0xf]
      %v2773 = vld [vmem:[%s2767 + $0x14] sm:$0xf]
      %v2774 = vld [vmem:[%s2767 + $0x18] sm:$0xf]
      %v2775 = vld [vmem:[%s2767 + $0x1c] sm:$0xf]
      %v2776 = vld [vmem:[%s2767 + $0x20] sm:$0xf]
      %v2777 = vld [vmem:[%s2767 + $0x24] sm:$0xf]
      %v2778 = vld [vmem:[%s2767 + $0x28] sm:$0xf]
      %v2779 = vld [vmem:[%s2767 + $0x2c] sm:$0xf]
      %v2780 = vld [vmem:[%s2767 + $0x30] sm:$0xf]
      %v2781 = vld [vmem:[%s2767 + $0x34] sm:$0xf]
      %v2782 = vld [vmem:[%s2767 + $0x38] sm:$0xf]
      %v2783 = vld [vmem:[%s2767 + $0x3c] sm:$0xf]
      %v2784 = vld [vmem:[%s2767 + $0x40] sm:$0xf]
      %v2785 = vld [vmem:[%s2767 + $0x44] sm:$0xf]
      %v2786 = vld [vmem:[%s2767 + $0x48] sm:$0xf]
      %v2787 = vld [vmem:[%s2767 + $0x4c] sm:$0xf]
      %v2788 = vld [vmem:[%s2767 + $0x50] sm:$0xf]
      %v2789 = vld [vmem:[%s2767 + $0x54] sm:$0xf]
      %v2790 = vld [vmem:[%s2767 + $0x58] sm:$0xf]
      %v2791 = vld [vmem:[%s2767 + $0x5c] sm:$0xf]
      %v2792 = vld [vmem:[%s2767 + $0x60] sm:$0xf]
      %v2793 = vld [vmem:[%s2767 + $0x64] sm:$0xf]
      %v2794 = vld [vmem:[%s2767 + $0x68] sm:$0xf]
      %v2795 = vld [vmem:[%s2767 + $0x6c] sm:$0xf]
      %v2796 = vld [vmem:[%s2767 + $0x70] sm:$0xf]
      %v2797 = vld [vmem:[%s2767 + $0x74] sm:$0xf]
      %v2798 = vld [vmem:[%s2767 + $0x78] sm:$0xf]
      %v2799 = vld [vmem:[%s2767 + $0x7c] sm:$0xf]
      %s2800 = scalar_lea.vmem %s7, 1
      %v2801 = vld [vmem:[%s2800] sm:$0x1]
      %v2803 = vperm.slane %v2801, 0
      %v2837 = vunpack.c.l.b16 %v2768
      %v2838 = vunpack.c.l.b16 %v2769
      %v2839 = vunpack.c.l.b16 %v2770
      %v2840 = vunpack.c.l.b16 %v2771
      %v2841 = vunpack.c.l.b16 %v2772
      %v2842 = vunpack.c.l.b16 %v2773
      %v2843 = vunpack.c.l.b16 %v2774
      %v2844 = vunpack.c.l.b16 %v2775
      %v2845 = vunpack.c.l.b16 %v2776
      %v2846 = vunpack.c.l.b16 %v2777
      %v2847 = vunpack.c.l.b16 %v2778
      %v2848 = vunpack.c.l.b16 %v2779
      %v2849 = vunpack.c.l.b16 %v2780
      %v2850 = vunpack.c.l.b16 %v2781
      %v2851 = vunpack.c.l.b16 %v2782
      %v2852 = vunpack.c.l.b16 %v2783
      %v2853 = vunpack.c.l.b16 %v2784
      %v2854 = vunpack.c.l.b16 %v2785
      %v2855 = vunpack.c.l.b16 %v2786
      %v2856 = vunpack.c.l.b16 %v2787
      %v2857 = vunpack.c.l.b16 %v2788
      %v2858 = vunpack.c.l.b16 %v2789
      %v2859 = vunpack.c.l.b16 %v2790
      %v2860 = vunpack.c.l.b16 %v2791
      %v2861 = vunpack.c.l.b16 %v2792
      %v2862 = vunpack.c.l.b16 %v2793
      %v2863 = vunpack.c.l.b16 %v2794
      %v2864 = vunpack.c.l.b16 %v2795
      %v2865 = vunpack.c.l.b16 %v2796
      %v2866 = vunpack.c.l.b16 %v2797
      %v2867 = vunpack.c.l.b16 %v2798
      %v2868 = vunpack.c.l.b16 %v2799
      %v2869 = vpack.c.b16 %v2838, %v2837
      %v2870 = vpack.c.b16 %v2840, %v2839
      %v2871 = vpack.c.b16 %v2842, %v2841
      %v2872 = vpack.c.b16 %v2844, %v2843
      %v2873 = vpack.c.b16 %v2846, %v2845
      %v2874 = vpack.c.b16 %v2848, %v2847
      %v2875 = vpack.c.b16 %v2850, %v2849
      %v2876 = vpack.c.b16 %v2852, %v2851
      %v2877 = vpack.c.b16 %v2854, %v2853
      %v2878 = vpack.c.b16 %v2856, %v2855
      %v2879 = vpack.c.b16 %v2858, %v2857
      %v2880 = vpack.c.b16 %v2860, %v2859
      %v2881 = vpack.c.b16 %v2862, %v2861
      %v2882 = vpack.c.b16 %v2864, %v2863
      %v2883 = vpack.c.b16 %v2866, %v2865
      %v2884 = vpack.c.b16 %v2868, %v2867
      %2901 = vmatpush.bf16.msra.mxu0 %v2876
      %2902 = vmatpush.bf16.msra.mxu0 %v2875
      %2903 = vmatpush.bf16.msra.mxu0 %v2874
      %2904 = vmatpush.bf16.msra.mxu0 %v2873
      %2905 = vmatpush.bf16.msra.mxu0 %v2872
      %2906 = vmatpush.bf16.msra.mxu0 %v2871
      %2907 = vmatpush.bf16.msra.mxu0 %v2870
      %2908 = vmatpush.bf16.msra.mxu0 %v2869
      %2909 = vmatmul.bf16.gmra.mxu0 %v2484
      %v2910 = vpop.f32.mrf.mxu0
      %v2911 = vadd.f32 %v2803, %v2910
      %v2912 = vpop.f32.mrf.mxu0
      %v2913 = vadd.f32 %v2803, %v2912
      %2914 = vmatmul.bf16.gmra.mxu0 %v2485
      %v2915 = vpop.f32.mrf.mxu0
      %v2916 = vadd.f32 %v2803, %v2915
      %v2917 = vpop.f32.mrf.mxu0
      %v2918 = vadd.f32 %v2803, %v2917
      %2919 = vmatmul.bf16.gmra.mxu0 %v2486
      %v2920 = vpop.f32.mrf.mxu0
      %v2921 = vadd.f32 %v2803, %v2920
      %v2922 = vpop.f32.mrf.mxu0
      %v2923 = vadd.f32 %v2803, %v2922
      %2924 = vmatmul.bf16.gmra.mxu0 %v2487
      %v2925 = vpop.f32.mrf.mxu0
      %v2926 = vadd.f32 %v2803, %v2925
      %v2927 = vpop.f32.mrf.mxu0
      %v2928 = vadd.f32 %v2803, %v2927
      %2929 = vmatmul.bf16.gmra.mxu0 %v2488
      %v2930 = vpop.f32.mrf.mxu0
      %v2931 = vadd.f32 %v2803, %v2930
      %v2932 = vpop.f32.mrf.mxu0
      %v2933 = vadd.f32 %v2803, %v2932
      %2934 = vmatmul.bf16.gmra.mxu0 %v2489
      %v2935 = vpop.f32.mrf.mxu0
      %v2936 = vadd.f32 %v2803, %v2935
      %v2937 = vpop.f32.mrf.mxu0
      %v2938 = vadd.f32 %v2803, %v2937
      %2939 = vmatmul.bf16.gmra.mxu0 %v2490
      %v2940 = vpop.f32.mrf.mxu0
      %v2941 = vadd.f32 %v2803, %v2940
      %v2942 = vpop.f32.mrf.mxu0
      %v2943 = vadd.f32 %v2803, %v2942
      %2944 = vmatmul.bf16.gmra.mxu0 %v2491
      %v2945 = vpop.f32.mrf.mxu0
      %v2946 = vadd.f32 %v2803, %v2945
      %v2947 = vpop.f32.mrf.mxu0
      %v2948 = vadd.f32 %v2803, %v2947
      %2949 = vdwg.mxu0
      %2950 = vmatpush.bf16.msra.mxu0 %v2884
      %2951 = vmatpush.bf16.msra.mxu0 %v2883
      %2952 = vmatpush.bf16.msra.mxu0 %v2882
      %2953 = vmatpush.bf16.msra.mxu0 %v2881
      %2954 = vmatpush.bf16.msra.mxu0 %v2880
      %2955 = vmatpush.bf16.msra.mxu0 %v2879
      %2956 = vmatpush.bf16.msra.mxu0 %v2878
      %2957 = vmatpush.bf16.msra.mxu0 %v2877
      %2958 = vmatmul.bf16.gmra.mxu0 %v2751
      %v2959 = vpop.f32.mrf.mxu0
      %v2960 = vadd.f32 %v2911, %v2959
      %v2961 = vpop.f32.mrf.mxu0
      %v2962 = vadd.f32 %v2913, %v2961
      %2963 = vmatmul.bf16.gmra.mxu0 %v2752
      %v2964 = vpop.f32.mrf.mxu0
      %v2965 = vadd.f32 %v2916, %v2964
      %v2966 = vpop.f32.mrf.mxu0
      %v2967 = vadd.f32 %v2918, %v2966
      %2968 = vmatmul.bf16.gmra.mxu0 %v2753
      %v2969 = vpop.f32.mrf.mxu0
      %v2970 = vadd.f32 %v2921, %v2969
      %v2971 = vpop.f32.mrf.mxu0
      %v2972 = vadd.f32 %v2923, %v2971
      %2973 = vmatmul.bf16.gmra.mxu0 %v2754
      %v2974 = vpop.f32.mrf.mxu0
      %v2975 = vadd.f32 %v2926, %v2974
      %v2976 = vpop.f32.mrf.mxu0
      %v2977 = vadd.f32 %v2928, %v2976
      %2978 = vmatmul.bf16.gmra.mxu0 %v2755
      %v2979 = vpop.f32.mrf.mxu0
      %v2980 = vadd.f32 %v2931, %v2979
      %v2981 = vpop.f32.mrf.mxu0
      %v2982 = vadd.f32 %v2933, %v2981
      %2983 = vmatmul.bf16.gmra.mxu0 %v2756
      %v2984 = vpop.f32.mrf.mxu0
      %v2985 = vadd.f32 %v2936, %v2984
      %v2986 = vpop.f32.mrf.mxu0
      %v2987 = vadd.f32 %v2938, %v2986
      %2988 = vmatmul.bf16.gmra.mxu0 %v2757
      %v2989 = vpop.f32.mrf.mxu0
      %v2990 = vadd.f32 %v2941, %v2989
      %v2991 = vpop.f32.mrf.mxu0
      %v2992 = vadd.f32 %v2943, %v2991
      %2993 = vmatmul.bf16.gmra.mxu0 %v2758
      %v2994 = vpop.f32.mrf.mxu0
      %v2995 = vadd.f32 %v2946, %v2994
      %v2996 = vpop.f32.mrf.mxu0
      %v2997 = vadd.f32 %v2948, %v2996
      %2998 = vdwg.mxu0
      %v2999 = vmax.f32 %v2960, 0.0
      %v3000 = vmax.f32 %v2962, 0.0
      %v3001 = vmax.f32 %v2965, 0.0
      %v3002 = vmax.f32 %v2967, 0.0
      %v3003 = vmax.f32 %v2970, 0.0
      %v3004 = vmax.f32 %v2972, 0.0
      %v3005 = vmax.f32 %v2975, 0.0
      %v3006 = vmax.f32 %v2977, 0.0
      %v3007 = vmax.f32 %v2980, 0.0
      %v3008 = vmax.f32 %v2982, 0.0
      %v3009 = vmax.f32 %v2985, 0.0
      %v3010 = vmax.f32 %v2987, 0.0
      %v3011 = vmax.f32 %v2990, 0.0
      %v3012 = vmax.f32 %v2992, 0.0
      %v3013 = vmax.f32 %v2995, 0.0
      %v3014 = vmax.f32 %v2997, 0.0
      %v3015 = vmul.u32 %v1760, 16
      %vm3016 = vcmp.ge.s32.totalorder %v492, %v3015
      %v3017 = vadd.s32 %v1760, 1
      %v3018 = vmul.u32 %v3017, 16
      %vm3019 = vcmp.lt.s32.totalorder %v492, %v3018
      %vm3020 = vmand %vm3016, %vm3019
      %v3021 = vsel %vm3020, 1.0, 0.0
      %v3022 = vpack.c.bf16 %v3021, %v3021
      %v3023 = vpack.c.bf16 %v3000, %v2999
      %v3024 = vpack.c.bf16 %v3002, %v3001
      %v3025 = vpack.c.bf16 %v3004, %v3003
      %v3026 = vpack.c.bf16 %v3006, %v3005
      %v3027 = vpack.c.bf16 %v3008, %v3007
      %v3028 = vpack.c.bf16 %v3010, %v3009
      %v3029 = vpack.c.bf16 %v3012, %v3011
      %v3030 = vpack.c.bf16 %v3014, %v3013
      %3031 = vmatpush.bf16.msra.mxu0 %v3030
      %3032 = vmatpush.bf16.msra.mxu0 %v3029
      %3033 = vmatpush.bf16.msra.mxu0 %v3028
      %3034 = vmatpush.bf16.msra.mxu0 %v3027
      %3035 = vmatpush.bf16.msra.mxu0 %v3026
      %3036 = vmatpush.bf16.msra.mxu0 %v3025
      %3037 = vmatpush.bf16.msra.mxu0 %v3024
      %3038 = vmatpush.bf16.msra.mxu0 %v3023
      %3039 = vmatmul.bf16.gmra.mxu0 %v3022
      %v3040 = vpop.f32.mrf.mxu0
      %v3041 = vadd.f32 0.0, %v3040
      %v3042 = vpop.f32.mrf.mxu0
      %3043 = vdwg.mxu0
      %v3044 = vmul.f32 %v3041, 0.0625
      %v3045 = vpack.c.bf16 %v3044, %v3044
      %v3046 = vld [vmem:[%s8] sm:$0xf]
      %v3047 = vld [vmem:[%s8 + $0x4] sm:$0xf]
      %v3048 = vld [vmem:[%s8 + $0x8] sm:$0xf]
      %v3049 = vld [vmem:[%s8 + $0xc] sm:$0xf]
      %v3050 = vld [vmem:[%s8 + $0x10] sm:$0xf]
      %v3051 = vld [vmem:[%s8 + $0x14] sm:$0xf]
      %v3052 = vld [vmem:[%s8 + $0x18] sm:$0xf]
      %v3053 = vld [vmem:[%s8 + $0x1c] sm:$0xf]
      %v3054 = vld [vmem:[%s8 + $0x20] sm:$0xf]
      %v3055 = vld [vmem:[%s8 + $0x24] sm:$0xf]
      %v3056 = vld [vmem:[%s8 + $0x28] sm:$0xf]
      %v3057 = vld [vmem:[%s8 + $0x2c] sm:$0xf]
      %v3058 = vld [vmem:[%s8 + $0x30] sm:$0xf]
      %v3059 = vld [vmem:[%s8 + $0x34] sm:$0xf]
      %v3060 = vld [vmem:[%s8 + $0x38] sm:$0xf]
      %v3061 = vld [vmem:[%s8 + $0x3c] sm:$0xf]
      %v3062 = vld [vmem:[%s9] sm:$0x1]
      %v3064 = vperm.slane %v3062, 0
      %v3082 = vunpack.c.l.b16 %v3046
      %v3083 = vunpack.c.l.b16 %v3047
      %v3084 = vunpack.c.l.b16 %v3048
      %v3085 = vunpack.c.l.b16 %v3049
      %v3086 = vunpack.c.l.b16 %v3050
      %v3087 = vunpack.c.l.b16 %v3051
      %v3088 = vunpack.c.l.b16 %v3052
      %v3089 = vunpack.c.l.b16 %v3053
      %v3090 = vunpack.c.l.b16 %v3054
      %v3091 = vunpack.c.l.b16 %v3055
      %v3092 = vunpack.c.l.b16 %v3056
      %v3093 = vunpack.c.l.b16 %v3057
      %v3094 = vunpack.c.l.b16 %v3058
      %v3095 = vunpack.c.l.b16 %v3059
      %v3096 = vunpack.c.l.b16 %v3060
      %v3097 = vunpack.c.l.b16 %v3061
      %v3098 = vpack.c.b16 %v3083, %v3082
      %v3099 = vpack.c.b16 %v3085, %v3084
      %v3100 = vpack.c.b16 %v3087, %v3086
      %v3101 = vpack.c.b16 %v3089, %v3088
      %v3102 = vpack.c.b16 %v3091, %v3090
      %v3103 = vpack.c.b16 %v3093, %v3092
      %v3104 = vpack.c.b16 %v3095, %v3094
      %v3105 = vpack.c.b16 %v3097, %v3096
      %3114 = vmatpush.bf16.msra.mxu0 %v3105
      %3115 = vmatpush.bf16.msra.mxu0 %v3104
      %3116 = vmatpush.bf16.msra.mxu0 %v3103
      %3117 = vmatpush.bf16.msra.mxu0 %v3102
      %3118 = vmatpush.bf16.msra.mxu0 %v3101
      %3119 = vmatpush.bf16.msra.mxu0 %v3100
      %3120 = vmatpush.bf16.msra.mxu0 %v3099
      %3121 = vmatpush.bf16.msra.mxu0 %v3098
      %3122 = vmatmul.bf16.gmra.mxu0 %v3045
      %v3123 = vpop.f32.mrf.mxu0
      %v3124 = vadd.f32 %v3064, %v3123
      %v3125 = vpop.f32.mrf.mxu0
      %3126 = vdwg.mxu0
      %v3127 = vmax.f32 %v3124, 0.0
      %v3128 = vpack.c.bf16 %v3127, %v3127
      %v3129 = vld [vmem:[%s10] sm:$0xf]
      %v3130 = vld [vmem:[%s10 + $0x4] sm:$0xf]
      %v3131 = vld [vmem:[%s10 + $0x8] sm:$0xf]
      %v3132 = vld [vmem:[%s10 + $0xc] sm:$0xf]
      %v3133 = vld [vmem:[%s10 + $0x10] sm:$0xf]
      %v3134 = vld [vmem:[%s10 + $0x14] sm:$0xf]
      %v3135 = vld [vmem:[%s10 + $0x18] sm:$0xf]
      %v3136 = vld [vmem:[%s10 + $0x1c] sm:$0xf]
      %v3137 = vld [vmem:[%s10 + $0x20] sm:$0xf]
      %v3138 = vld [vmem:[%s10 + $0x24] sm:$0xf]
      %v3139 = vld [vmem:[%s10 + $0x28] sm:$0xf]
      %v3140 = vld [vmem:[%s10 + $0x2c] sm:$0xf]
      %v3141 = vld [vmem:[%s10 + $0x30] sm:$0xf]
      %v3142 = vld [vmem:[%s10 + $0x34] sm:$0xf]
      %v3143 = vld [vmem:[%s10 + $0x38] sm:$0xf]
      %v3144 = vld [vmem:[%s10 + $0x3c] sm:$0xf]
      %v3145 = vld [vmem:[%s11] sm:$0x1]
      %v3147 = vperm.slane %v3145, 0
      %v3165 = vunpack.c.l.b16 %v3129
      %v3166 = vunpack.c.l.b16 %v3130
      %v3167 = vunpack.c.l.b16 %v3131
      %v3168 = vunpack.c.l.b16 %v3132
      %v3169 = vunpack.c.l.b16 %v3133
      %v3170 = vunpack.c.l.b16 %v3134
      %v3171 = vunpack.c.l.b16 %v3135
      %v3172 = vunpack.c.l.b16 %v3136
      %v3173 = vunpack.c.l.b16 %v3137
      %v3174 = vunpack.c.l.b16 %v3138
      %v3175 = vunpack.c.l.b16 %v3139
      %v3176 = vunpack.c.l.b16 %v3140
      %v3177 = vunpack.c.l.b16 %v3141
      %v3178 = vunpack.c.l.b16 %v3142
      %v3179 = vunpack.c.l.b16 %v3143
      %v3180 = vunpack.c.l.b16 %v3144
      %v3181 = vpack.c.b16 %v3166, %v3165
      %v3182 = vpack.c.b16 %v3168, %v3167
      %v3183 = vpack.c.b16 %v3170, %v3169
      %v3184 = vpack.c.b16 %v3172, %v3171
      %v3185 = vpack.c.b16 %v3174, %v3173
      %v3186 = vpack.c.b16 %v3176, %v3175
      %v3187 = vpack.c.b16 %v3178, %v3177
      %v3188 = vpack.c.b16 %v3180, %v3179
      %3197 = vmatpush.bf16.msra.mxu0 %v3188
      %3198 = vmatpush.bf16.msra.mxu0 %v3187
      %3199 = vmatpush.bf16.msra.mxu0 %v3186
      %3200 = vmatpush.bf16.msra.mxu0 %v3185
      %3201 = vmatpush.bf16.msra.mxu0 %v3184
      %3202 = vmatpush.bf16.msra.mxu0 %v3183
      %3203 = vmatpush.bf16.msra.mxu0 %v3182
      %3204 = vmatpush.bf16.msra.mxu0 %v3181
      %3205 = vmatmul.bf16.gmra.mxu0 %v3128
      %v3206 = vpop.f32.mrf.mxu0
      %v3207 = vadd.f32 %v3147, %v3206
      %v3208 = vpop.f32.mrf.mxu0
      %3209 = vdwg.mxu0
      %3210 = vst [vmem:[%s474] sm:$0xff] %v3207
      %p3211 = scmp.lt.s32.totalorder %s23, 1
      %s3212 = scalar_select %p3211, %s23, 1
      %s3213 = smul.addr %s3212, 8
      %s3214 = scalar_lea.vmem %s12, %s3213
      // Predicated region
      $region69: #{graph_dnn_forward.1} parent=67 // pred_check
        %p3215 = pneg %p313
      $region70: #{graph_dnn_forward.1} parent=67 // pred_check_branch
        %3217 = sbr.rel (%p3215) target = $region72
      $region71: #{graph_dnn_forward.1} parent=67 // pred_region
        _
      $region72: #{graph_dnn_forward.1} parent=67 // pred_fallthru
        _
    $region68: #{graph_dnn_forward.1} parent=5 // pred_fallthru
      _
    %p3218 = scmp.le.s32.totalorder 2, %s18
    // Predicated region
    $region73: #{graph_dnn_forward.1} parent=5 // pred_check
      %p3219 = pneg %p3218
    $region74: #{graph_dnn_forward.1} parent=5 // pred_check_branch
      %3221 = sbr.rel (%p3219) target = $region76
    $region75: #{graph_dnn_forward.1} parent=5 // pred_region
      %s3222 = ssub.s32 %s18, 2
      // Predicated region
      $region77: #{graph_dnn_forward.1} parent=75 // pred_check
        %p3223 = pneg %p319
      $region78: #{graph_dnn_forward.1} parent=75 // pred_check_branch
        %3225 = sbr.rel (%p3223) target = $region80
      $region79: #{graph_dnn_forward.1} parent=75 // pred_region
        %p3226 = scmp.lt.s32.totalorder %s24, 1
        %s3227 = scalar_select %p3226, %s24, 1
        %s3228 = smul.addr %s3227, 8
        %s3229 = scalar_lea.vmem %s12, %s3228
      $region80: #{graph_dnn_forward.1} parent=75 // pred_fallthru
        _
    $region76: #{graph_dnn_forward.1} parent=5 // pred_fallthru
      _
  $region6: #{graph_dnn_forward.1} parent=0 // loop_footer
    %s22 = sadd.s32 1, %s18
  $region7: #{graph_dnn_forward.1} parent=0 // loop_footer_branch
    %17 = sbr.rel target = $region3
  $region8: #{graph_dnn_forward.1} parent=0 // loop_exit
    _

</llo_original>
